<compile_context>
chip_gen: v6e
topology: v6e:2x2x1
jax: 0.10.0
libtpu: 0.0.40
codegen_flags: <defaults>
</compile_context>

<pallas_src>
import numpy as np
import jax
import jax.numpy as jnp
from jax.experimental import pallas as pl
from jax.experimental.pallas import tpu as pltpu


def positional_encoding(position, d_model):
    """Faithful port of the reference numpy positional_encoding()."""
    angle_rads = np.arange(position)[:, np.newaxis] / np.power(
        10000,
        2 * (np.arange(d_model)[np.newaxis, :] // 2) / np.float32(d_model),
    )
    angle_rads[:, 0::2] = np.sin(angle_rads[:, 0::2])
    angle_rads[:, 1::2] = np.cos(angle_rads[:, 1::2])
    pos_encoding = angle_rads[np.newaxis, ...]          # (1, position, d_model)
    return pos_encoding


def _round_up(a, b):
    return (a + b - 1) // b * b


def _embed_kernel(x_ref, w1_ref, w2_ref, posb2_ref, o_ref):
    # x_ref:     (tm, V) f32   -> cast to bf16 in VMEM, right before the MXU.
    # w1_ref:    (V, H) bf16   (VMEM resident, constant block index)
    # w2_ref:    (H, D) bf16   (VMEM resident, constant block index)
    # posb2_ref: (tm, D) f32   (pos + b1 @ W2 + b2)
    # o_ref:     (tm, D) f32
    h = jnp.dot(x_ref[...].astype(jnp.bfloat16), w1_ref[...],
                preferred_element_type=jnp.float32)                 # f32 acc
    z = jnp.dot(h.astype(jnp.bfloat16), w2_ref[...],
                preferred_element_type=jnp.float32)                 # f32 acc
    o_ref[...] = (z + posb2_ref[...]).astype(o_ref.dtype)


def embedding_forward(x, w1, b1, w2, b2, pos, *, tm_cap=512):
    """x: (B, S, V) f32, weights pre-transposed to (in, out), pos: (1, S, D).

    Returns (B, S, D) f32 = linear2(linear1(x)) + pos.
    """
    B, S, V = x.shape
    H = w1.shape[1]          # 1024
    D = w2.shape[1]          # 512
    M = B * S

    # bf16 MXU weight operands; everything else stays f32.
    w1_bf = w1.astype(jnp.bfloat16)
    w2_bf = w2.astype(jnp.bfloat16)

    # Fold b1 through W2 and b2 into the positional encoding (all in f32):
    #   z = (x @ W1) @ W2 + (b1 @ W2 + b2) + pos
    c = jnp.dot(b1.astype(jnp.float32), w2.astype(jnp.float32)) + b2    # (D,)
    posb2 = (pos.reshape(S, D) + c[None, :]).astype(jnp.float32)        # (S, D)

    vmem_limit = 48 * 1024 * 1024   # headroom-safe on v7x (64 MiB physical)

    # Flattened-row path: tile over (B*S) rows with tm a multiple of S so the
    # (pos + bias) tile repeats exactly within every row tile.
    k = max(1, tm_cap // S)
    tm_flat = min(k * S, M)
    use_flat = (S <= tm_cap) and (tm_flat == M or tm_flat % 8 == 0)

    if use_flat:
        x2 = x.reshape(M, V)                                  # free reshape
        pos_tile = jnp.tile(posb2, (tm_flat // S, 1))         # (tm, D), resident
        grid = (pl.cdiv(M, tm_flat),)                         # partial tail masked
        out = pl.pallas_call(
            _embed_kernel,
            out_shape=jax.ShapeDtypeStruct((M, D), jnp.float32),
            grid_spec=pltpu.PrefetchScalarGridSpec(
                num_scalar_prefetch=0,
                grid=grid,
                in_specs=[
                    pl.BlockSpec((tm_flat, V), lambda t: (t, 0)),   # x rows (f32)
                    pl.BlockSpec((V, H), lambda t: (0, 0)),         # W1 resident
                    pl.BlockSpec((H, D), lambda t: (0, 0)),         # W2 resident
                    pl.BlockSpec((tm_flat, D), lambda t: (0, 0)),   # pos+bias resident
                ],
                out_specs=pl.BlockSpec((tm_flat, D), lambda t: (t, 0)),
            ),
            compiler_params=pltpu.CompilerParams(
                dimension_semantics=("parallel",),
                vmem_limit_bytes=vmem_limit,
            ),
        )(x2, w1_bf, w2_bf, pos_tile)
        return out.reshape(B, S, D)

    # Long-sequence fallback: 2-D grid (s-tiles, batch) with batch INNERMOST so
    # the s-indexed pos block keeps the same index across b (no per-batch DMA).
    tm = min(tm_cap, _round_up(S, 8))
    grid = (pl.cdiv(S, tm), B)
    out = pl.pallas_call(
        _embed_kernel,
        out_shape=jax.ShapeDtypeStruct((B, S, D), jnp.float32),
        grid_spec=pltpu.PrefetchScalarGridSpec(
            num_scalar_prefetch=0,
            grid=grid,
            in_specs=[
                pl.BlockSpec((None, tm, V), lambda s, b: (b, s, 0)),   # x rows (f32)
                pl.BlockSpec((V, H), lambda s, b: (0, 0)),             # W1 resident
                pl.BlockSpec((H, D), lambda s, b: (0, 0)),             # W2 resident
                pl.BlockSpec((tm, D), lambda s, b: (s, 0)),            # pos+bias per s-tile
            ],
            out_specs=pl.BlockSpec((None, tm, D), lambda s, b: (b, s, 0)),
        ),
        compiler_params=pltpu.CompilerParams(
            dimension_semantics=("parallel", "arbitrary"),
            vmem_limit_bytes=vmem_limit,
        ),
    )(x, w1_bf, w2_bf, posb2)
    return out


if __name__ == "__main__":
    VOCAB = 1024   # in_features of linear1 (module default)
    HID = 1024     # out_features of linear1
    OUT = 512      # out_features of linear2
    B, S = 2, 8

    key = jax.random.PRNGKey(0)
    kx, k1, k2, k3, k4 = jax.random.split(key, 5)

    # Deterministic parameter init (PyTorch-style uniform(-1/sqrt(fan_in), +)).
    lim1 = 1.0 / np.sqrt(VOCAB)
    lim2 = 1.0 / np.sqrt(HID)
    w1 = jax.random.uniform(k1, (VOCAB, HID), jnp.float32, -lim1, lim1)   # (in, out)
    b1 = jax.random.uniform(k2, (HID,), jnp.float32, -lim1, lim1)
    w2 = jax.random.uniform(k3, (HID, OUT), jnp.float32, -lim2, lim2)     # (in, out)
    b2 = jax.random.uniform(k4, (OUT,), jnp.float32, -lim2, lim2)

    x = jax.random.normal(kx, (B, S, VOCAB), jnp.float32)
    pos = jnp.asarray(positional_encoding(S, OUT), dtype=jnp.float32)     # (1, S, 512)

    out = embedding_forward(x, w1, b1, w2, b2, pos)
    out = jax.block_until_ready(out)
    assert out.shape == (B, S, OUT), out.shape

    # 1) Tight check vs. a JAX reference that mirrors the kernel's bf16 MXU path
    #    (including the b1-through-W2 fold).
    xb = x.reshape(-1, VOCAB).astype(jnp.bfloat16)
    h_ref = jnp.dot(xb, w1.astype(jnp.bfloat16),
                    preferred_element_type=jnp.float32)
    z_ref = jnp.dot(h_ref.astype(jnp.bfloat16), w2.astype(jnp.bfloat16),
                    preferred_element_type=jnp.float32)
    c_ref = b1 @ w2 + b2
    ref_bf16 = z_ref.reshape(B, S, OUT) + c_ref[None, None, :] + pos
    np.testing.assert_allclose(np.asarray(out), np.asarray(ref_bf16),
                               rtol=2e-3, atol=2e-3)

    # 2) Loose check vs. full-f32 module semantics (bf16 operand rounding only).
    ref_f32 = (x.reshape(-1, VOCAB) @ w1 + b1) @ w2 + b2
    ref_f32 = ref_f32.reshape(B, S, OUT) + pos
    np.testing.assert_allclose(np.asarray(out), np.asarray(ref_f32),
                               rtol=5e-2, atol=5e-2)

    print("KERNEL_OK")
</pallas_src>

<mosaic_0001>
module attributes {stable_mosaic.version = 11 : i64} {
  func.func @_embed_kernel(%arg0: i32, %arg1: memref<16x1024xf32, #tpu.memory_space<vmem>>, %arg2: memref<1024x1024xbf16, #tpu.memory_space<vmem>>, %arg3: memref<1024x512xbf16, #tpu.memory_space<vmem>>, %arg4: memref<16x512xf32, #tpu.memory_space<vmem>>, %arg5: memref<16x512xf32, #tpu.memory_space<vmem>>) attributes {dimension_semantics = [#tpu.dimension_semantics<parallel>], iteration_bounds = array<i64: 1>, scalar_prefetch = 0 : i64, scratch_operands = 0 : i64, tpu.core_type = #tpu.core_type<tc>, window_params = [{transform_indices = @transform_0, window_bounds = array<i64: 16, 1024>}, {pipeline_mode = #tpu.pipeline_mode<synchronous>, transform_indices = @transform_1, window_bounds = array<i64: 1024, 1024>}, {pipeline_mode = #tpu.pipeline_mode<synchronous>, transform_indices = @transform_2, window_bounds = array<i64: 1024, 512>}, {pipeline_mode = #tpu.pipeline_mode<synchronous>, transform_indices = @transform_3, window_bounds = array<i64: 16, 512>}, {transform_indices = @transform_4, window_bounds = array<i64: 16, 512>}]} {
    %c0 = arith.constant 0 : index
    %c0_0 = arith.constant 0 : index
    %0 = vector.load %arg1[%c0, %c0_0] : memref<16x1024xf32, #tpu.memory_space<vmem>>, vector<16x1024xf32>
    %1 = arith.truncf %0 : vector<16x1024xf32> to vector<16x1024xbf16>
    %c0_1 = arith.constant 0 : index
    %c0_2 = arith.constant 0 : index
    %2 = vector.load %arg2[%c0_1, %c0_2] : memref<1024x1024xbf16, #tpu.memory_space<vmem>>, vector<1024x1024xbf16>
    %cst = arith.constant dense<0.000000e+00> : vector<16x1024xf32>
    %3 = tpu.matmul %1, %2, %cst {dimension_numbers = #tpu.dot_dimension_numbers<[1], [0], [0], [1], [0, 0, 1, 1], [], []>} : vector<16x1024xbf16>, vector<1024x1024xbf16>, vector<16x1024xf32> -> vector<16x1024xf32>
    %4 = arith.truncf %3 : vector<16x1024xf32> to vector<16x1024xbf16>
    %c0_3 = arith.constant 0 : index
    %c0_4 = arith.constant 0 : index
    %5 = vector.load %arg3[%c0_3, %c0_4] : memref<1024x512xbf16, #tpu.memory_space<vmem>>, vector<1024x512xbf16>
    %cst_5 = arith.constant dense<0.000000e+00> : vector<16x512xf32>
    %6 = tpu.matmul %4, %5, %cst_5 {dimension_numbers = #tpu.dot_dimension_numbers<[1], [0], [0], [1], [0, 0, 1, 1], [], []>} : vector<16x1024xbf16>, vector<1024x512xbf16>, vector<16x512xf32> -> vector<16x512xf32>
    %c0_6 = arith.constant 0 : index
    %c0_7 = arith.constant 0 : index
    %7 = vector.load %arg4[%c0_6, %c0_7] : memref<16x512xf32, #tpu.memory_space<vmem>>, vector<16x512xf32>
    %8 = arith.addf %6, %7 : vector<16x512xf32>
    %c0_8 = arith.constant 0 : index
    %c0_9 = arith.constant 0 : index
    %9 = vector.load %arg5[%c0_8, %c0_9] : memref<16x512xf32, #tpu.memory_space<vmem>>, vector<16x512xf32>
    tpu.vector_store %arg5[%c0_8, %c0_9], %8 {strides = array<i32>} : memref<16x512xf32, #tpu.memory_space<vmem>>, vector<16x512xf32>,
    return
  }
  func.func @transform_0(%arg0: i32) -> (i32, i32) {
    %c0_i32 = arith.constant 0 : i32
    %c0_i32_0 = arith.constant 0 : i32
    return %arg0, %c0_i32 : i32, i32
  }
  func.func @transform_1(%arg0: i32) -> (i32, i32) {
    %c0_i32 = arith.constant 0 : i32
    %c0_i32_0 = arith.constant 0 : i32
    %c0_i32_1 = arith.constant 0 : i32
    return %c0_i32, %c0_i32_0 : i32, i32
  }
  func.func @transform_2(%arg0: i32) -> (i32, i32) {
    %c0_i32 = arith.constant 0 : i32
    %c0_i32_0 = arith.constant 0 : i32
    %c0_i32_1 = arith.constant 0 : i32
    return %c0_i32, %c0_i32_0 : i32, i32
  }
  func.func @transform_3(%arg0: i32) -> (i32, i32) {
    %c0_i32 = arith.constant 0 : i32
    %c0_i32_0 = arith.constant 0 : i32
    %c0_i32_1 = arith.constant 0 : i32
    return %c0_i32, %c0_i32_0 : i32, i32
  }
  func.func @transform_4(%arg0: i32) -> (i32, i32) {
    %c0_i32 = arith.constant 0 : i32
    %c0_i32_0 = arith.constant 0 : i32
    return %arg0, %c0_i32 : i32, i32
  }
}

</mosaic_0001>

<llo_original>
// kernel: tpu_custom_call.1
$region0: #{tpu_custom_call.1}
  #allocation0 [shape = 'u32[]', space=smem, size = 0x4, offset = 0x4, fixed_abs, tag = 'smem constant byte address 0x4 - core index']
  #allocation1 [shape = 'u32[144,128]{1,0:T(1,128)}', space=vmem, size = 0x12000, scoped, tag = 'internal scratch']
  %s0 = inlined_call_operand.hbm [shape: f32[16,1024], index: 0, kind: input, shape index: {}]
  %s1 = inlined_call_operand.hbm [shape: bf16[1024,1024], index: 1, kind: input, shape index: {}]
  %s2 = inlined_call_operand.hbm [shape: bf16[1024,512], index: 2, kind: input, shape index: {}]
  %s3 = inlined_call_operand.hbm [shape: f32[16,512], index: 3, kind: input, shape index: {}]
  %s4 = inlined_call_operand.hbm [shape: f32[16,512], index: 4, kind: output, shape index: {}]
  %s5 = sld [smem:[#allocation0]]
  $region42: #{tpu_custom_call.1} parent=0
    _
  %s7 = ssub.s32 1, %s5
  %s8 = scalar_select 0, %s7, %s5
  $region1: #{tpu_custom_call.1} parent=0
    #allocation2 [shape = 'u8[65536]{0}', space=vmem, size = 0x10000, scoped, tag = 'input window, operand 0, single buffered']
    #allocation3 [shape = 's32[1]{0}', space=sflag, size = 0x4, scoped, tag = 'scoped memory for tpu_custom_call.1']
    #allocation4 [shape = 's32[1]{0}', space=sflag, size = 0x4, scoped, tag = 'scoped memory for tpu_custom_call.1']
    #allocation5 [shape = 'u8[2097152]{0}', space=vmem, size = 0x200000, scoped, tag = 'input window, operand 1, single buffered']
    #allocation6 [shape = 's32[1]{0}', space=sflag, size = 0x4, scoped, tag = 'scoped memory for tpu_custom_call.1']
    #allocation7 [shape = 'u8[1048576]{0}', space=vmem, size = 0x100000, scoped, tag = 'input window, operand 2, single buffered']
    #allocation8 [shape = 'u8[32768]{0}', space=vmem, size = 0x8000, scoped, tag = 'input window, operand 3, single buffered']
    #allocation9 [shape = 's32[1]{0}', space=sflag, size = 0x4, scoped, tag = 'scoped memory for tpu_custom_call.1']
    #allocation10 [shape = 'u8[32768]{0}', space=vmem, size = 0x8000, scoped, tag = 'output window, operand 0, single buffered']
    %9 = vsyncpa [#allocation3], 0
    %10 = vsyncpa [#allocation6], 0
    %11 = vsyncpa [#allocation9], 0
    %12 = vsyncpa [#allocation4], 0
    // Predicated region
    $region2: #{tpu_custom_call.1} parent=1 // pred_check
      _
    $region3: #{tpu_custom_call.1} parent=1 // pred_check_branch
      %14 = sbr.rel (0) target = $region5
    $region4: #{tpu_custom_call.1} parent=1 // pred_region
      %s16 = ssub.s32 2048, 2048
      %17 = vsyncadd [#allocation3], %s16
      %s18 = sshll.u32 [#allocation2], 4
      %s19 = int_to_ptr.vmem [resolvable:$true] %s18
      %24 = dma.hbm_to_vmem [thread:$0]  %s0, 2048, %s19, [#allocation3], 1024, 1024, 64
    $region5: #{tpu_custom_call.1} parent=1 // pred_fallthru
      _
    // Predicated region
    $region6: #{tpu_custom_call.1} parent=1 // pred_check
      _
    $region7: #{tpu_custom_call.1} parent=1 // pred_check_branch
      %26 = sbr.rel (0) target = $region9
    $region8: #{tpu_custom_call.1} parent=1 // pred_region
      %s28 = ssub.s32 65536, 65536
      %29 = vsyncadd [#allocation6], %s28
      %s30 = sshll.u32 [#allocation5], 4
      %s31 = int_to_ptr.vmem [resolvable:$true] %s30
      %36 = dma.hbm_to_vmem [thread:$0]  %s1, 65536, %s31, [#allocation6], 512, 512, 32
    $region9: #{tpu_custom_call.1} parent=1 // pred_fallthru
      _
    // Predicated region
    $region10: #{tpu_custom_call.1} parent=1 // pred_check
      _
    $region11: #{tpu_custom_call.1} parent=1 // pred_check_branch
      %38 = sbr.rel (0) target = $region13
    $region12: #{tpu_custom_call.1} parent=1 // pred_region
      %s40 = ssub.s32 32768, 32768
      %41 = vsyncadd [#allocation6], %s40
      %s42 = sshll.u32 [#allocation7], 4
      %s43 = int_to_ptr.vmem [resolvable:$true] %s42
      %48 = dma.hbm_to_vmem [thread:$0]  %s2, 32768, %s43, [#allocation6], 256, 256, 16
    $region13: #{tpu_custom_call.1} parent=1 // pred_fallthru
      _
    // Predicated region
    $region14: #{tpu_custom_call.1} parent=1 // pred_check
      _
    $region15: #{tpu_custom_call.1} parent=1 // pred_check_branch
      %50 = sbr.rel (0) target = $region17
    $region16: #{tpu_custom_call.1} parent=1 // pred_region
      %s52 = ssub.s32 1024, 1024
      %53 = vsyncadd [#allocation9], %s52
      %s54 = sshll.u32 [#allocation8], 4
      %s55 = int_to_ptr.vmem [resolvable:$true] %s54
      %60 = dma.hbm_to_vmem [thread:$0]  %s3, 1024, %s55, [#allocation9], 512, 512, 32
    $region17: #{tpu_custom_call.1} parent=1 // pred_fallthru
      _
    // Predicated region
    $region18: #{tpu_custom_call.1} parent=1 // pred_check
      _
    $region19: #{tpu_custom_call.1} parent=1 // pred_check_branch
      %62 = sbr.rel (0) target = $region21
    $region20: #{tpu_custom_call.1} parent=1 // pred_region
      %63 = dma.done [#allocation3], 2048
    $region21: #{tpu_custom_call.1} parent=1 // pred_fallthru
      _
    // Predicated region
    $region22: #{tpu_custom_call.1} parent=1 // pred_check
      _
    $region23: #{tpu_custom_call.1} parent=1 // pred_check_branch
      %65 = sbr.rel (0) target = $region25
    $region24: #{tpu_custom_call.1} parent=1 // pred_region
      %66 = dma.done [#allocation6], 65536
    $region25: #{tpu_custom_call.1} parent=1 // pred_fallthru
      _
    // Predicated region
    $region26: #{tpu_custom_call.1} parent=1 // pred_check
      _
    $region27: #{tpu_custom_call.1} parent=1 // pred_check_branch
      %68 = sbr.rel (0) target = $region29
    $region28: #{tpu_custom_call.1} parent=1 // pred_region
      %69 = dma.done [#allocation6], 32768
    $region29: #{tpu_custom_call.1} parent=1 // pred_fallthru
      _
    // Predicated region
    $region30: #{tpu_custom_call.1} parent=1 // pred_check
      _
    $region31: #{tpu_custom_call.1} parent=1 // pred_check_branch
      %71 = sbr.rel (0) target = $region33
    $region32: #{tpu_custom_call.1} parent=1 // pred_region
      %72 = dma.done [#allocation9], 1024
    $region33: #{tpu_custom_call.1} parent=1 // pred_fallthru
      _
    %v73 = vld [vmem:[#allocation2] sm:$0xff]
    %v74 = vld [vmem:[#allocation2 + $0x8] sm:$0xff]
    %v75 = vld [vmem:[#allocation2 + $0x10] sm:$0xff]
    %v76 = vld [vmem:[#allocation2 + $0x18] sm:$0xff]
    %v77 = vld [vmem:[#allocation2 + $0x20] sm:$0xff]
    %v78 = vld [vmem:[#allocation2 + $0x28] sm:$0xff]
    %v79 = vld [vmem:[#allocation2 + $0x30] sm:$0xff]
    %v80 = vld [vmem:[#allocation2 + $0x38] sm:$0xff]
    %v81 = vld [vmem:[#allocation2 + $0x40] sm:$0xff]
    %v82 = vld [vmem:[#allocation2 + $0x48] sm:$0xff]
    %v83 = vld [vmem:[#allocation2 + $0x50] sm:$0xff]
    %v84 = vld [vmem:[#allocation2 + $0x58] sm:$0xff]
    %v85 = vld [vmem:[#allocation2 + $0x60] sm:$0xff]
    %v86 = vld [vmem:[#allocation2 + $0x68] sm:$0xff]
    %v87 = vld [vmem:[#allocation2 + $0x70] sm:$0xff]
    %v88 = vld [vmem:[#allocation2 + $0x78] sm:$0xff]
    %v89 = vpack.c.bf16 %v81, %v73
    %v90 = vpack.c.bf16 %v82, %v74
    %v91 = vpack.c.bf16 %v83, %v75
    %v92 = vpack.c.bf16 %v84, %v76
    %v93 = vpack.c.bf16 %v85, %v77
    %v94 = vpack.c.bf16 %v86, %v78
    %v95 = vpack.c.bf16 %v87, %v79
    %v96 = vpack.c.bf16 %v88, %v80
    %v97 = vld [vmem:[#allocation5] sm:$0xff]
    %v98 = vld [vmem:[#allocation5 + $0x8] sm:$0xff]
    %v99 = vld [vmem:[#allocation5 + $0x10] sm:$0xff]
    %v100 = vld [vmem:[#allocation5 + $0x18] sm:$0xff]
    %v101 = vld [vmem:[#allocation5 + $0x20] sm:$0xff]
    %v102 = vld [vmem:[#allocation5 + $0x28] sm:$0xff]
    %v103 = vld [vmem:[#allocation5 + $0x30] sm:$0xff]
    %v104 = vld [vmem:[#allocation5 + $0x38] sm:$0xff]
    %v105 = vld [vmem:[#allocation5 + $0x40] sm:$0xff]
    %v106 = vld [vmem:[#allocation5 + $0x48] sm:$0xff]
    %v107 = vld [vmem:[#allocation5 + $0x50] sm:$0xff]
    %v108 = vld [vmem:[#allocation5 + $0x58] sm:$0xff]
    %v109 = vld [vmem:[#allocation5 + $0x60] sm:$0xff]
    %v110 = vld [vmem:[#allocation5 + $0x68] sm:$0xff]
    %v111 = vld [vmem:[#allocation5 + $0x70] sm:$0xff]
    %v112 = vld [vmem:[#allocation5 + $0x78] sm:$0xff]
    %v113 = vld [vmem:[#allocation5 + $0x80] sm:$0xff]
    %v114 = vld [vmem:[#allocation5 + $0x88] sm:$0xff]
    %v115 = vld [vmem:[#allocation5 + $0x90] sm:$0xff]
    %v116 = vld [vmem:[#allocation5 + $0x98] sm:$0xff]
    %v117 = vld [vmem:[#allocation5 + $0xa0] sm:$0xff]
    %v118 = vld [vmem:[#allocation5 + $0xa8] sm:$0xff]
    %v119 = vld [vmem:[#allocation5 + $0xb0] sm:$0xff]
    %v120 = vld [vmem:[#allocation5 + $0xb8] sm:$0xff]
    %v121 = vld [vmem:[#allocation5 + $0xc0] sm:$0xff]
    %v122 = vld [vmem:[#allocation5 + $0xc8] sm:$0xff]
    %v123 = vld [vmem:[#allocation5 + $0xd0] sm:$0xff]
    %v124 = vld [vmem:[#allocation5 + $0xd8] sm:$0xff]
    %v125 = vld [vmem:[#allocation5 + $0xe0] sm:$0xff]
    %v126 = vld [vmem:[#allocation5 + $0xe8] sm:$0xff]
    %v127 = vld [vmem:[#allocation5 + $0xf0] sm:$0xff]
    %v128 = vld [vmem:[#allocation5 + $0xf8] sm:$0xff]
    %v129 = vld [vmem:[#allocation5 + $0x100] sm:$0xff]
    %v130 = vld [vmem:[#allocation5 + $0x108] sm:$0xff]
    %v131 = vld [vmem:[#allocation5 + $0x110] sm:$0xff]
    %v132 = vld [vmem:[#allocation5 + $0x118] sm:$0xff]
    %v133 = vld [vmem:[#allocation5 + $0x120] sm:$0xff]
    %v134 = vld [vmem:[#allocation5 + $0x128] sm:$0xff]
    %v135 = vld [vmem:[#allocation5 + $0x130] sm:$0xff]
    %v136 = vld [vmem:[#allocation5 + $0x138] sm:$0xff]
    %v137 = vld [vmem:[#allocation5 + $0x140] sm:$0xff]
    %v138 = vld [vmem:[#allocation5 + $0x148] sm:$0xff]
    %v139 = vld [vmem:[#allocation5 + $0x150] sm:$0xff]
    %v140 = vld [vmem:[#allocation5 + $0x158] sm:$0xff]
    %v141 = vld [vmem:[#allocation5 + $0x160] sm:$0xff]
    %v142 = vld [vmem:[#allocation5 + $0x168] sm:$0xff]
    %v143 = vld [vmem:[#allocation5 + $0x170] sm:$0xff]
    %v144 = vld [vmem:[#allocation5 + $0x178] sm:$0xff]
    %v145 = vld [vmem:[#allocation5 + $0x180] sm:$0xff]
    %v146 = vld [vmem:[#allocation5 + $0x188] sm:$0xff]
    %v147 = vld [vmem:[#allocation5 + $0x190] sm:$0xff]
    %v148 = vld [vmem:[#allocation5 + $0x198] sm:$0xff]
    %v149 = vld [vmem:[#allocation5 + $0x1a0] sm:$0xff]
    %v150 = vld [vmem:[#allocation5 + $0x1a8] sm:$0xff]
    %v151 = vld [vmem:[#allocation5 + $0x1b0] sm:$0xff]
    %v152 = vld [vmem:[#allocation5 + $0x1b8] sm:$0xff]
    %v153 = vld [vmem:[#allocation5 + $0x1c0] sm:$0xff]
    %v154 = vld [vmem:[#allocation5 + $0x1c8] sm:$0xff]
    %v155 = vld [vmem:[#allocation5 + $0x1d0] sm:$0xff]
    %v156 = vld [vmem:[#allocation5 + $0x1d8] sm:$0xff]
    %v157 = vld [vmem:[#allocation5 + $0x1e0] sm:$0xff]
    %v158 = vld [vmem:[#allocation5 + $0x1e8] sm:$0xff]
    %v159 = vld [vmem:[#allocation5 + $0x1f0] sm:$0xff]
    %v160 = vld [vmem:[#allocation5 + $0x1f8] sm:$0xff]
    %v161 = vld [vmem:[#allocation5 + $0x200] sm:$0xff]
    %v162 = vld [vmem:[#allocation5 + $0x208] sm:$0xff]
    %v163 = vld [vmem:[#allocation5 + $0x210] sm:$0xff]
    %v164 = vld [vmem:[#allocation5 + $0x218] sm:$0xff]
    %v165 = vld [vmem:[#allocation5 + $0x220] sm:$0xff]
    %v166 = vld [vmem:[#allocation5 + $0x228] sm:$0xff]
    %v167 = vld [vmem:[#allocation5 + $0x230] sm:$0xff]
    %v168 = vld [vmem:[#allocation5 + $0x238] sm:$0xff]
    %v169 = vld [vmem:[#allocation5 + $0x240] sm:$0xff]
    %v170 = vld [vmem:[#allocation5 + $0x248] sm:$0xff]
    %v171 = vld [vmem:[#allocation5 + $0x250] sm:$0xff]
    %v172 = vld [vmem:[#allocation5 + $0x258] sm:$0xff]
    %v173 = vld [vmem:[#allocation5 + $0x260] sm:$0xff]
    %v174 = vld [vmem:[#allocation5 + $0x268] sm:$0xff]
    %v175 = vld [vmem:[#allocation5 + $0x270] sm:$0xff]
    %v176 = vld [vmem:[#allocation5 + $0x278] sm:$0xff]
    %v177 = vld [vmem:[#allocation5 + $0x280] sm:$0xff]
    %v178 = vld [vmem:[#allocation5 + $0x288] sm:$0xff]
    %v179 = vld [vmem:[#allocation5 + $0x290] sm:$0xff]
    %v180 = vld [vmem:[#allocation5 + $0x298] sm:$0xff]
    %v181 = vld [vmem:[#allocation5 + $0x2a0] sm:$0xff]
    %v182 = vld [vmem:[#allocation5 + $0x2a8] sm:$0xff]
    %v183 = vld [vmem:[#allocation5 + $0x2b0] sm:$0xff]
    %v184 = vld [vmem:[#allocation5 + $0x2b8] sm:$0xff]
    %v185 = vld [vmem:[#allocation5 + $0x2c0] sm:$0xff]
    %v186 = vld [vmem:[#allocation5 + $0x2c8] sm:$0xff]
    %v187 = vld [vmem:[#allocation5 + $0x2d0] sm:$0xff]
    %v188 = vld [vmem:[#allocation5 + $0x2d8] sm:$0xff]
    %v189 = vld [vmem:[#allocation5 + $0x2e0] sm:$0xff]
    %v190 = vld [vmem:[#allocation5 + $0x2e8] sm:$0xff]
    %v191 = vld [vmem:[#allocation5 + $0x2f0] sm:$0xff]
    %v192 = vld [vmem:[#allocation5 + $0x2f8] sm:$0xff]
    %v193 = vld [vmem:[#allocation5 + $0x300] sm:$0xff]
    %v194 = vld [vmem:[#allocation5 + $0x308] sm:$0xff]
    %v195 = vld [vmem:[#allocation5 + $0x310] sm:$0xff]
    %v196 = vld [vmem:[#allocation5 + $0x318] sm:$0xff]
    %v197 = vld [vmem:[#allocation5 + $0x320] sm:$0xff]
    %v198 = vld [vmem:[#allocation5 + $0x328] sm:$0xff]
    %v199 = vld [vmem:[#allocation5 + $0x330] sm:$0xff]
    %v200 = vld [vmem:[#allocation5 + $0x338] sm:$0xff]
    %v201 = vld [vmem:[#allocation5 + $0x340] sm:$0xff]
    %v202 = vld [vmem:[#allocation5 + $0x348] sm:$0xff]
    %v203 = vld [vmem:[#allocation5 + $0x350] sm:$0xff]
    %v204 = vld [vmem:[#allocation5 + $0x358] sm:$0xff]
    %v205 = vld [vmem:[#allocation5 + $0x360] sm:$0xff]
    %v206 = vld [vmem:[#allocation5 + $0x368] sm:$0xff]
    %v207 = vld [vmem:[#allocation5 + $0x370] sm:$0xff]
    %v208 = vld [vmem:[#allocation5 + $0x378] sm:$0xff]
    %v209 = vld [vmem:[#allocation5 + $0x380] sm:$0xff]
    %v210 = vld [vmem:[#allocation5 + $0x388] sm:$0xff]
    %v211 = vld [vmem:[#allocation5 + $0x390] sm:$0xff]
    %v212 = vld [vmem:[#allocation5 + $0x398] sm:$0xff]
    %v213 = vld [vmem:[#allocation5 + $0x3a0] sm:$0xff]
    %v214 = vld [vmem:[#allocation5 + $0x3a8] sm:$0xff]
    %v215 = vld [vmem:[#allocation5 + $0x3b0] sm:$0xff]
    %v216 = vld [vmem:[#allocation5 + $0x3b8] sm:$0xff]
    %v217 = vld [vmem:[#allocation5 + $0x3c0] sm:$0xff]
    %v218 = vld [vmem:[#allocation5 + $0x3c8] sm:$0xff]
    %v219 = vld [vmem:[#allocation5 + $0x3d0] sm:$0xff]
    %v220 = vld [vmem:[#allocation5 + $0x3d8] sm:$0xff]
    %v221 = vld [vmem:[#allocation5 + $0x3e0] sm:$0xff]
    %v222 = vld [vmem:[#allocation5 + $0x3e8] sm:$0xff]
    %v223 = vld [vmem:[#allocation5 + $0x3f0] sm:$0xff]
    %v224 = vld [vmem:[#allocation5 + $0x3f8] sm:$0xff]
    %v225 = vld [vmem:[#allocation5 + $0x400] sm:$0xff]
    %v226 = vld [vmem:[#allocation5 + $0x408] sm:$0xff]
    %v227 = vld [vmem:[#allocation5 + $0x410] sm:$0xff]
    %v228 = vld [vmem:[#allocation5 + $0x418] sm:$0xff]
    %v229 = vld [vmem:[#allocation5 + $0x420] sm:$0xff]
    %v230 = vld [vmem:[#allocation5 + $0x428] sm:$0xff]
    %v231 = vld [vmem:[#allocation5 + $0x430] sm:$0xff]
    %v232 = vld [vmem:[#allocation5 + $0x438] sm:$0xff]
    %v233 = vld [vmem:[#allocation5 + $0x440] sm:$0xff]
    %v234 = vld [vmem:[#allocation5 + $0x448] sm:$0xff]
    %v235 = vld [vmem:[#allocation5 + $0x450] sm:$0xff]
    %v236 = vld [vmem:[#allocation5 + $0x458] sm:$0xff]
    %v237 = vld [vmem:[#allocation5 + $0x460] sm:$0xff]
    %v238 = vld [vmem:[#allocation5 + $0x468] sm:$0xff]
    %v239 = vld [vmem:[#allocation5 + $0x470] sm:$0xff]
    %v240 = vld [vmem:[#allocation5 + $0x478] sm:$0xff]
    %v241 = vld [vmem:[#allocation5 + $0x480] sm:$0xff]
    %v242 = vld [vmem:[#allocation5 + $0x488] sm:$0xff]
    %v243 = vld [vmem:[#allocation5 + $0x490] sm:$0xff]
    %v244 = vld [vmem:[#allocation5 + $0x498] sm:$0xff]
    %v245 = vld [vmem:[#allocation5 + $0x4a0] sm:$0xff]
    %v246 = vld [vmem:[#allocation5 + $0x4a8] sm:$0xff]
    %v247 = vld [vmem:[#allocation5 + $0x4b0] sm:$0xff]
    %v248 = vld [vmem:[#allocation5 + $0x4b8] sm:$0xff]
    %v249 = vld [vmem:[#allocation5 + $0x4c0] sm:$0xff]
    %v250 = vld [vmem:[#allocation5 + $0x4c8] sm:$0xff]
    %v251 = vld [vmem:[#allocation5 + $0x4d0] sm:$0xff]
    %v252 = vld [vmem:[#allocation5 + $0x4d8] sm:$0xff]
    %v253 = vld [vmem:[#allocation5 + $0x4e0] sm:$0xff]
    %v254 = vld [vmem:[#allocation5 + $0x4e8] sm:$0xff]
    %v255 = vld [vmem:[#allocation5 + $0x4f0] sm:$0xff]
    %v256 = vld [vmem:[#allocation5 + $0x4f8] sm:$0xff]
    %v257 = vld [vmem:[#allocation5 + $0x500] sm:$0xff]
    %v258 = vld [vmem:[#allocation5 + $0x508] sm:$0xff]
    %v259 = vld [vmem:[#allocation5 + $0x510] sm:$0xff]
    %v260 = vld [vmem:[#allocation5 + $0x518] sm:$0xff]
    %v261 = vld [vmem:[#allocation5 + $0x520] sm:$0xff]
    %v262 = vld [vmem:[#allocation5 + $0x528] sm:$0xff]
    %v263 = vld [vmem:[#allocation5 + $0x530] sm:$0xff]
    %v264 = vld [vmem:[#allocation5 + $0x538] sm:$0xff]
    %v265 = vld [vmem:[#allocation5 + $0x540] sm:$0xff]
    %v266 = vld [vmem:[#allocation5 + $0x548] sm:$0xff]
    %v267 = vld [vmem:[#allocation5 + $0x550] sm:$0xff]
    %v268 = vld [vmem:[#allocation5 + $0x558] sm:$0xff]
    %v269 = vld [vmem:[#allocation5 + $0x560] sm:$0xff]
    %v270 = vld [vmem:[#allocation5 + $0x568] sm:$0xff]
    %v271 = vld [vmem:[#allocation5 + $0x570] sm:$0xff]
    %v272 = vld [vmem:[#allocation5 + $0x578] sm:$0xff]
    %v273 = vld [vmem:[#allocation5 + $0x580] sm:$0xff]
    %v274 = vld [vmem:[#allocation5 + $0x588] sm:$0xff]
    %v275 = vld [vmem:[#allocation5 + $0x590] sm:$0xff]
    %v276 = vld [vmem:[#allocation5 + $0x598] sm:$0xff]
    %v277 = vld [vmem:[#allocation5 + $0x5a0] sm:$0xff]
    %v278 = vld [vmem:[#allocation5 + $0x5a8] sm:$0xff]
    %v279 = vld [vmem:[#allocation5 + $0x5b0] sm:$0xff]
    %v280 = vld [vmem:[#allocation5 + $0x5b8] sm:$0xff]
    %v281 = vld [vmem:[#allocation5 + $0x5c0] sm:$0xff]
    %v282 = vld [vmem:[#allocation5 + $0x5c8] sm:$0xff]
    %v283 = vld [vmem:[#allocation5 + $0x5d0] sm:$0xff]
    %v284 = vld [vmem:[#allocation5 + $0x5d8] sm:$0xff]
    %v285 = vld [vmem:[#allocation5 + $0x5e0] sm:$0xff]
    %v286 = vld [vmem:[#allocation5 + $0x5e8] sm:$0xff]
    %v287 = vld [vmem:[#allocation5 + $0x5f0] sm:$0xff]
    %v288 = vld [vmem:[#allocation5 + $0x5f8] sm:$0xff]
    %v289 = vld [vmem:[#allocation5 + $0x600] sm:$0xff]
    %v290 = vld [vmem:[#allocation5 + $0x608] sm:$0xff]
    %v291 = vld [vmem:[#allocation5 + $0x610] sm:$0xff]
    %v292 = vld [vmem:[#allocation5 + $0x618] sm:$0xff]
    %v293 = vld [vmem:[#allocation5 + $0x620] sm:$0xff]
    %v294 = vld [vmem:[#allocation5 + $0x628] sm:$0xff]
    %v295 = vld [vmem:[#allocation5 + $0x630] sm:$0xff]
    %v296 = vld [vmem:[#allocation5 + $0x638] sm:$0xff]
    %v297 = vld [vmem:[#allocation5 + $0x640] sm:$0xff]
    %v298 = vld [vmem:[#allocation5 + $0x648] sm:$0xff]
    %v299 = vld [vmem:[#allocation5 + $0x650] sm:$0xff]
    %v300 = vld [vmem:[#allocation5 + $0x658] sm:$0xff]
    %v301 = vld [vmem:[#allocation5 + $0x660] sm:$0xff]
    %v302 = vld [vmem:[#allocation5 + $0x668] sm:$0xff]
    %v303 = vld [vmem:[#allocation5 + $0x670] sm:$0xff]
    %v304 = vld [vmem:[#allocation5 + $0x678] sm:$0xff]
    %v305 = vld [vmem:[#allocation5 + $0x680] sm:$0xff]
    %v306 = vld [vmem:[#allocation5 + $0x688] sm:$0xff]
    %v307 = vld [vmem:[#allocation5 + $0x690] sm:$0xff]
    %v308 = vld [vmem:[#allocation5 + $0x698] sm:$0xff]
    %v309 = vld [vmem:[#allocation5 + $0x6a0] sm:$0xff]
    %v310 = vld [vmem:[#allocation5 + $0x6a8] sm:$0xff]
    %v311 = vld [vmem:[#allocation5 + $0x6b0] sm:$0xff]
    %v312 = vld [vmem:[#allocation5 + $0x6b8] sm:$0xff]
    %v313 = vld [vmem:[#allocation5 + $0x6c0] sm:$0xff]
    %v314 = vld [vmem:[#allocation5 + $0x6c8] sm:$0xff]
    %v315 = vld [vmem:[#allocation5 + $0x6d0] sm:$0xff]
    %v316 = vld [vmem:[#allocation5 + $0x6d8] sm:$0xff]
    %v317 = vld [vmem:[#allocation5 + $0x6e0] sm:$0xff]
    %v318 = vld [vmem:[#allocation5 + $0x6e8] sm:$0xff]
    %v319 = vld [vmem:[#allocation5 + $0x6f0] sm:$0xff]
    %v320 = vld [vmem:[#allocation5 + $0x6f8] sm:$0xff]
    %v321 = vld [vmem:[#allocation5 + $0x700] sm:$0xff]
    %v322 = vld [vmem:[#allocation5 + $0x708] sm:$0xff]
    %v323 = vld [vmem:[#allocation5 + $0x710] sm:$0xff]
    %v324 = vld [vmem:[#allocation5 + $0x718] sm:$0xff]
    %v325 = vld [vmem:[#allocation5 + $0x720] sm:$0xff]
    %v326 = vld [vmem:[#allocation5 + $0x728] sm:$0xff]
    %v327 = vld [vmem:[#allocation5 + $0x730] sm:$0xff]
    %v328 = vld [vmem:[#allocation5 + $0x738] sm:$0xff]
    %v329 = vld [vmem:[#allocation5 + $0x740] sm:$0xff]
    %v330 = vld [vmem:[#allocation5 + $0x748] sm:$0xff]
    %v331 = vld [vmem:[#allocation5 + $0x750] sm:$0xff]
    %v332 = vld [vmem:[#allocation5 + $0x758] sm:$0xff]
    %v333 = vld [vmem:[#allocation5 + $0x760] sm:$0xff]
    %v334 = vld [vmem:[#allocation5 + $0x768] sm:$0xff]
    %v335 = vld [vmem:[#allocation5 + $0x770] sm:$0xff]
    %v336 = vld [vmem:[#allocation5 + $0x778] sm:$0xff]
    %v337 = vld [vmem:[#allocation5 + $0x780] sm:$0xff]
    %v338 = vld [vmem:[#allocation5 + $0x788] sm:$0xff]
    %v339 = vld [vmem:[#allocation5 + $0x790] sm:$0xff]
    %v340 = vld [vmem:[#allocation5 + $0x798] sm:$0xff]
    %v341 = vld [vmem:[#allocation5 + $0x7a0] sm:$0xff]
    %v342 = vld [vmem:[#allocation5 + $0x7a8] sm:$0xff]
    %v343 = vld [vmem:[#allocation5 + $0x7b0] sm:$0xff]
    %v344 = vld [vmem:[#allocation5 + $0x7b8] sm:$0xff]
    %v345 = vld [vmem:[#allocation5 + $0x7c0] sm:$0xff]
    %v346 = vld [vmem:[#allocation5 + $0x7c8] sm:$0xff]
    %v347 = vld [vmem:[#allocation5 + $0x7d0] sm:$0xff]
    %v348 = vld [vmem:[#allocation5 + $0x7d8] sm:$0xff]
    %v349 = vld [vmem:[#allocation5 + $0x7e0] sm:$0xff]
    %v350 = vld [vmem:[#allocation5 + $0x7e8] sm:$0xff]
    %v351 = vld [vmem:[#allocation5 + $0x7f0] sm:$0xff]
    %v352 = vld [vmem:[#allocation5 + $0x7f8] sm:$0xff]
    %v353 = vld [vmem:[#allocation5 + $0x800] sm:$0xff]
    %v354 = vld [vmem:[#allocation5 + $0x808] sm:$0xff]
    %v355 = vld [vmem:[#allocation5 + $0x810] sm:$0xff]
    %v356 = vld [vmem:[#allocation5 + $0x818] sm:$0xff]
    %v357 = vld [vmem:[#allocation5 + $0x820] sm:$0xff]
    %v358 = vld [vmem:[#allocation5 + $0x828] sm:$0xff]
    %v359 = vld [vmem:[#allocation5 + $0x830] sm:$0xff]
    %v360 = vld [vmem:[#allocation5 + $0x838] sm:$0xff]
    %v361 = vld [vmem:[#allocation5 + $0x840] sm:$0xff]
    %v362 = vld [vmem:[#allocation5 + $0x848] sm:$0xff]
    %v363 = vld [vmem:[#allocation5 + $0x850] sm:$0xff]
    %v364 = vld [vmem:[#allocation5 + $0x858] sm:$0xff]
    %v365 = vld [vmem:[#allocation5 + $0x860] sm:$0xff]
    %v366 = vld [vmem:[#allocation5 + $0x868] sm:$0xff]
    %v367 = vld [vmem:[#allocation5 + $0x870] sm:$0xff]
    %v368 = vld [vmem:[#allocation5 + $0x878] sm:$0xff]
    %v369 = vld [vmem:[#allocation5 + $0x880] sm:$0xff]
    %v370 = vld [vmem:[#allocation5 + $0x888] sm:$0xff]
    %v371 = vld [vmem:[#allocation5 + $0x890] sm:$0xff]
    %v372 = vld [vmem:[#allocation5 + $0x898] sm:$0xff]
    %v373 = vld [vmem:[#allocation5 + $0x8a0] sm:$0xff]
    %v374 = vld [vmem:[#allocation5 + $0x8a8] sm:$0xff]
    %v375 = vld [vmem:[#allocation5 + $0x8b0] sm:$0xff]
    %v376 = vld [vmem:[#allocation5 + $0x8b8] sm:$0xff]
    %v377 = vld [vmem:[#allocation5 + $0x8c0] sm:$0xff]
    %v378 = vld [vmem:[#allocation5 + $0x8c8] sm:$0xff]
    %v379 = vld [vmem:[#allocation5 + $0x8d0] sm:$0xff]
    %v380 = vld [vmem:[#allocation5 + $0x8d8] sm:$0xff]
    %v381 = vld [vmem:[#allocation5 + $0x8e0] sm:$0xff]
    %v382 = vld [vmem:[#allocation5 + $0x8e8] sm:$0xff]
    %v383 = vld [vmem:[#allocation5 + $0x8f0] sm:$0xff]
    %v384 = vld [vmem:[#allocation5 + $0x8f8] sm:$0xff]
    %v385 = vld [vmem:[#allocation5 + $0x900] sm:$0xff]
    %v386 = vld [vmem:[#allocation5 + $0x908] sm:$0xff]
    %v387 = vld [vmem:[#allocation5 + $0x910] sm:$0xff]
    %v388 = vld [vmem:[#allocation5 + $0x918] sm:$0xff]
    %v389 = vld [vmem:[#allocation5 + $0x920] sm:$0xff]
    %v390 = vld [vmem:[#allocation5 + $0x928] sm:$0xff]
    %v391 = vld [vmem:[#allocation5 + $0x930] sm:$0xff]
    %v392 = vld [vmem:[#allocation5 + $0x938] sm:$0xff]
    %v393 = vld [vmem:[#allocation5 + $0x940] sm:$0xff]
    %v394 = vld [vmem:[#allocation5 + $0x948] sm:$0xff]
    %v395 = vld [vmem:[#allocation5 + $0x950] sm:$0xff]
    %v396 = vld [vmem:[#allocation5 + $0x958] sm:$0xff]
    %v397 = vld [vmem:[#allocation5 + $0x960] sm:$0xff]
    %v398 = vld [vmem:[#allocation5 + $0x968] sm:$0xff]
    %v399 = vld [vmem:[#allocation5 + $0x970] sm:$0xff]
    %v400 = vld [vmem:[#allocation5 + $0x978] sm:$0xff]
    %v401 = vld [vmem:[#allocation5 + $0x980] sm:$0xff]
    %v402 = vld [vmem:[#allocation5 + $0x988] sm:$0xff]
    %v403 = vld [vmem:[#allocation5 + $0x990] sm:$0xff]
    %v404 = vld [vmem:[#allocation5 + $0x998] sm:$0xff]
    %v405 = vld [vmem:[#allocation5 + $0x9a0] sm:$0xff]
    %v406 = vld [vmem:[#allocation5 + $0x9a8] sm:$0xff]
    %v407 = vld [vmem:[#allocation5 + $0x9b0] sm:$0xff]
    %v408 = vld [vmem:[#allocation5 + $0x9b8] sm:$0xff]
    %v409 = vld [vmem:[#allocation5 + $0x9c0] sm:$0xff]
    %v410 = vld [vmem:[#allocation5 + $0x9c8] sm:$0xff]
    %v411 = vld [vmem:[#allocation5 + $0x9d0] sm:$0xff]
    %v412 = vld [vmem:[#allocation5 + $0x9d8] sm:$0xff]
    %v413 = vld [vmem:[#allocation5 + $0x9e0] sm:$0xff]
    %v414 = vld [vmem:[#allocation5 + $0x9e8] sm:$0xff]
    %v415 = vld [vmem:[#allocation5 + $0x9f0] sm:$0xff]
    %v416 = vld [vmem:[#allocation5 + $0x9f8] sm:$0xff]
    %v417 = vld [vmem:[#allocation5 + $0xa00] sm:$0xff]
    %v418 = vld [vmem:[#allocation5 + $0xa08] sm:$0xff]
    %v419 = vld [vmem:[#allocation5 + $0xa10] sm:$0xff]
    %v420 = vld [vmem:[#allocation5 + $0xa18] sm:$0xff]
    %v421 = vld [vmem:[#allocation5 + $0xa20] sm:$0xff]
    %v422 = vld [vmem:[#allocation5 + $0xa28] sm:$0xff]
    %v423 = vld [vmem:[#allocation5 + $0xa30] sm:$0xff]
    %v424 = vld [vmem:[#allocation5 + $0xa38] sm:$0xff]
    %v425 = vld [vmem:[#allocation5 + $0xa40] sm:$0xff]
    %v426 = vld [vmem:[#allocation5 + $0xa48] sm:$0xff]
    %v427 = vld [vmem:[#allocation5 + $0xa50] sm:$0xff]
    %v428 = vld [vmem:[#allocation5 + $0xa58] sm:$0xff]
    %v429 = vld [vmem:[#allocation5 + $0xa60] sm:$0xff]
    %v430 = vld [vmem:[#allocation5 + $0xa68] sm:$0xff]
    %v431 = vld [vmem:[#allocation5 + $0xa70] sm:$0xff]
    %v432 = vld [vmem:[#allocation5 + $0xa78] sm:$0xff]
    %v433 = vld [vmem:[#allocation5 + $0xa80] sm:$0xff]
    %v434 = vld [vmem:[#allocation5 + $0xa88] sm:$0xff]
    %v435 = vld [vmem:[#allocation5 + $0xa90] sm:$0xff]
    %v436 = vld [vmem:[#allocation5 + $0xa98] sm:$0xff]
    %v437 = vld [vmem:[#allocation5 + $0xaa0] sm:$0xff]
    %v438 = vld [vmem:[#allocation5 + $0xaa8] sm:$0xff]
    %v439 = vld [vmem:[#allocation5 + $0xab0] sm:$0xff]
    %v440 = vld [vmem:[#allocation5 + $0xab8] sm:$0xff]
    %v441 = vld [vmem:[#allocation5 + $0xac0] sm:$0xff]
    %v442 = vld [vmem:[#allocation5 + $0xac8] sm:$0xff]
    %v443 = vld [vmem:[#allocation5 + $0xad0] sm:$0xff]
    %v444 = vld [vmem:[#allocation5 + $0xad8] sm:$0xff]
    %v445 = vld [vmem:[#allocation5 + $0xae0] sm:$0xff]
    %v446 = vld [vmem:[#allocation5 + $0xae8] sm:$0xff]
    %v447 = vld [vmem:[#allocation5 + $0xaf0] sm:$0xff]
    %v448 = vld [vmem:[#allocation5 + $0xaf8] sm:$0xff]
    %v449 = vld [vmem:[#allocation5 + $0xb00] sm:$0xff]
    %v450 = vld [vmem:[#allocation5 + $0xb08] sm:$0xff]
    %v451 = vld [vmem:[#allocation5 + $0xb10] sm:$0xff]
    %v452 = vld [vmem:[#allocation5 + $0xb18] sm:$0xff]
    %v453 = vld [vmem:[#allocation5 + $0xb20] sm:$0xff]
    %v454 = vld [vmem:[#allocation5 + $0xb28] sm:$0xff]
    %v455 = vld [vmem:[#allocation5 + $0xb30] sm:$0xff]
    %v456 = vld [vmem:[#allocation5 + $0xb38] sm:$0xff]
    %v457 = vld [vmem:[#allocation5 + $0xb40] sm:$0xff]
    %v458 = vld [vmem:[#allocation5 + $0xb48] sm:$0xff]
    %v459 = vld [vmem:[#allocation5 + $0xb50] sm:$0xff]
    %v460 = vld [vmem:[#allocation5 + $0xb58] sm:$0xff]
    %v461 = vld [vmem:[#allocation5 + $0xb60] sm:$0xff]
    %v462 = vld [vmem:[#allocation5 + $0xb68] sm:$0xff]
    %v463 = vld [vmem:[#allocation5 + $0xb70] sm:$0xff]
    %v464 = vld [vmem:[#allocation5 + $0xb78] sm:$0xff]
    %v465 = vld [vmem:[#allocation5 + $0xb80] sm:$0xff]
    %v466 = vld [vmem:[#allocation5 + $0xb88] sm:$0xff]
    %v467 = vld [vmem:[#allocation5 + $0xb90] sm:$0xff]
    %v468 = vld [vmem:[#allocation5 + $0xb98] sm:$0xff]
    %v469 = vld [vmem:[#allocation5 + $0xba0] sm:$0xff]
    %v470 = vld [vmem:[#allocation5 + $0xba8] sm:$0xff]
    %v471 = vld [vmem:[#allocation5 + $0xbb0] sm:$0xff]
    %v472 = vld [vmem:[#allocation5 + $0xbb8] sm:$0xff]
    %v473 = vld [vmem:[#allocation5 + $0xbc0] sm:$0xff]
    %v474 = vld [vmem:[#allocation5 + $0xbc8] sm:$0xff]
    %v475 = vld [vmem:[#allocation5 + $0xbd0] sm:$0xff]
    %v476 = vld [vmem:[#allocation5 + $0xbd8] sm:$0xff]
    %v477 = vld [vmem:[#allocation5 + $0xbe0] sm:$0xff]
    %v478 = vld [vmem:[#allocation5 + $0xbe8] sm:$0xff]
    %v479 = vld [vmem:[#allocation5 + $0xbf0] sm:$0xff]
    %v480 = vld [vmem:[#allocation5 + $0xbf8] sm:$0xff]
    %v481 = vld [vmem:[#allocation5 + $0xc00] sm:$0xff]
    %v482 = vld [vmem:[#allocation5 + $0xc08] sm:$0xff]
    %v483 = vld [vmem:[#allocation5 + $0xc10] sm:$0xff]
    %v484 = vld [vmem:[#allocation5 + $0xc18] sm:$0xff]
    %v485 = vld [vmem:[#allocation5 + $0xc20] sm:$0xff]
    %v486 = vld [vmem:[#allocation5 + $0xc28] sm:$0xff]
    %v487 = vld [vmem:[#allocation5 + $0xc30] sm:$0xff]
    %v488 = vld [vmem:[#allocation5 + $0xc38] sm:$0xff]
    %v489 = vld [vmem:[#allocation5 + $0xc40] sm:$0xff]
    %v490 = vld [vmem:[#allocation5 + $0xc48] sm:$0xff]
    %v491 = vld [vmem:[#allocation5 + $0xc50] sm:$0xff]
    %v492 = vld [vmem:[#allocation5 + $0xc58] sm:$0xff]
    %v493 = vld [vmem:[#allocation5 + $0xc60] sm:$0xff]
    %v494 = vld [vmem:[#allocation5 + $0xc68] sm:$0xff]
    %v495 = vld [vmem:[#allocation5 + $0xc70] sm:$0xff]
    %v496 = vld [vmem:[#allocation5 + $0xc78] sm:$0xff]
    %v497 = vld [vmem:[#allocation5 + $0xc80] sm:$0xff]
    %v498 = vld [vmem:[#allocation5 + $0xc88] sm:$0xff]
    %v499 = vld [vmem:[#allocation5 + $0xc90] sm:$0xff]
    %v500 = vld [vmem:[#allocation5 + $0xc98] sm:$0xff]
    %v501 = vld [vmem:[#allocation5 + $0xca0] sm:$0xff]
    %v502 = vld [vmem:[#allocation5 + $0xca8] sm:$0xff]
    %v503 = vld [vmem:[#allocation5 + $0xcb0] sm:$0xff]
    %v504 = vld [vmem:[#allocation5 + $0xcb8] sm:$0xff]
    %v505 = vld [vmem:[#allocation5 + $0xcc0] sm:$0xff]
    %v506 = vld [vmem:[#allocation5 + $0xcc8] sm:$0xff]
    %v507 = vld [vmem:[#allocation5 + $0xcd0] sm:$0xff]
    %v508 = vld [vmem:[#allocation5 + $0xcd8] sm:$0xff]
    %v509 = vld [vmem:[#allocation5 + $0xce0] sm:$0xff]
    %v510 = vld [vmem:[#allocation5 + $0xce8] sm:$0xff]
    %v511 = vld [vmem:[#allocation5 + $0xcf0] sm:$0xff]
    %v512 = vld [vmem:[#allocation5 + $0xcf8] sm:$0xff]
    %v513 = vld [vmem:[#allocation5 + $0xd00] sm:$0xff]
    %v514 = vld [vmem:[#allocation5 + $0xd08] sm:$0xff]
    %v515 = vld [vmem:[#allocation5 + $0xd10] sm:$0xff]
    %v516 = vld [vmem:[#allocation5 + $0xd18] sm:$0xff]
    %v517 = vld [vmem:[#allocation5 + $0xd20] sm:$0xff]
    %v518 = vld [vmem:[#allocation5 + $0xd28] sm:$0xff]
    %v519 = vld [vmem:[#allocation5 + $0xd30] sm:$0xff]
    %v520 = vld [vmem:[#allocation5 + $0xd38] sm:$0xff]
    %v521 = vld [vmem:[#allocation5 + $0xd40] sm:$0xff]
    %v522 = vld [vmem:[#allocation5 + $0xd48] sm:$0xff]
    %v523 = vld [vmem:[#allocation5 + $0xd50] sm:$0xff]
    %v524 = vld [vmem:[#allocation5 + $0xd58] sm:$0xff]
    %v525 = vld [vmem:[#allocation5 + $0xd60] sm:$0xff]
    %v526 = vld [vmem:[#allocation5 + $0xd68] sm:$0xff]
    %v527 = vld [vmem:[#allocation5 + $0xd70] sm:$0xff]
    %v528 = vld [vmem:[#allocation5 + $0xd78] sm:$0xff]
    %v529 = vld [vmem:[#allocation5 + $0xd80] sm:$0xff]
    %v530 = vld [vmem:[#allocation5 + $0xd88] sm:$0xff]
    %v531 = vld [vmem:[#allocation5 + $0xd90] sm:$0xff]
    %v532 = vld [vmem:[#allocation5 + $0xd98] sm:$0xff]
    %v533 = vld [vmem:[#allocation5 + $0xda0] sm:$0xff]
    %v534 = vld [vmem:[#allocation5 + $0xda8] sm:$0xff]
    %v535 = vld [vmem:[#allocation5 + $0xdb0] sm:$0xff]
    %v536 = vld [vmem:[#allocation5 + $0xdb8] sm:$0xff]
    %v537 = vld [vmem:[#allocation5 + $0xdc0] sm:$0xff]
    %v538 = vld [vmem:[#allocation5 + $0xdc8] sm:$0xff]
    %v539 = vld [vmem:[#allocation5 + $0xdd0] sm:$0xff]
    %v540 = vld [vmem:[#allocation5 + $0xdd8] sm:$0xff]
    %v541 = vld [vmem:[#allocation5 + $0xde0] sm:$0xff]
    %v542 = vld [vmem:[#allocation5 + $0xde8] sm:$0xff]
    %v543 = vld [vmem:[#allocation5 + $0xdf0] sm:$0xff]
    %v544 = vld [vmem:[#allocation5 + $0xdf8] sm:$0xff]
    %v545 = vld [vmem:[#allocation5 + $0xe00] sm:$0xff]
    %v546 = vld [vmem:[#allocation5 + $0xe08] sm:$0xff]
    %v547 = vld [vmem:[#allocation5 + $0xe10] sm:$0xff]
    %v548 = vld [vmem:[#allocation5 + $0xe18] sm:$0xff]
    %v549 = vld [vmem:[#allocation5 + $0xe20] sm:$0xff]
    %v550 = vld [vmem:[#allocation5 + $0xe28] sm:$0xff]
    %v551 = vld [vmem:[#allocation5 + $0xe30] sm:$0xff]
    %v552 = vld [vmem:[#allocation5 + $0xe38] sm:$0xff]
    %v553 = vld [vmem:[#allocation5 + $0xe40] sm:$0xff]
    %v554 = vld [vmem:[#allocation5 + $0xe48] sm:$0xff]
    %v555 = vld [vmem:[#allocation5 + $0xe50] sm:$0xff]
    %v556 = vld [vmem:[#allocation5 + $0xe58] sm:$0xff]
    %v557 = vld [vmem:[#allocation5 + $0xe60] sm:$0xff]
    %v558 = vld [vmem:[#allocation5 + $0xe68] sm:$0xff]
    %v559 = vld [vmem:[#allocation5 + $0xe70] sm:$0xff]
    %v560 = vld [vmem:[#allocation5 + $0xe78] sm:$0xff]
    %v561 = vld [vmem:[#allocation5 + $0xe80] sm:$0xff]
    %v562 = vld [vmem:[#allocation5 + $0xe88] sm:$0xff]
    %v563 = vld [vmem:[#allocation5 + $0xe90] sm:$0xff]
    %v564 = vld [vmem:[#allocation5 + $0xe98] sm:$0xff]
    %v565 = vld [vmem:[#allocation5 + $0xea0] sm:$0xff]
    %v566 = vld [vmem:[#allocation5 + $0xea8] sm:$0xff]
    %v567 = vld [vmem:[#allocation5 + $0xeb0] sm:$0xff]
    %v568 = vld [vmem:[#allocation5 + $0xeb8] sm:$0xff]
    %v569 = vld [vmem:[#allocation5 + $0xec0] sm:$0xff]
    %v570 = vld [vmem:[#allocation5 + $0xec8] sm:$0xff]
    %v571 = vld [vmem:[#allocation5 + $0xed0] sm:$0xff]
    %v572 = vld [vmem:[#allocation5 + $0xed8] sm:$0xff]
    %v573 = vld [vmem:[#allocation5 + $0xee0] sm:$0xff]
    %v574 = vld [vmem:[#allocation5 + $0xee8] sm:$0xff]
    %v575 = vld [vmem:[#allocation5 + $0xef0] sm:$0xff]
    %v576 = vld [vmem:[#allocation5 + $0xef8] sm:$0xff]
    %v577 = vld [vmem:[#allocation5 + $0xf00] sm:$0xff]
    %v578 = vld [vmem:[#allocation5 + $0xf08] sm:$0xff]
    %v579 = vld [vmem:[#allocation5 + $0xf10] sm:$0xff]
    %v580 = vld [vmem:[#allocation5 + $0xf18] sm:$0xff]
    %v581 = vld [vmem:[#allocation5 + $0xf20] sm:$0xff]
    %v582 = vld [vmem:[#allocation5 + $0xf28] sm:$0xff]
    %v583 = vld [vmem:[#allocation5 + $0xf30] sm:$0xff]
    %v584 = vld [vmem:[#allocation5 + $0xf38] sm:$0xff]
    %v585 = vld [vmem:[#allocation5 + $0xf40] sm:$0xff]
    %v586 = vld [vmem:[#allocation5 + $0xf48] sm:$0xff]
    %v587 = vld [vmem:[#allocation5 + $0xf50] sm:$0xff]
    %v588 = vld [vmem:[#allocation5 + $0xf58] sm:$0xff]
    %v589 = vld [vmem:[#allocation5 + $0xf60] sm:$0xff]
    %v590 = vld [vmem:[#allocation5 + $0xf68] sm:$0xff]
    %v591 = vld [vmem:[#allocation5 + $0xf70] sm:$0xff]
    %v592 = vld [vmem:[#allocation5 + $0xf78] sm:$0xff]
    %v593 = vld [vmem:[#allocation5 + $0xf80] sm:$0xff]
    %v594 = vld [vmem:[#allocation5 + $0xf88] sm:$0xff]
    %v595 = vld [vmem:[#allocation5 + $0xf90] sm:$0xff]
    %v596 = vld [vmem:[#allocation5 + $0xf98] sm:$0xff]
    %v597 = vld [vmem:[#allocation5 + $0xfa0] sm:$0xff]
    %v598 = vld [vmem:[#allocation5 + $0xfa8] sm:$0xff]
    %v599 = vld [vmem:[#allocation5 + $0xfb0] sm:$0xff]
    %v600 = vld [vmem:[#allocation5 + $0xfb8] sm:$0xff]
    %v601 = vld [vmem:[#allocation5 + $0xfc0] sm:$0xff]
    %v602 = vld [vmem:[#allocation5 + $0xfc8] sm:$0xff]
    %v603 = vld [vmem:[#allocation5 + $0xfd0] sm:$0xff]
    %v604 = vld [vmem:[#allocation5 + $0xfd8] sm:$0xff]
    %v605 = vld [vmem:[#allocation5 + $0xfe0] sm:$0xff]
    %v606 = vld [vmem:[#allocation5 + $0xfe8] sm:$0xff]
    %v607 = vld [vmem:[#allocation5 + $0xff0] sm:$0xff]
    %v608 = vld [vmem:[#allocation5 + $0xff8] sm:$0xff]
    %v1121 = vunpack.c.l.b16 %v97
    %v1122 = vunpack.c.h.b16 %v97
    %v1123 = vunpack.c.l.b16 %v98
    %v1124 = vunpack.c.h.b16 %v98
    %v1125 = vunpack.c.l.b16 %v99
    %v1126 = vunpack.c.h.b16 %v99
    %v1127 = vunpack.c.l.b16 %v100
    %v1128 = vunpack.c.h.b16 %v100
    %v1129 = vunpack.c.l.b16 %v101
    %v1130 = vunpack.c.h.b16 %v101
    %v1131 = vunpack.c.l.b16 %v102
    %v1132 = vunpack.c.h.b16 %v102
    %v1133 = vunpack.c.l.b16 %v103
    %v1134 = vunpack.c.h.b16 %v103
    %v1135 = vunpack.c.l.b16 %v104
    %v1136 = vunpack.c.h.b16 %v104
    %v1137 = vunpack.c.l.b16 %v105
    %v1138 = vunpack.c.h.b16 %v105
    %v1139 = vunpack.c.l.b16 %v106
    %v1140 = vunpack.c.h.b16 %v106
    %v1141 = vunpack.c.l.b16 %v107
    %v1142 = vunpack.c.h.b16 %v107
    %v1143 = vunpack.c.l.b16 %v108
    %v1144 = vunpack.c.h.b16 %v108
    %v1145 = vunpack.c.l.b16 %v109
    %v1146 = vunpack.c.h.b16 %v109
    %v1147 = vunpack.c.l.b16 %v110
    %v1148 = vunpack.c.h.b16 %v110
    %v1149 = vunpack.c.l.b16 %v111
    %v1150 = vunpack.c.h.b16 %v111
    %v1151 = vunpack.c.l.b16 %v112
    %v1152 = vunpack.c.h.b16 %v112
    %v1153 = vunpack.c.l.b16 %v113
    %v1154 = vunpack.c.h.b16 %v113
    %v1155 = vunpack.c.l.b16 %v114
    %v1156 = vunpack.c.h.b16 %v114
    %v1157 = vunpack.c.l.b16 %v115
    %v1158 = vunpack.c.h.b16 %v115
    %v1159 = vunpack.c.l.b16 %v116
    %v1160 = vunpack.c.h.b16 %v116
    %v1161 = vunpack.c.l.b16 %v117
    %v1162 = vunpack.c.h.b16 %v117
    %v1163 = vunpack.c.l.b16 %v118
    %v1164 = vunpack.c.h.b16 %v118
    %v1165 = vunpack.c.l.b16 %v119
    %v1166 = vunpack.c.h.b16 %v119
    %v1167 = vunpack.c.l.b16 %v120
    %v1168 = vunpack.c.h.b16 %v120
    %v1169 = vunpack.c.l.b16 %v121
    %v1170 = vunpack.c.h.b16 %v121
    %v1171 = vunpack.c.l.b16 %v122
    %v1172 = vunpack.c.h.b16 %v122
    %v1173 = vunpack.c.l.b16 %v123
    %v1174 = vunpack.c.h.b16 %v123
    %v1175 = vunpack.c.l.b16 %v124
    %v1176 = vunpack.c.h.b16 %v124
    %v1177 = vunpack.c.l.b16 %v125
    %v1178 = vunpack.c.h.b16 %v125
    %v1179 = vunpack.c.l.b16 %v126
    %v1180 = vunpack.c.h.b16 %v126
    %v1181 = vunpack.c.l.b16 %v127
    %v1182 = vunpack.c.h.b16 %v127
    %v1183 = vunpack.c.l.b16 %v128
    %v1184 = vunpack.c.h.b16 %v128
    %v1185 = vunpack.c.l.b16 %v129
    %v1186 = vunpack.c.h.b16 %v129
    %v1187 = vunpack.c.l.b16 %v130
    %v1188 = vunpack.c.h.b16 %v130
    %v1189 = vunpack.c.l.b16 %v131
    %v1190 = vunpack.c.h.b16 %v131
    %v1191 = vunpack.c.l.b16 %v132
    %v1192 = vunpack.c.h.b16 %v132
    %v1193 = vunpack.c.l.b16 %v133
    %v1194 = vunpack.c.h.b16 %v133
    %v1195 = vunpack.c.l.b16 %v134
    %v1196 = vunpack.c.h.b16 %v134
    %v1197 = vunpack.c.l.b16 %v135
    %v1198 = vunpack.c.h.b16 %v135
    %v1199 = vunpack.c.l.b16 %v136
    %v1200 = vunpack.c.h.b16 %v136
    %v1201 = vunpack.c.l.b16 %v137
    %v1202 = vunpack.c.h.b16 %v137
    %v1203 = vunpack.c.l.b16 %v138
    %v1204 = vunpack.c.h.b16 %v138
    %v1205 = vunpack.c.l.b16 %v139
    %v1206 = vunpack.c.h.b16 %v139
    %v1207 = vunpack.c.l.b16 %v140
    %v1208 = vunpack.c.h.b16 %v140
    %v1209 = vunpack.c.l.b16 %v141
    %v1210 = vunpack.c.h.b16 %v141
    %v1211 = vunpack.c.l.b16 %v142
    %v1212 = vunpack.c.h.b16 %v142
    %v1213 = vunpack.c.l.b16 %v143
    %v1214 = vunpack.c.h.b16 %v143
    %v1215 = vunpack.c.l.b16 %v144
    %v1216 = vunpack.c.h.b16 %v144
    %v1217 = vunpack.c.l.b16 %v145
    %v1218 = vunpack.c.h.b16 %v145
    %v1219 = vunpack.c.l.b16 %v146
    %v1220 = vunpack.c.h.b16 %v146
    %v1221 = vunpack.c.l.b16 %v147
    %v1222 = vunpack.c.h.b16 %v147
    %v1223 = vunpack.c.l.b16 %v148
    %v1224 = vunpack.c.h.b16 %v148
    %v1225 = vunpack.c.l.b16 %v149
    %v1226 = vunpack.c.h.b16 %v149
    %v1227 = vunpack.c.l.b16 %v150
    %v1228 = vunpack.c.h.b16 %v150
    %v1229 = vunpack.c.l.b16 %v151
    %v1230 = vunpack.c.h.b16 %v151
    %v1231 = vunpack.c.l.b16 %v152
    %v1232 = vunpack.c.h.b16 %v152
    %v1233 = vunpack.c.l.b16 %v153
    %v1234 = vunpack.c.h.b16 %v153
    %v1235 = vunpack.c.l.b16 %v154
    %v1236 = vunpack.c.h.b16 %v154
    %v1237 = vunpack.c.l.b16 %v155
    %v1238 = vunpack.c.h.b16 %v155
    %v1239 = vunpack.c.l.b16 %v156
    %v1240 = vunpack.c.h.b16 %v156
    %v1241 = vunpack.c.l.b16 %v157
    %v1242 = vunpack.c.h.b16 %v157
    %v1243 = vunpack.c.l.b16 %v158
    %v1244 = vunpack.c.h.b16 %v158
    %v1245 = vunpack.c.l.b16 %v159
    %v1246 = vunpack.c.h.b16 %v159
    %v1247 = vunpack.c.l.b16 %v160
    %v1248 = vunpack.c.h.b16 %v160
    %v1249 = vunpack.c.l.b16 %v161
    %v1250 = vunpack.c.h.b16 %v161
    %v1251 = vunpack.c.l.b16 %v162
    %v1252 = vunpack.c.h.b16 %v162
    %v1253 = vunpack.c.l.b16 %v163
    %v1254 = vunpack.c.h.b16 %v163
    %v1255 = vunpack.c.l.b16 %v164
    %v1256 = vunpack.c.h.b16 %v164
    %v1257 = vunpack.c.l.b16 %v165
    %v1258 = vunpack.c.h.b16 %v165
    %v1259 = vunpack.c.l.b16 %v166
    %v1260 = vunpack.c.h.b16 %v166
    %v1261 = vunpack.c.l.b16 %v167
    %v1262 = vunpack.c.h.b16 %v167
    %v1263 = vunpack.c.l.b16 %v168
    %v1264 = vunpack.c.h.b16 %v168
    %v1265 = vunpack.c.l.b16 %v169
    %v1266 = vunpack.c.h.b16 %v169
    %v1267 = vunpack.c.l.b16 %v170
    %v1268 = vunpack.c.h.b16 %v170
    %v1269 = vunpack.c.l.b16 %v171
    %v1270 = vunpack.c.h.b16 %v171
    %v1271 = vunpack.c.l.b16 %v172
    %v1272 = vunpack.c.h.b16 %v172
    %v1273 = vunpack.c.l.b16 %v173
    %v1274 = vunpack.c.h.b16 %v173
    %v1275 = vunpack.c.l.b16 %v174
    %v1276 = vunpack.c.h.b16 %v174
    %v1277 = vunpack.c.l.b16 %v175
    %v1278 = vunpack.c.h.b16 %v175
    %v1279 = vunpack.c.l.b16 %v176
    %v1280 = vunpack.c.h.b16 %v176
    %v1281 = vunpack.c.l.b16 %v177
    %v1282 = vunpack.c.h.b16 %v177
    %v1283 = vunpack.c.l.b16 %v178
    %v1284 = vunpack.c.h.b16 %v178
    %v1285 = vunpack.c.l.b16 %v179
    %v1286 = vunpack.c.h.b16 %v179
    %v1287 = vunpack.c.l.b16 %v180
    %v1288 = vunpack.c.h.b16 %v180
    %v1289 = vunpack.c.l.b16 %v181
    %v1290 = vunpack.c.h.b16 %v181
    %v1291 = vunpack.c.l.b16 %v182
    %v1292 = vunpack.c.h.b16 %v182
    %v1293 = vunpack.c.l.b16 %v183
    %v1294 = vunpack.c.h.b16 %v183
    %v1295 = vunpack.c.l.b16 %v184
    %v1296 = vunpack.c.h.b16 %v184
    %v1297 = vunpack.c.l.b16 %v185
    %v1298 = vunpack.c.h.b16 %v185
    %v1299 = vunpack.c.l.b16 %v186
    %v1300 = vunpack.c.h.b16 %v186
    %v1301 = vunpack.c.l.b16 %v187
    %v1302 = vunpack.c.h.b16 %v187
    %v1303 = vunpack.c.l.b16 %v188
    %v1304 = vunpack.c.h.b16 %v188
    %v1305 = vunpack.c.l.b16 %v189
    %v1306 = vunpack.c.h.b16 %v189
    %v1307 = vunpack.c.l.b16 %v190
    %v1308 = vunpack.c.h.b16 %v190
    %v1309 = vunpack.c.l.b16 %v191
    %v1310 = vunpack.c.h.b16 %v191
    %v1311 = vunpack.c.l.b16 %v192
    %v1312 = vunpack.c.h.b16 %v192
    %v1313 = vunpack.c.l.b16 %v193
    %v1314 = vunpack.c.h.b16 %v193
    %v1315 = vunpack.c.l.b16 %v194
    %v1316 = vunpack.c.h.b16 %v194
    %v1317 = vunpack.c.l.b16 %v195
    %v1318 = vunpack.c.h.b16 %v195
    %v1319 = vunpack.c.l.b16 %v196
    %v1320 = vunpack.c.h.b16 %v196
    %v1321 = vunpack.c.l.b16 %v197
    %v1322 = vunpack.c.h.b16 %v197
    %v1323 = vunpack.c.l.b16 %v198
    %v1324 = vunpack.c.h.b16 %v198
    %v1325 = vunpack.c.l.b16 %v199
    %v1326 = vunpack.c.h.b16 %v199
    %v1327 = vunpack.c.l.b16 %v200
    %v1328 = vunpack.c.h.b16 %v200
    %v1329 = vunpack.c.l.b16 %v201
    %v1330 = vunpack.c.h.b16 %v201
    %v1331 = vunpack.c.l.b16 %v202
    %v1332 = vunpack.c.h.b16 %v202
    %v1333 = vunpack.c.l.b16 %v203
    %v1334 = vunpack.c.h.b16 %v203
    %v1335 = vunpack.c.l.b16 %v204
    %v1336 = vunpack.c.h.b16 %v204
    %v1337 = vunpack.c.l.b16 %v205
    %v1338 = vunpack.c.h.b16 %v205
    %v1339 = vunpack.c.l.b16 %v206
    %v1340 = vunpack.c.h.b16 %v206
    %v1341 = vunpack.c.l.b16 %v207
    %v1342 = vunpack.c.h.b16 %v207
    %v1343 = vunpack.c.l.b16 %v208
    %v1344 = vunpack.c.h.b16 %v208
    %v1345 = vunpack.c.l.b16 %v209
    %v1346 = vunpack.c.h.b16 %v209
    %v1347 = vunpack.c.l.b16 %v210
    %v1348 = vunpack.c.h.b16 %v210
    %v1349 = vunpack.c.l.b16 %v211
    %v1350 = vunpack.c.h.b16 %v211
    %v1351 = vunpack.c.l.b16 %v212
    %v1352 = vunpack.c.h.b16 %v212
    %v1353 = vunpack.c.l.b16 %v213
    %v1354 = vunpack.c.h.b16 %v213
    %v1355 = vunpack.c.l.b16 %v214
    %v1356 = vunpack.c.h.b16 %v214
    %v1357 = vunpack.c.l.b16 %v215
    %v1358 = vunpack.c.h.b16 %v215
    %v1359 = vunpack.c.l.b16 %v216
    %v1360 = vunpack.c.h.b16 %v216
    %v1361 = vunpack.c.l.b16 %v217
    %v1362 = vunpack.c.h.b16 %v217
    %v1363 = vunpack.c.l.b16 %v218
    %v1364 = vunpack.c.h.b16 %v218
    %v1365 = vunpack.c.l.b16 %v219
    %v1366 = vunpack.c.h.b16 %v219
    %v1367 = vunpack.c.l.b16 %v220
    %v1368 = vunpack.c.h.b16 %v220
    %v1369 = vunpack.c.l.b16 %v221
    %v1370 = vunpack.c.h.b16 %v221
    %v1371 = vunpack.c.l.b16 %v222
    %v1372 = vunpack.c.h.b16 %v222
    %v1373 = vunpack.c.l.b16 %v223
    %v1374 = vunpack.c.h.b16 %v223
    %v1375 = vunpack.c.l.b16 %v224
    %v1376 = vunpack.c.h.b16 %v224
    %v1377 = vunpack.c.l.b16 %v225
    %v1378 = vunpack.c.h.b16 %v225
    %v1379 = vunpack.c.l.b16 %v226
    %v1380 = vunpack.c.h.b16 %v226
    %v1381 = vunpack.c.l.b16 %v227
    %v1382 = vunpack.c.h.b16 %v227
    %v1383 = vunpack.c.l.b16 %v228
    %v1384 = vunpack.c.h.b16 %v228
    %v1385 = vunpack.c.l.b16 %v229
    %v1386 = vunpack.c.h.b16 %v229
    %v1387 = vunpack.c.l.b16 %v230
    %v1388 = vunpack.c.h.b16 %v230
    %v1389 = vunpack.c.l.b16 %v231
    %v1390 = vunpack.c.h.b16 %v231
    %v1391 = vunpack.c.l.b16 %v232
    %v1392 = vunpack.c.h.b16 %v232
    %v1393 = vunpack.c.l.b16 %v233
    %v1394 = vunpack.c.h.b16 %v233
    %v1395 = vunpack.c.l.b16 %v234
    %v1396 = vunpack.c.h.b16 %v234
    %v1397 = vunpack.c.l.b16 %v235
    %v1398 = vunpack.c.h.b16 %v235
    %v1399 = vunpack.c.l.b16 %v236
    %v1400 = vunpack.c.h.b16 %v236
    %v1401 = vunpack.c.l.b16 %v237
    %v1402 = vunpack.c.h.b16 %v237
    %v1403 = vunpack.c.l.b16 %v238
    %v1404 = vunpack.c.h.b16 %v238
    %v1405 = vunpack.c.l.b16 %v239
    %v1406 = vunpack.c.h.b16 %v239
    %v1407 = vunpack.c.l.b16 %v240
    %v1408 = vunpack.c.h.b16 %v240
    %v1409 = vunpack.c.l.b16 %v241
    %v1410 = vunpack.c.h.b16 %v241
    %v1411 = vunpack.c.l.b16 %v242
    %v1412 = vunpack.c.h.b16 %v242
    %v1413 = vunpack.c.l.b16 %v243
    %v1414 = vunpack.c.h.b16 %v243
    %v1415 = vunpack.c.l.b16 %v244
    %v1416 = vunpack.c.h.b16 %v244
    %v1417 = vunpack.c.l.b16 %v245
    %v1418 = vunpack.c.h.b16 %v245
    %v1419 = vunpack.c.l.b16 %v246
    %v1420 = vunpack.c.h.b16 %v246
    %v1421 = vunpack.c.l.b16 %v247
    %v1422 = vunpack.c.h.b16 %v247
    %v1423 = vunpack.c.l.b16 %v248
    %v1424 = vunpack.c.h.b16 %v248
    %v1425 = vunpack.c.l.b16 %v249
    %v1426 = vunpack.c.h.b16 %v249
    %v1427 = vunpack.c.l.b16 %v250
    %v1428 = vunpack.c.h.b16 %v250
    %v1429 = vunpack.c.l.b16 %v251
    %v1430 = vunpack.c.h.b16 %v251
    %v1431 = vunpack.c.l.b16 %v252
    %v1432 = vunpack.c.h.b16 %v252
    %v1433 = vunpack.c.l.b16 %v253
    %v1434 = vunpack.c.h.b16 %v253
    %v1435 = vunpack.c.l.b16 %v254
    %v1436 = vunpack.c.h.b16 %v254
    %v1437 = vunpack.c.l.b16 %v255
    %v1438 = vunpack.c.h.b16 %v255
    %v1439 = vunpack.c.l.b16 %v256
    %v1440 = vunpack.c.h.b16 %v256
    %v1441 = vunpack.c.l.b16 %v257
    %v1442 = vunpack.c.h.b16 %v257
    %v1443 = vunpack.c.l.b16 %v258
    %v1444 = vunpack.c.h.b16 %v258
    %v1445 = vunpack.c.l.b16 %v259
    %v1446 = vunpack.c.h.b16 %v259
    %v1447 = vunpack.c.l.b16 %v260
    %v1448 = vunpack.c.h.b16 %v260
    %v1449 = vunpack.c.l.b16 %v261
    %v1450 = vunpack.c.h.b16 %v261
    %v1451 = vunpack.c.l.b16 %v262
    %v1452 = vunpack.c.h.b16 %v262
    %v1453 = vunpack.c.l.b16 %v263
    %v1454 = vunpack.c.h.b16 %v263
    %v1455 = vunpack.c.l.b16 %v264
    %v1456 = vunpack.c.h.b16 %v264
    %v1457 = vunpack.c.l.b16 %v265
    %v1458 = vunpack.c.h.b16 %v265
    %v1459 = vunpack.c.l.b16 %v266
    %v1460 = vunpack.c.h.b16 %v266
    %v1461 = vunpack.c.l.b16 %v267
    %v1462 = vunpack.c.h.b16 %v267
    %v1463 = vunpack.c.l.b16 %v268
    %v1464 = vunpack.c.h.b16 %v268
    %v1465 = vunpack.c.l.b16 %v269
    %v1466 = vunpack.c.h.b16 %v269
    %v1467 = vunpack.c.l.b16 %v270
    %v1468 = vunpack.c.h.b16 %v270
    %v1469 = vunpack.c.l.b16 %v271
    %v1470 = vunpack.c.h.b16 %v271
    %v1471 = vunpack.c.l.b16 %v272
    %v1472 = vunpack.c.h.b16 %v272
    %v1473 = vunpack.c.l.b16 %v273
    %v1474 = vunpack.c.h.b16 %v273
    %v1475 = vunpack.c.l.b16 %v274
    %v1476 = vunpack.c.h.b16 %v274
    %v1477 = vunpack.c.l.b16 %v275
    %v1478 = vunpack.c.h.b16 %v275
    %v1479 = vunpack.c.l.b16 %v276
    %v1480 = vunpack.c.h.b16 %v276
    %v1481 = vunpack.c.l.b16 %v277
    %v1482 = vunpack.c.h.b16 %v277
    %v1483 = vunpack.c.l.b16 %v278
    %v1484 = vunpack.c.h.b16 %v278
    %v1485 = vunpack.c.l.b16 %v279
    %v1486 = vunpack.c.h.b16 %v279
    %v1487 = vunpack.c.l.b16 %v280
    %v1488 = vunpack.c.h.b16 %v280
    %v1489 = vunpack.c.l.b16 %v281
    %v1490 = vunpack.c.h.b16 %v281
    %v1491 = vunpack.c.l.b16 %v282
    %v1492 = vunpack.c.h.b16 %v282
    %v1493 = vunpack.c.l.b16 %v283
    %v1494 = vunpack.c.h.b16 %v283
    %v1495 = vunpack.c.l.b16 %v284
    %v1496 = vunpack.c.h.b16 %v284
    %v1497 = vunpack.c.l.b16 %v285
    %v1498 = vunpack.c.h.b16 %v285
    %v1499 = vunpack.c.l.b16 %v286
    %v1500 = vunpack.c.h.b16 %v286
    %v1501 = vunpack.c.l.b16 %v287
    %v1502 = vunpack.c.h.b16 %v287
    %v1503 = vunpack.c.l.b16 %v288
    %v1504 = vunpack.c.h.b16 %v288
    %v1505 = vunpack.c.l.b16 %v289
    %v1506 = vunpack.c.h.b16 %v289
    %v1507 = vunpack.c.l.b16 %v290
    %v1508 = vunpack.c.h.b16 %v290
    %v1509 = vunpack.c.l.b16 %v291
    %v1510 = vunpack.c.h.b16 %v291
    %v1511 = vunpack.c.l.b16 %v292
    %v1512 = vunpack.c.h.b16 %v292
    %v1513 = vunpack.c.l.b16 %v293
    %v1514 = vunpack.c.h.b16 %v293
    %v1515 = vunpack.c.l.b16 %v294
    %v1516 = vunpack.c.h.b16 %v294
    %v1517 = vunpack.c.l.b16 %v295
    %v1518 = vunpack.c.h.b16 %v295
    %v1519 = vunpack.c.l.b16 %v296
    %v1520 = vunpack.c.h.b16 %v296
    %v1521 = vunpack.c.l.b16 %v297
    %v1522 = vunpack.c.h.b16 %v297
    %v1523 = vunpack.c.l.b16 %v298
    %v1524 = vunpack.c.h.b16 %v298
    %v1525 = vunpack.c.l.b16 %v299
    %v1526 = vunpack.c.h.b16 %v299
    %v1527 = vunpack.c.l.b16 %v300
    %v1528 = vunpack.c.h.b16 %v300
    %v1529 = vunpack.c.l.b16 %v301
    %v1530 = vunpack.c.h.b16 %v301
    %v1531 = vunpack.c.l.b16 %v302
    %v1532 = vunpack.c.h.b16 %v302
    %v1533 = vunpack.c.l.b16 %v303
    %v1534 = vunpack.c.h.b16 %v303
    %v1535 = vunpack.c.l.b16 %v304
    %v1536 = vunpack.c.h.b16 %v304
    %v1537 = vunpack.c.l.b16 %v305
    %v1538 = vunpack.c.h.b16 %v305
    %v1539 = vunpack.c.l.b16 %v306
    %v1540 = vunpack.c.h.b16 %v306
    %v1541 = vunpack.c.l.b16 %v307
    %v1542 = vunpack.c.h.b16 %v307
    %v1543 = vunpack.c.l.b16 %v308
    %v1544 = vunpack.c.h.b16 %v308
    %v1545 = vunpack.c.l.b16 %v309
    %v1546 = vunpack.c.h.b16 %v309
    %v1547 = vunpack.c.l.b16 %v310
    %v1548 = vunpack.c.h.b16 %v310
    %v1549 = vunpack.c.l.b16 %v311
    %v1550 = vunpack.c.h.b16 %v311
    %v1551 = vunpack.c.l.b16 %v312
    %v1552 = vunpack.c.h.b16 %v312
    %v1553 = vunpack.c.l.b16 %v313
    %v1554 = vunpack.c.h.b16 %v313
    %v1555 = vunpack.c.l.b16 %v314
    %v1556 = vunpack.c.h.b16 %v314
    %v1557 = vunpack.c.l.b16 %v315
    %v1558 = vunpack.c.h.b16 %v315
    %v1559 = vunpack.c.l.b16 %v316
    %v1560 = vunpack.c.h.b16 %v316
    %v1561 = vunpack.c.l.b16 %v317
    %v1562 = vunpack.c.h.b16 %v317
    %v1563 = vunpack.c.l.b16 %v318
    %v1564 = vunpack.c.h.b16 %v318
    %v1565 = vunpack.c.l.b16 %v319
    %v1566 = vunpack.c.h.b16 %v319
    %v1567 = vunpack.c.l.b16 %v320
    %v1568 = vunpack.c.h.b16 %v320
    %v1569 = vunpack.c.l.b16 %v321
    %v1570 = vunpack.c.h.b16 %v321
    %v1571 = vunpack.c.l.b16 %v322
    %v1572 = vunpack.c.h.b16 %v322
    %v1573 = vunpack.c.l.b16 %v323
    %v1574 = vunpack.c.h.b16 %v323
    %v1575 = vunpack.c.l.b16 %v324
    %v1576 = vunpack.c.h.b16 %v324
    %v1577 = vunpack.c.l.b16 %v325
    %v1578 = vunpack.c.h.b16 %v325
    %v1579 = vunpack.c.l.b16 %v326
    %v1580 = vunpack.c.h.b16 %v326
    %v1581 = vunpack.c.l.b16 %v327
    %v1582 = vunpack.c.h.b16 %v327
    %v1583 = vunpack.c.l.b16 %v328
    %v1584 = vunpack.c.h.b16 %v328
    %v1585 = vunpack.c.l.b16 %v329
    %v1586 = vunpack.c.h.b16 %v329
    %v1587 = vunpack.c.l.b16 %v330
    %v1588 = vunpack.c.h.b16 %v330
    %v1589 = vunpack.c.l.b16 %v331
    %v1590 = vunpack.c.h.b16 %v331
    %v1591 = vunpack.c.l.b16 %v332
    %v1592 = vunpack.c.h.b16 %v332
    %v1593 = vunpack.c.l.b16 %v333
    %v1594 = vunpack.c.h.b16 %v333
    %v1595 = vunpack.c.l.b16 %v334
    %v1596 = vunpack.c.h.b16 %v334
    %v1597 = vunpack.c.l.b16 %v335
    %v1598 = vunpack.c.h.b16 %v335
    %v1599 = vunpack.c.l.b16 %v336
    %v1600 = vunpack.c.h.b16 %v336
    %v1601 = vunpack.c.l.b16 %v337
    %v1602 = vunpack.c.h.b16 %v337
    %v1603 = vunpack.c.l.b16 %v338
    %v1604 = vunpack.c.h.b16 %v338
    %v1605 = vunpack.c.l.b16 %v339
    %v1606 = vunpack.c.h.b16 %v339
    %v1607 = vunpack.c.l.b16 %v340
    %v1608 = vunpack.c.h.b16 %v340
    %v1609 = vunpack.c.l.b16 %v341
    %v1610 = vunpack.c.h.b16 %v341
    %v1611 = vunpack.c.l.b16 %v342
    %v1612 = vunpack.c.h.b16 %v342
    %v1613 = vunpack.c.l.b16 %v343
    %v1614 = vunpack.c.h.b16 %v343
    %v1615 = vunpack.c.l.b16 %v344
    %v1616 = vunpack.c.h.b16 %v344
    %v1617 = vunpack.c.l.b16 %v345
    %v1618 = vunpack.c.h.b16 %v345
    %v1619 = vunpack.c.l.b16 %v346
    %v1620 = vunpack.c.h.b16 %v346
    %v1621 = vunpack.c.l.b16 %v347
    %v1622 = vunpack.c.h.b16 %v347
    %v1623 = vunpack.c.l.b16 %v348
    %v1624 = vunpack.c.h.b16 %v348
    %v1625 = vunpack.c.l.b16 %v349
    %v1626 = vunpack.c.h.b16 %v349
    %v1627 = vunpack.c.l.b16 %v350
    %v1628 = vunpack.c.h.b16 %v350
    %v1629 = vunpack.c.l.b16 %v351
    %v1630 = vunpack.c.h.b16 %v351
    %v1631 = vunpack.c.l.b16 %v352
    %v1632 = vunpack.c.h.b16 %v352
    %v1633 = vunpack.c.l.b16 %v353
    %v1634 = vunpack.c.h.b16 %v353
    %v1635 = vunpack.c.l.b16 %v354
    %v1636 = vunpack.c.h.b16 %v354
    %v1637 = vunpack.c.l.b16 %v355
    %v1638 = vunpack.c.h.b16 %v355
    %v1639 = vunpack.c.l.b16 %v356
    %v1640 = vunpack.c.h.b16 %v356
    %v1641 = vunpack.c.l.b16 %v357
    %v1642 = vunpack.c.h.b16 %v357
    %v1643 = vunpack.c.l.b16 %v358
    %v1644 = vunpack.c.h.b16 %v358
    %v1645 = vunpack.c.l.b16 %v359
    %v1646 = vunpack.c.h.b16 %v359
    %v1647 = vunpack.c.l.b16 %v360
    %v1648 = vunpack.c.h.b16 %v360
    %v1649 = vunpack.c.l.b16 %v361
    %v1650 = vunpack.c.h.b16 %v361
    %v1651 = vunpack.c.l.b16 %v362
    %v1652 = vunpack.c.h.b16 %v362
    %v1653 = vunpack.c.l.b16 %v363
    %v1654 = vunpack.c.h.b16 %v363
    %v1655 = vunpack.c.l.b16 %v364
    %v1656 = vunpack.c.h.b16 %v364
    %v1657 = vunpack.c.l.b16 %v365
    %v1658 = vunpack.c.h.b16 %v365
    %v1659 = vunpack.c.l.b16 %v366
    %v1660 = vunpack.c.h.b16 %v366
    %v1661 = vunpack.c.l.b16 %v367
    %v1662 = vunpack.c.h.b16 %v367
    %v1663 = vunpack.c.l.b16 %v368
    %v1664 = vunpack.c.h.b16 %v368
    %v1665 = vunpack.c.l.b16 %v369
    %v1666 = vunpack.c.h.b16 %v369
    %v1667 = vunpack.c.l.b16 %v370
    %v1668 = vunpack.c.h.b16 %v370
    %v1669 = vunpack.c.l.b16 %v371
    %v1670 = vunpack.c.h.b16 %v371
    %v1671 = vunpack.c.l.b16 %v372
    %v1672 = vunpack.c.h.b16 %v372
    %v1673 = vunpack.c.l.b16 %v373
    %v1674 = vunpack.c.h.b16 %v373
    %v1675 = vunpack.c.l.b16 %v374
    %v1676 = vunpack.c.h.b16 %v374
    %v1677 = vunpack.c.l.b16 %v375
    %v1678 = vunpack.c.h.b16 %v375
    %v1679 = vunpack.c.l.b16 %v376
    %v1680 = vunpack.c.h.b16 %v376
    %v1681 = vunpack.c.l.b16 %v377
    %v1682 = vunpack.c.h.b16 %v377
    %v1683 = vunpack.c.l.b16 %v378
    %v1684 = vunpack.c.h.b16 %v378
    %v1685 = vunpack.c.l.b16 %v379
    %v1686 = vunpack.c.h.b16 %v379
    %v1687 = vunpack.c.l.b16 %v380
    %v1688 = vunpack.c.h.b16 %v380
    %v1689 = vunpack.c.l.b16 %v381
    %v1690 = vunpack.c.h.b16 %v381
    %v1691 = vunpack.c.l.b16 %v382
    %v1692 = vunpack.c.h.b16 %v382
    %v1693 = vunpack.c.l.b16 %v383
    %v1694 = vunpack.c.h.b16 %v383
    %v1695 = vunpack.c.l.b16 %v384
    %v1696 = vunpack.c.h.b16 %v384
    %v1697 = vunpack.c.l.b16 %v385
    %v1698 = vunpack.c.h.b16 %v385
    %v1699 = vunpack.c.l.b16 %v386
    %v1700 = vunpack.c.h.b16 %v386
    %v1701 = vunpack.c.l.b16 %v387
    %v1702 = vunpack.c.h.b16 %v387
    %v1703 = vunpack.c.l.b16 %v388
    %v1704 = vunpack.c.h.b16 %v388
    %v1705 = vunpack.c.l.b16 %v389
    %v1706 = vunpack.c.h.b16 %v389
    %v1707 = vunpack.c.l.b16 %v390
    %v1708 = vunpack.c.h.b16 %v390
    %v1709 = vunpack.c.l.b16 %v391
    %v1710 = vunpack.c.h.b16 %v391
    %v1711 = vunpack.c.l.b16 %v392
    %v1712 = vunpack.c.h.b16 %v392
    %v1713 = vunpack.c.l.b16 %v393
    %v1714 = vunpack.c.h.b16 %v393
    %v1715 = vunpack.c.l.b16 %v394
    %v1716 = vunpack.c.h.b16 %v394
    %v1717 = vunpack.c.l.b16 %v395
    %v1718 = vunpack.c.h.b16 %v395
    %v1719 = vunpack.c.l.b16 %v396
    %v1720 = vunpack.c.h.b16 %v396
    %v1721 = vunpack.c.l.b16 %v397
    %v1722 = vunpack.c.h.b16 %v397
    %v1723 = vunpack.c.l.b16 %v398
    %v1724 = vunpack.c.h.b16 %v398
    %v1725 = vunpack.c.l.b16 %v399
    %v1726 = vunpack.c.h.b16 %v399
    %v1727 = vunpack.c.l.b16 %v400
    %v1728 = vunpack.c.h.b16 %v400
    %v1729 = vunpack.c.l.b16 %v401
    %v1730 = vunpack.c.h.b16 %v401
    %v1731 = vunpack.c.l.b16 %v402
    %v1732 = vunpack.c.h.b16 %v402
    %v1733 = vunpack.c.l.b16 %v403
    %v1734 = vunpack.c.h.b16 %v403
    %v1735 = vunpack.c.l.b16 %v404
    %v1736 = vunpack.c.h.b16 %v404
    %v1737 = vunpack.c.l.b16 %v405
    %v1738 = vunpack.c.h.b16 %v405
    %v1739 = vunpack.c.l.b16 %v406
    %v1740 = vunpack.c.h.b16 %v406
    %v1741 = vunpack.c.l.b16 %v407
    %v1742 = vunpack.c.h.b16 %v407
    %v1743 = vunpack.c.l.b16 %v408
    %v1744 = vunpack.c.h.b16 %v408
    %v1745 = vunpack.c.l.b16 %v409
    %v1746 = vunpack.c.h.b16 %v409
    %v1747 = vunpack.c.l.b16 %v410
    %v1748 = vunpack.c.h.b16 %v410
    %v1749 = vunpack.c.l.b16 %v411
    %v1750 = vunpack.c.h.b16 %v411
    %v1751 = vunpack.c.l.b16 %v412
    %v1752 = vunpack.c.h.b16 %v412
    %v1753 = vunpack.c.l.b16 %v413
    %v1754 = vunpack.c.h.b16 %v413
    %v1755 = vunpack.c.l.b16 %v414
    %v1756 = vunpack.c.h.b16 %v414
    %v1757 = vunpack.c.l.b16 %v415
    %v1758 = vunpack.c.h.b16 %v415
    %v1759 = vunpack.c.l.b16 %v416
    %v1760 = vunpack.c.h.b16 %v416
    %v1761 = vunpack.c.l.b16 %v417
    %v1762 = vunpack.c.h.b16 %v417
    %v1763 = vunpack.c.l.b16 %v418
    %v1764 = vunpack.c.h.b16 %v418
    %v1765 = vunpack.c.l.b16 %v419
    %v1766 = vunpack.c.h.b16 %v419
    %v1767 = vunpack.c.l.b16 %v420
    %v1768 = vunpack.c.h.b16 %v420
    %v1769 = vunpack.c.l.b16 %v421
    %v1770 = vunpack.c.h.b16 %v421
    %v1771 = vunpack.c.l.b16 %v422
    %v1772 = vunpack.c.h.b16 %v422
    %v1773 = vunpack.c.l.b16 %v423
    %v1774 = vunpack.c.h.b16 %v423
    %v1775 = vunpack.c.l.b16 %v424
    %v1776 = vunpack.c.h.b16 %v424
    %v1777 = vunpack.c.l.b16 %v425
    %v1778 = vunpack.c.h.b16 %v425
    %v1779 = vunpack.c.l.b16 %v426
    %v1780 = vunpack.c.h.b16 %v426
    %v1781 = vunpack.c.l.b16 %v427
    %v1782 = vunpack.c.h.b16 %v427
    %v1783 = vunpack.c.l.b16 %v428
    %v1784 = vunpack.c.h.b16 %v428
    %v1785 = vunpack.c.l.b16 %v429
    %v1786 = vunpack.c.h.b16 %v429
    %v1787 = vunpack.c.l.b16 %v430
    %v1788 = vunpack.c.h.b16 %v430
    %v1789 = vunpack.c.l.b16 %v431
    %v1790 = vunpack.c.h.b16 %v431
    %v1791 = vunpack.c.l.b16 %v432
    %v1792 = vunpack.c.h.b16 %v432
    %v1793 = vunpack.c.l.b16 %v433
    %v1794 = vunpack.c.h.b16 %v433
    %v1795 = vunpack.c.l.b16 %v434
    %v1796 = vunpack.c.h.b16 %v434
    %v1797 = vunpack.c.l.b16 %v435
    %v1798 = vunpack.c.h.b16 %v435
    %v1799 = vunpack.c.l.b16 %v436
    %v1800 = vunpack.c.h.b16 %v436
    %v1801 = vunpack.c.l.b16 %v437
    %v1802 = vunpack.c.h.b16 %v437
    %v1803 = vunpack.c.l.b16 %v438
    %v1804 = vunpack.c.h.b16 %v438
    %v1805 = vunpack.c.l.b16 %v439
    %v1806 = vunpack.c.h.b16 %v439
    %v1807 = vunpack.c.l.b16 %v440
    %v1808 = vunpack.c.h.b16 %v440
    %v1809 = vunpack.c.l.b16 %v441
    %v1810 = vunpack.c.h.b16 %v441
    %v1811 = vunpack.c.l.b16 %v442
    %v1812 = vunpack.c.h.b16 %v442
    %v1813 = vunpack.c.l.b16 %v443
    %v1814 = vunpack.c.h.b16 %v443
    %v1815 = vunpack.c.l.b16 %v444
    %v1816 = vunpack.c.h.b16 %v444
    %v1817 = vunpack.c.l.b16 %v445
    %v1818 = vunpack.c.h.b16 %v445
    %v1819 = vunpack.c.l.b16 %v446
    %v1820 = vunpack.c.h.b16 %v446
    %v1821 = vunpack.c.l.b16 %v447
    %v1822 = vunpack.c.h.b16 %v447
    %v1823 = vunpack.c.l.b16 %v448
    %v1824 = vunpack.c.h.b16 %v448
    %v1825 = vunpack.c.l.b16 %v449
    %v1826 = vunpack.c.h.b16 %v449
    %v1827 = vunpack.c.l.b16 %v450
    %v1828 = vunpack.c.h.b16 %v450
    %v1829 = vunpack.c.l.b16 %v451
    %v1830 = vunpack.c.h.b16 %v451
    %v1831 = vunpack.c.l.b16 %v452
    %v1832 = vunpack.c.h.b16 %v452
    %v1833 = vunpack.c.l.b16 %v453
    %v1834 = vunpack.c.h.b16 %v453
    %v1835 = vunpack.c.l.b16 %v454
    %v1836 = vunpack.c.h.b16 %v454
    %v1837 = vunpack.c.l.b16 %v455
    %v1838 = vunpack.c.h.b16 %v455
    %v1839 = vunpack.c.l.b16 %v456
    %v1840 = vunpack.c.h.b16 %v456
    %v1841 = vunpack.c.l.b16 %v457
    %v1842 = vunpack.c.h.b16 %v457
    %v1843 = vunpack.c.l.b16 %v458
    %v1844 = vunpack.c.h.b16 %v458
    %v1845 = vunpack.c.l.b16 %v459
    %v1846 = vunpack.c.h.b16 %v459
    %v1847 = vunpack.c.l.b16 %v460
    %v1848 = vunpack.c.h.b16 %v460
    %v1849 = vunpack.c.l.b16 %v461
    %v1850 = vunpack.c.h.b16 %v461
    %v1851 = vunpack.c.l.b16 %v462
    %v1852 = vunpack.c.h.b16 %v462
    %v1853 = vunpack.c.l.b16 %v463
    %v1854 = vunpack.c.h.b16 %v463
    %v1855 = vunpack.c.l.b16 %v464
    %v1856 = vunpack.c.h.b16 %v464
    %v1857 = vunpack.c.l.b16 %v465
    %v1858 = vunpack.c.h.b16 %v465
    %v1859 = vunpack.c.l.b16 %v466
    %v1860 = vunpack.c.h.b16 %v466
    %v1861 = vunpack.c.l.b16 %v467
    %v1862 = vunpack.c.h.b16 %v467
    %v1863 = vunpack.c.l.b16 %v468
    %v1864 = vunpack.c.h.b16 %v468
    %v1865 = vunpack.c.l.b16 %v469
    %v1866 = vunpack.c.h.b16 %v469
    %v1867 = vunpack.c.l.b16 %v470
    %v1868 = vunpack.c.h.b16 %v470
    %v1869 = vunpack.c.l.b16 %v471
    %v1870 = vunpack.c.h.b16 %v471
    %v1871 = vunpack.c.l.b16 %v472
    %v1872 = vunpack.c.h.b16 %v472
    %v1873 = vunpack.c.l.b16 %v473
    %v1874 = vunpack.c.h.b16 %v473
    %v1875 = vunpack.c.l.b16 %v474
    %v1876 = vunpack.c.h.b16 %v474
    %v1877 = vunpack.c.l.b16 %v475
    %v1878 = vunpack.c.h.b16 %v475
    %v1879 = vunpack.c.l.b16 %v476
    %v1880 = vunpack.c.h.b16 %v476
    %v1881 = vunpack.c.l.b16 %v477
    %v1882 = vunpack.c.h.b16 %v477
    %v1883 = vunpack.c.l.b16 %v478
    %v1884 = vunpack.c.h.b16 %v478
    %v1885 = vunpack.c.l.b16 %v479
    %v1886 = vunpack.c.h.b16 %v479
    %v1887 = vunpack.c.l.b16 %v480
    %v1888 = vunpack.c.h.b16 %v480
    %v1889 = vunpack.c.l.b16 %v481
    %v1890 = vunpack.c.h.b16 %v481
    %v1891 = vunpack.c.l.b16 %v482
    %v1892 = vunpack.c.h.b16 %v482
    %v1893 = vunpack.c.l.b16 %v483
    %v1894 = vunpack.c.h.b16 %v483
    %v1895 = vunpack.c.l.b16 %v484
    %v1896 = vunpack.c.h.b16 %v484
    %v1897 = vunpack.c.l.b16 %v485
    %v1898 = vunpack.c.h.b16 %v485
    %v1899 = vunpack.c.l.b16 %v486
    %v1900 = vunpack.c.h.b16 %v486
    %v1901 = vunpack.c.l.b16 %v487
    %v1902 = vunpack.c.h.b16 %v487
    %v1903 = vunpack.c.l.b16 %v488
    %v1904 = vunpack.c.h.b16 %v488
    %v1905 = vunpack.c.l.b16 %v489
    %v1906 = vunpack.c.h.b16 %v489
    %v1907 = vunpack.c.l.b16 %v490
    %v1908 = vunpack.c.h.b16 %v490
    %v1909 = vunpack.c.l.b16 %v491
    %v1910 = vunpack.c.h.b16 %v491
    %v1911 = vunpack.c.l.b16 %v492
    %v1912 = vunpack.c.h.b16 %v492
    %v1913 = vunpack.c.l.b16 %v493
    %v1914 = vunpack.c.h.b16 %v493
    %v1915 = vunpack.c.l.b16 %v494
    %v1916 = vunpack.c.h.b16 %v494
    %v1917 = vunpack.c.l.b16 %v495
    %v1918 = vunpack.c.h.b16 %v495
    %v1919 = vunpack.c.l.b16 %v496
    %v1920 = vunpack.c.h.b16 %v496
    %v1921 = vunpack.c.l.b16 %v497
    %v1922 = vunpack.c.h.b16 %v497
    %v1923 = vunpack.c.l.b16 %v498
    %v1924 = vunpack.c.h.b16 %v498
    %v1925 = vunpack.c.l.b16 %v499
    %v1926 = vunpack.c.h.b16 %v499
    %v1927 = vunpack.c.l.b16 %v500
    %v1928 = vunpack.c.h.b16 %v500
    %v1929 = vunpack.c.l.b16 %v501
    %v1930 = vunpack.c.h.b16 %v501
    %v1931 = vunpack.c.l.b16 %v502
    %v1932 = vunpack.c.h.b16 %v502
    %v1933 = vunpack.c.l.b16 %v503
    %v1934 = vunpack.c.h.b16 %v503
    %v1935 = vunpack.c.l.b16 %v504
    %v1936 = vunpack.c.h.b16 %v504
    %v1937 = vunpack.c.l.b16 %v505
    %v1938 = vunpack.c.h.b16 %v505
    %v1939 = vunpack.c.l.b16 %v506
    %v1940 = vunpack.c.h.b16 %v506
    %v1941 = vunpack.c.l.b16 %v507
    %v1942 = vunpack.c.h.b16 %v507
    %v1943 = vunpack.c.l.b16 %v508
    %v1944 = vunpack.c.h.b16 %v508
    %v1945 = vunpack.c.l.b16 %v509
    %v1946 = vunpack.c.h.b16 %v509
    %v1947 = vunpack.c.l.b16 %v510
    %v1948 = vunpack.c.h.b16 %v510
    %v1949 = vunpack.c.l.b16 %v511
    %v1950 = vunpack.c.h.b16 %v511
    %v1951 = vunpack.c.l.b16 %v512
    %v1952 = vunpack.c.h.b16 %v512
    %v1953 = vunpack.c.l.b16 %v513
    %v1954 = vunpack.c.h.b16 %v513
    %v1955 = vunpack.c.l.b16 %v514
    %v1956 = vunpack.c.h.b16 %v514
    %v1957 = vunpack.c.l.b16 %v515
    %v1958 = vunpack.c.h.b16 %v515
    %v1959 = vunpack.c.l.b16 %v516
    %v1960 = vunpack.c.h.b16 %v516
    %v1961 = vunpack.c.l.b16 %v517
    %v1962 = vunpack.c.h.b16 %v517
    %v1963 = vunpack.c.l.b16 %v518
    %v1964 = vunpack.c.h.b16 %v518
    %v1965 = vunpack.c.l.b16 %v519
    %v1966 = vunpack.c.h.b16 %v519
    %v1967 = vunpack.c.l.b16 %v520
    %v1968 = vunpack.c.h.b16 %v520
    %v1969 = vunpack.c.l.b16 %v521
    %v1970 = vunpack.c.h.b16 %v521
    %v1971 = vunpack.c.l.b16 %v522
    %v1972 = vunpack.c.h.b16 %v522
    %v1973 = vunpack.c.l.b16 %v523
    %v1974 = vunpack.c.h.b16 %v523
    %v1975 = vunpack.c.l.b16 %v524
    %v1976 = vunpack.c.h.b16 %v524
    %v1977 = vunpack.c.l.b16 %v525
    %v1978 = vunpack.c.h.b16 %v525
    %v1979 = vunpack.c.l.b16 %v526
    %v1980 = vunpack.c.h.b16 %v526
    %v1981 = vunpack.c.l.b16 %v527
    %v1982 = vunpack.c.h.b16 %v527
    %v1983 = vunpack.c.l.b16 %v528
    %v1984 = vunpack.c.h.b16 %v528
    %v1985 = vunpack.c.l.b16 %v529
    %v1986 = vunpack.c.h.b16 %v529
    %v1987 = vunpack.c.l.b16 %v530
    %v1988 = vunpack.c.h.b16 %v530
    %v1989 = vunpack.c.l.b16 %v531
    %v1990 = vunpack.c.h.b16 %v531
    %v1991 = vunpack.c.l.b16 %v532
    %v1992 = vunpack.c.h.b16 %v532
    %v1993 = vunpack.c.l.b16 %v533
    %v1994 = vunpack.c.h.b16 %v533
    %v1995 = vunpack.c.l.b16 %v534
    %v1996 = vunpack.c.h.b16 %v534
    %v1997 = vunpack.c.l.b16 %v535
    %v1998 = vunpack.c.h.b16 %v535
    %v1999 = vunpack.c.l.b16 %v536
    %v2000 = vunpack.c.h.b16 %v536
    %v2001 = vunpack.c.l.b16 %v537
    %v2002 = vunpack.c.h.b16 %v537
    %v2003 = vunpack.c.l.b16 %v538
    %v2004 = vunpack.c.h.b16 %v538
    %v2005 = vunpack.c.l.b16 %v539
    %v2006 = vunpack.c.h.b16 %v539
    %v2007 = vunpack.c.l.b16 %v540
    %v2008 = vunpack.c.h.b16 %v540
    %v2009 = vunpack.c.l.b16 %v541
    %v2010 = vunpack.c.h.b16 %v541
    %v2011 = vunpack.c.l.b16 %v542
    %v2012 = vunpack.c.h.b16 %v542
    %v2013 = vunpack.c.l.b16 %v543
    %v2014 = vunpack.c.h.b16 %v543
    %v2015 = vunpack.c.l.b16 %v544
    %v2016 = vunpack.c.h.b16 %v544
    %v2017 = vunpack.c.l.b16 %v545
    %v2018 = vunpack.c.h.b16 %v545
    %v2019 = vunpack.c.l.b16 %v546
    %v2020 = vunpack.c.h.b16 %v546
    %v2021 = vunpack.c.l.b16 %v547
    %v2022 = vunpack.c.h.b16 %v547
    %v2023 = vunpack.c.l.b16 %v548
    %v2024 = vunpack.c.h.b16 %v548
    %v2025 = vunpack.c.l.b16 %v549
    %v2026 = vunpack.c.h.b16 %v549
    %v2027 = vunpack.c.l.b16 %v550
    %v2028 = vunpack.c.h.b16 %v550
    %v2029 = vunpack.c.l.b16 %v551
    %v2030 = vunpack.c.h.b16 %v551
    %v2031 = vunpack.c.l.b16 %v552
    %v2032 = vunpack.c.h.b16 %v552
    %v2033 = vunpack.c.l.b16 %v553
    %v2034 = vunpack.c.h.b16 %v553
    %v2035 = vunpack.c.l.b16 %v554
    %v2036 = vunpack.c.h.b16 %v554
    %v2037 = vunpack.c.l.b16 %v555
    %v2038 = vunpack.c.h.b16 %v555
    %v2039 = vunpack.c.l.b16 %v556
    %v2040 = vunpack.c.h.b16 %v556
    %v2041 = vunpack.c.l.b16 %v557
    %v2042 = vunpack.c.h.b16 %v557
    %v2043 = vunpack.c.l.b16 %v558
    %v2044 = vunpack.c.h.b16 %v558
    %v2045 = vunpack.c.l.b16 %v559
    %v2046 = vunpack.c.h.b16 %v559
    %v2047 = vunpack.c.l.b16 %v560
    %v2048 = vunpack.c.h.b16 %v560
    %v2049 = vunpack.c.l.b16 %v561
    %v2050 = vunpack.c.h.b16 %v561
    %v2051 = vunpack.c.l.b16 %v562
    %v2052 = vunpack.c.h.b16 %v562
    %v2053 = vunpack.c.l.b16 %v563
    %v2054 = vunpack.c.h.b16 %v563
    %v2055 = vunpack.c.l.b16 %v564
    %v2056 = vunpack.c.h.b16 %v564
    %v2057 = vunpack.c.l.b16 %v565
    %v2058 = vunpack.c.h.b16 %v565
    %v2059 = vunpack.c.l.b16 %v566
    %v2060 = vunpack.c.h.b16 %v566
    %v2061 = vunpack.c.l.b16 %v567
    %v2062 = vunpack.c.h.b16 %v567
    %v2063 = vunpack.c.l.b16 %v568
    %v2064 = vunpack.c.h.b16 %v568
    %v2065 = vunpack.c.l.b16 %v569
    %v2066 = vunpack.c.h.b16 %v569
    %v2067 = vunpack.c.l.b16 %v570
    %v2068 = vunpack.c.h.b16 %v570
    %v2069 = vunpack.c.l.b16 %v571
    %v2070 = vunpack.c.h.b16 %v571
    %v2071 = vunpack.c.l.b16 %v572
    %v2072 = vunpack.c.h.b16 %v572
    %v2073 = vunpack.c.l.b16 %v573
    %v2074 = vunpack.c.h.b16 %v573
    %v2075 = vunpack.c.l.b16 %v574
    %v2076 = vunpack.c.h.b16 %v574
    %v2077 = vunpack.c.l.b16 %v575
    %v2078 = vunpack.c.h.b16 %v575
    %v2079 = vunpack.c.l.b16 %v576
    %v2080 = vunpack.c.h.b16 %v576
    %v2081 = vunpack.c.l.b16 %v577
    %v2082 = vunpack.c.h.b16 %v577
    %v2083 = vunpack.c.l.b16 %v578
    %v2084 = vunpack.c.h.b16 %v578
    %v2085 = vunpack.c.l.b16 %v579
    %v2086 = vunpack.c.h.b16 %v579
    %v2087 = vunpack.c.l.b16 %v580
    %v2088 = vunpack.c.h.b16 %v580
    %v2089 = vunpack.c.l.b16 %v581
    %v2090 = vunpack.c.h.b16 %v581
    %v2091 = vunpack.c.l.b16 %v582
    %v2092 = vunpack.c.h.b16 %v582
    %v2093 = vunpack.c.l.b16 %v583
    %v2094 = vunpack.c.h.b16 %v583
    %v2095 = vunpack.c.l.b16 %v584
    %v2096 = vunpack.c.h.b16 %v584
    %v2097 = vunpack.c.l.b16 %v585
    %v2098 = vunpack.c.h.b16 %v585
    %v2099 = vunpack.c.l.b16 %v586
    %v2100 = vunpack.c.h.b16 %v586
    %v2101 = vunpack.c.l.b16 %v587
    %v2102 = vunpack.c.h.b16 %v587
    %v2103 = vunpack.c.l.b16 %v588
    %v2104 = vunpack.c.h.b16 %v588
    %v2105 = vunpack.c.l.b16 %v589
    %v2106 = vunpack.c.h.b16 %v589
    %v2107 = vunpack.c.l.b16 %v590
    %v2108 = vunpack.c.h.b16 %v590
    %v2109 = vunpack.c.l.b16 %v591
    %v2110 = vunpack.c.h.b16 %v591
    %v2111 = vunpack.c.l.b16 %v592
    %v2112 = vunpack.c.h.b16 %v592
    %v2113 = vunpack.c.l.b16 %v593
    %v2114 = vunpack.c.h.b16 %v593
    %v2115 = vunpack.c.l.b16 %v594
    %v2116 = vunpack.c.h.b16 %v594
    %v2117 = vunpack.c.l.b16 %v595
    %v2118 = vunpack.c.h.b16 %v595
    %v2119 = vunpack.c.l.b16 %v596
    %v2120 = vunpack.c.h.b16 %v596
    %v2121 = vunpack.c.l.b16 %v597
    %v2122 = vunpack.c.h.b16 %v597
    %v2123 = vunpack.c.l.b16 %v598
    %v2124 = vunpack.c.h.b16 %v598
    %v2125 = vunpack.c.l.b16 %v599
    %v2126 = vunpack.c.h.b16 %v599
    %v2127 = vunpack.c.l.b16 %v600
    %v2128 = vunpack.c.h.b16 %v600
    %v2129 = vunpack.c.l.b16 %v601
    %v2130 = vunpack.c.h.b16 %v601
    %v2131 = vunpack.c.l.b16 %v602
    %v2132 = vunpack.c.h.b16 %v602
    %v2133 = vunpack.c.l.b16 %v603
    %v2134 = vunpack.c.h.b16 %v603
    %v2135 = vunpack.c.l.b16 %v604
    %v2136 = vunpack.c.h.b16 %v604
    %v2137 = vunpack.c.l.b16 %v605
    %v2138 = vunpack.c.h.b16 %v605
    %v2139 = vunpack.c.l.b16 %v606
    %v2140 = vunpack.c.h.b16 %v606
    %v2141 = vunpack.c.l.b16 %v607
    %v2142 = vunpack.c.h.b16 %v607
    %v2143 = vunpack.c.l.b16 %v608
    %v2144 = vunpack.c.h.b16 %v608
    %v2145 = vpack.c.b16 %v1129, %v1121
    %v2146 = vpack.c.b16 %v1130, %v1122
    %v2147 = vpack.c.b16 %v1131, %v1123
    %v2148 = vpack.c.b16 %v1132, %v1124
    %v2149 = vpack.c.b16 %v1133, %v1125
    %v2150 = vpack.c.b16 %v1134, %v1126
    %v2151 = vpack.c.b16 %v1135, %v1127
    %v2152 = vpack.c.b16 %v1136, %v1128
    %v2153 = vpack.c.b16 %v1145, %v1137
    %v2154 = vpack.c.b16 %v1146, %v1138
    %v2155 = vpack.c.b16 %v1147, %v1139
    %v2156 = vpack.c.b16 %v1148, %v1140
    %v2157 = vpack.c.b16 %v1149, %v1141
    %v2158 = vpack.c.b16 %v1150, %v1142
    %v2159 = vpack.c.b16 %v1151, %v1143
    %v2160 = vpack.c.b16 %v1152, %v1144
    %v2161 = vpack.c.b16 %v1161, %v1153
    %v2162 = vpack.c.b16 %v1162, %v1154
    %v2163 = vpack.c.b16 %v1163, %v1155
    %v2164 = vpack.c.b16 %v1164, %v1156
    %v2165 = vpack.c.b16 %v1165, %v1157
    %v2166 = vpack.c.b16 %v1166, %v1158
    %v2167 = vpack.c.b16 %v1167, %v1159
    %v2168 = vpack.c.b16 %v1168, %v1160
    %v2169 = vpack.c.b16 %v1177, %v1169
    %v2170 = vpack.c.b16 %v1178, %v1170
    %v2171 = vpack.c.b16 %v1179, %v1171
    %v2172 = vpack.c.b16 %v1180, %v1172
    %v2173 = vpack.c.b16 %v1181, %v1173
    %v2174 = vpack.c.b16 %v1182, %v1174
    %v2175 = vpack.c.b16 %v1183, %v1175
    %v2176 = vpack.c.b16 %v1184, %v1176
    %v2177 = vpack.c.b16 %v1193, %v1185
    %v2178 = vpack.c.b16 %v1194, %v1186
    %v2179 = vpack.c.b16 %v1195, %v1187
    %v2180 = vpack.c.b16 %v1196, %v1188
    %v2181 = vpack.c.b16 %v1197, %v1189
    %v2182 = vpack.c.b16 %v1198, %v1190
    %v2183 = vpack.c.b16 %v1199, %v1191
    %v2184 = vpack.c.b16 %v1200, %v1192
    %v2185 = vpack.c.b16 %v1209, %v1201
    %v2186 = vpack.c.b16 %v1210, %v1202
    %v2187 = vpack.c.b16 %v1211, %v1203
    %v2188 = vpack.c.b16 %v1212, %v1204
    %v2189 = vpack.c.b16 %v1213, %v1205
    %v2190 = vpack.c.b16 %v1214, %v1206
    %v2191 = vpack.c.b16 %v1215, %v1207
    %v2192 = vpack.c.b16 %v1216, %v1208
    %v2193 = vpack.c.b16 %v1225, %v1217
    %v2194 = vpack.c.b16 %v1226, %v1218
    %v2195 = vpack.c.b16 %v1227, %v1219
    %v2196 = vpack.c.b16 %v1228, %v1220
    %v2197 = vpack.c.b16 %v1229, %v1221
    %v2198 = vpack.c.b16 %v1230, %v1222
    %v2199 = vpack.c.b16 %v1231, %v1223
    %v2200 = vpack.c.b16 %v1232, %v1224
    %v2201 = vpack.c.b16 %v1241, %v1233
    %v2202 = vpack.c.b16 %v1242, %v1234
    %v2203 = vpack.c.b16 %v1243, %v1235
    %v2204 = vpack.c.b16 %v1244, %v1236
    %v2205 = vpack.c.b16 %v1245, %v1237
    %v2206 = vpack.c.b16 %v1246, %v1238
    %v2207 = vpack.c.b16 %v1247, %v1239
    %v2208 = vpack.c.b16 %v1248, %v1240
    %v2209 = vpack.c.b16 %v1257, %v1249
    %v2210 = vpack.c.b16 %v1258, %v1250
    %v2211 = vpack.c.b16 %v1259, %v1251
    %v2212 = vpack.c.b16 %v1260, %v1252
    %v2213 = vpack.c.b16 %v1261, %v1253
    %v2214 = vpack.c.b16 %v1262, %v1254
    %v2215 = vpack.c.b16 %v1263, %v1255
    %v2216 = vpack.c.b16 %v1264, %v1256
    %v2217 = vpack.c.b16 %v1273, %v1265
    %v2218 = vpack.c.b16 %v1274, %v1266
    %v2219 = vpack.c.b16 %v1275, %v1267
    %v2220 = vpack.c.b16 %v1276, %v1268
    %v2221 = vpack.c.b16 %v1277, %v1269
    %v2222 = vpack.c.b16 %v1278, %v1270
    %v2223 = vpack.c.b16 %v1279, %v1271
    %v2224 = vpack.c.b16 %v1280, %v1272
    %v2225 = vpack.c.b16 %v1289, %v1281
    %v2226 = vpack.c.b16 %v1290, %v1282
    %v2227 = vpack.c.b16 %v1291, %v1283
    %v2228 = vpack.c.b16 %v1292, %v1284
    %v2229 = vpack.c.b16 %v1293, %v1285
    %v2230 = vpack.c.b16 %v1294, %v1286
    %v2231 = vpack.c.b16 %v1295, %v1287
    %v2232 = vpack.c.b16 %v1296, %v1288
    %v2233 = vpack.c.b16 %v1305, %v1297
    %v2234 = vpack.c.b16 %v1306, %v1298
    %v2235 = vpack.c.b16 %v1307, %v1299
    %v2236 = vpack.c.b16 %v1308, %v1300
    %v2237 = vpack.c.b16 %v1309, %v1301
    %v2238 = vpack.c.b16 %v1310, %v1302
    %v2239 = vpack.c.b16 %v1311, %v1303
    %v2240 = vpack.c.b16 %v1312, %v1304
    %v2241 = vpack.c.b16 %v1321, %v1313
    %v2242 = vpack.c.b16 %v1322, %v1314
    %v2243 = vpack.c.b16 %v1323, %v1315
    %v2244 = vpack.c.b16 %v1324, %v1316
    %v2245 = vpack.c.b16 %v1325, %v1317
    %v2246 = vpack.c.b16 %v1326, %v1318
    %v2247 = vpack.c.b16 %v1327, %v1319
    %v2248 = vpack.c.b16 %v1328, %v1320
    %v2249 = vpack.c.b16 %v1337, %v1329
    %v2250 = vpack.c.b16 %v1338, %v1330
    %v2251 = vpack.c.b16 %v1339, %v1331
    %v2252 = vpack.c.b16 %v1340, %v1332
    %v2253 = vpack.c.b16 %v1341, %v1333
    %v2254 = vpack.c.b16 %v1342, %v1334
    %v2255 = vpack.c.b16 %v1343, %v1335
    %v2256 = vpack.c.b16 %v1344, %v1336
    %v2257 = vpack.c.b16 %v1353, %v1345
    %v2258 = vpack.c.b16 %v1354, %v1346
    %v2259 = vpack.c.b16 %v1355, %v1347
    %v2260 = vpack.c.b16 %v1356, %v1348
    %v2261 = vpack.c.b16 %v1357, %v1349
    %v2262 = vpack.c.b16 %v1358, %v1350
    %v2263 = vpack.c.b16 %v1359, %v1351
    %v2264 = vpack.c.b16 %v1360, %v1352
    %v2265 = vpack.c.b16 %v1369, %v1361
    %v2266 = vpack.c.b16 %v1370, %v1362
    %v2267 = vpack.c.b16 %v1371, %v1363
    %v2268 = vpack.c.b16 %v1372, %v1364
    %v2269 = vpack.c.b16 %v1373, %v1365
    %v2270 = vpack.c.b16 %v1374, %v1366
    %v2271 = vpack.c.b16 %v1375, %v1367
    %v2272 = vpack.c.b16 %v1376, %v1368
    %v2273 = vpack.c.b16 %v1385, %v1377
    %v2274 = vpack.c.b16 %v1386, %v1378
    %v2275 = vpack.c.b16 %v1387, %v1379
    %v2276 = vpack.c.b16 %v1388, %v1380
    %v2277 = vpack.c.b16 %v1389, %v1381
    %v2278 = vpack.c.b16 %v1390, %v1382
    %v2279 = vpack.c.b16 %v1391, %v1383
    %v2280 = vpack.c.b16 %v1392, %v1384
    %v2281 = vpack.c.b16 %v1401, %v1393
    %v2282 = vpack.c.b16 %v1402, %v1394
    %v2283 = vpack.c.b16 %v1403, %v1395
    %v2284 = vpack.c.b16 %v1404, %v1396
    %v2285 = vpack.c.b16 %v1405, %v1397
    %v2286 = vpack.c.b16 %v1406, %v1398
    %v2287 = vpack.c.b16 %v1407, %v1399
    %v2288 = vpack.c.b16 %v1408, %v1400
    %v2289 = vpack.c.b16 %v1417, %v1409
    %v2290 = vpack.c.b16 %v1418, %v1410
    %v2291 = vpack.c.b16 %v1419, %v1411
    %v2292 = vpack.c.b16 %v1420, %v1412
    %v2293 = vpack.c.b16 %v1421, %v1413
    %v2294 = vpack.c.b16 %v1422, %v1414
    %v2295 = vpack.c.b16 %v1423, %v1415
    %v2296 = vpack.c.b16 %v1424, %v1416
    %v2297 = vpack.c.b16 %v1433, %v1425
    %v2298 = vpack.c.b16 %v1434, %v1426
    %v2299 = vpack.c.b16 %v1435, %v1427
    %v2300 = vpack.c.b16 %v1436, %v1428
    %v2301 = vpack.c.b16 %v1437, %v1429
    %v2302 = vpack.c.b16 %v1438, %v1430
    %v2303 = vpack.c.b16 %v1439, %v1431
    %v2304 = vpack.c.b16 %v1440, %v1432
    %v2305 = vpack.c.b16 %v1449, %v1441
    %v2306 = vpack.c.b16 %v1450, %v1442
    %v2307 = vpack.c.b16 %v1451, %v1443
    %v2308 = vpack.c.b16 %v1452, %v1444
    %v2309 = vpack.c.b16 %v1453, %v1445
    %v2310 = vpack.c.b16 %v1454, %v1446
    %v2311 = vpack.c.b16 %v1455, %v1447
    %v2312 = vpack.c.b16 %v1456, %v1448
    %v2313 = vpack.c.b16 %v1465, %v1457
    %v2314 = vpack.c.b16 %v1466, %v1458
    %v2315 = vpack.c.b16 %v1467, %v1459
    %v2316 = vpack.c.b16 %v1468, %v1460
    %v2317 = vpack.c.b16 %v1469, %v1461
    %v2318 = vpack.c.b16 %v1470, %v1462
    %v2319 = vpack.c.b16 %v1471, %v1463
    %v2320 = vpack.c.b16 %v1472, %v1464
    %v2321 = vpack.c.b16 %v1481, %v1473
    %v2322 = vpack.c.b16 %v1482, %v1474
    %v2323 = vpack.c.b16 %v1483, %v1475
    %v2324 = vpack.c.b16 %v1484, %v1476
    %v2325 = vpack.c.b16 %v1485, %v1477
    %v2326 = vpack.c.b16 %v1486, %v1478
    %v2327 = vpack.c.b16 %v1487, %v1479
    %v2328 = vpack.c.b16 %v1488, %v1480
    %v2329 = vpack.c.b16 %v1497, %v1489
    %v2330 = vpack.c.b16 %v1498, %v1490
    %v2331 = vpack.c.b16 %v1499, %v1491
    %v2332 = vpack.c.b16 %v1500, %v1492
    %v2333 = vpack.c.b16 %v1501, %v1493
    %v2334 = vpack.c.b16 %v1502, %v1494
    %v2335 = vpack.c.b16 %v1503, %v1495
    %v2336 = vpack.c.b16 %v1504, %v1496
    %v2337 = vpack.c.b16 %v1513, %v1505
    %v2338 = vpack.c.b16 %v1514, %v1506
    %v2339 = vpack.c.b16 %v1515, %v1507
    %v2340 = vpack.c.b16 %v1516, %v1508
    %v2341 = vpack.c.b16 %v1517, %v1509
    %v2342 = vpack.c.b16 %v1518, %v1510
    %v2343 = vpack.c.b16 %v1519, %v1511
    %v2344 = vpack.c.b16 %v1520, %v1512
    %v2345 = vpack.c.b16 %v1529, %v1521
    %v2346 = vpack.c.b16 %v1530, %v1522
    %v2347 = vpack.c.b16 %v1531, %v1523
    %v2348 = vpack.c.b16 %v1532, %v1524
    %v2349 = vpack.c.b16 %v1533, %v1525
    %v2350 = vpack.c.b16 %v1534, %v1526
    %v2351 = vpack.c.b16 %v1535, %v1527
    %v2352 = vpack.c.b16 %v1536, %v1528
    %v2353 = vpack.c.b16 %v1545, %v1537
    %v2354 = vpack.c.b16 %v1546, %v1538
    %v2355 = vpack.c.b16 %v1547, %v1539
    %v2356 = vpack.c.b16 %v1548, %v1540
    %v2357 = vpack.c.b16 %v1549, %v1541
    %v2358 = vpack.c.b16 %v1550, %v1542
    %v2359 = vpack.c.b16 %v1551, %v1543
    %v2360 = vpack.c.b16 %v1552, %v1544
    %v2361 = vpack.c.b16 %v1561, %v1553
    %v2362 = vpack.c.b16 %v1562, %v1554
    %v2363 = vpack.c.b16 %v1563, %v1555
    %v2364 = vpack.c.b16 %v1564, %v1556
    %v2365 = vpack.c.b16 %v1565, %v1557
    %v2366 = vpack.c.b16 %v1566, %v1558
    %v2367 = vpack.c.b16 %v1567, %v1559
    %v2368 = vpack.c.b16 %v1568, %v1560
    %v2369 = vpack.c.b16 %v1577, %v1569
    %v2370 = vpack.c.b16 %v1578, %v1570
    %v2371 = vpack.c.b16 %v1579, %v1571
    %v2372 = vpack.c.b16 %v1580, %v1572
    %v2373 = vpack.c.b16 %v1581, %v1573
    %v2374 = vpack.c.b16 %v1582, %v1574
    %v2375 = vpack.c.b16 %v1583, %v1575
    %v2376 = vpack.c.b16 %v1584, %v1576
    %v2377 = vpack.c.b16 %v1593, %v1585
    %v2378 = vpack.c.b16 %v1594, %v1586
    %v2379 = vpack.c.b16 %v1595, %v1587
    %v2380 = vpack.c.b16 %v1596, %v1588
    %v2381 = vpack.c.b16 %v1597, %v1589
    %v2382 = vpack.c.b16 %v1598, %v1590
    %v2383 = vpack.c.b16 %v1599, %v1591
    %v2384 = vpack.c.b16 %v1600, %v1592
    %v2385 = vpack.c.b16 %v1609, %v1601
    %v2386 = vpack.c.b16 %v1610, %v1602
    %v2387 = vpack.c.b16 %v1611, %v1603
    %v2388 = vpack.c.b16 %v1612, %v1604
    %v2389 = vpack.c.b16 %v1613, %v1605
    %v2390 = vpack.c.b16 %v1614, %v1606
    %v2391 = vpack.c.b16 %v1615, %v1607
    %v2392 = vpack.c.b16 %v1616, %v1608
    %v2393 = vpack.c.b16 %v1625, %v1617
    %v2394 = vpack.c.b16 %v1626, %v1618
    %v2395 = vpack.c.b16 %v1627, %v1619
    %v2396 = vpack.c.b16 %v1628, %v1620
    %v2397 = vpack.c.b16 %v1629, %v1621
    %v2398 = vpack.c.b16 %v1630, %v1622
    %v2399 = vpack.c.b16 %v1631, %v1623
    %v2400 = vpack.c.b16 %v1632, %v1624
    %v2401 = vpack.c.b16 %v1641, %v1633
    %v2402 = vpack.c.b16 %v1642, %v1634
    %v2403 = vpack.c.b16 %v1643, %v1635
    %v2404 = vpack.c.b16 %v1644, %v1636
    %v2405 = vpack.c.b16 %v1645, %v1637
    %v2406 = vpack.c.b16 %v1646, %v1638
    %v2407 = vpack.c.b16 %v1647, %v1639
    %v2408 = vpack.c.b16 %v1648, %v1640
    %v2409 = vpack.c.b16 %v1657, %v1649
    %v2410 = vpack.c.b16 %v1658, %v1650
    %v2411 = vpack.c.b16 %v1659, %v1651
    %v2412 = vpack.c.b16 %v1660, %v1652
    %v2413 = vpack.c.b16 %v1661, %v1653
    %v2414 = vpack.c.b16 %v1662, %v1654
    %v2415 = vpack.c.b16 %v1663, %v1655
    %v2416 = vpack.c.b16 %v1664, %v1656
    %v2417 = vpack.c.b16 %v1673, %v1665
    %v2418 = vpack.c.b16 %v1674, %v1666
    %v2419 = vpack.c.b16 %v1675, %v1667
    %v2420 = vpack.c.b16 %v1676, %v1668
    %v2421 = vpack.c.b16 %v1677, %v1669
    %v2422 = vpack.c.b16 %v1678, %v1670
    %v2423 = vpack.c.b16 %v1679, %v1671
    %v2424 = vpack.c.b16 %v1680, %v1672
    %v2425 = vpack.c.b16 %v1689, %v1681
    %v2426 = vpack.c.b16 %v1690, %v1682
    %v2427 = vpack.c.b16 %v1691, %v1683
    %v2428 = vpack.c.b16 %v1692, %v1684
    %v2429 = vpack.c.b16 %v1693, %v1685
    %v2430 = vpack.c.b16 %v1694, %v1686
    %v2431 = vpack.c.b16 %v1695, %v1687
    %v2432 = vpack.c.b16 %v1696, %v1688
    %v2433 = vpack.c.b16 %v1705, %v1697
    %v2434 = vpack.c.b16 %v1706, %v1698
    %v2435 = vpack.c.b16 %v1707, %v1699
    %v2436 = vpack.c.b16 %v1708, %v1700
    %v2437 = vpack.c.b16 %v1709, %v1701
    %v2438 = vpack.c.b16 %v1710, %v1702
    %v2439 = vpack.c.b16 %v1711, %v1703
    %v2440 = vpack.c.b16 %v1712, %v1704
    %v2441 = vpack.c.b16 %v1721, %v1713
    %v2442 = vpack.c.b16 %v1722, %v1714
    %v2443 = vpack.c.b16 %v1723, %v1715
    %v2444 = vpack.c.b16 %v1724, %v1716
    %v2445 = vpack.c.b16 %v1725, %v1717
    %v2446 = vpack.c.b16 %v1726, %v1718
    %v2447 = vpack.c.b16 %v1727, %v1719
    %v2448 = vpack.c.b16 %v1728, %v1720
    %v2449 = vpack.c.b16 %v1737, %v1729
    %v2450 = vpack.c.b16 %v1738, %v1730
    %v2451 = vpack.c.b16 %v1739, %v1731
    %v2452 = vpack.c.b16 %v1740, %v1732
    %v2453 = vpack.c.b16 %v1741, %v1733
    %v2454 = vpack.c.b16 %v1742, %v1734
    %v2455 = vpack.c.b16 %v1743, %v1735
    %v2456 = vpack.c.b16 %v1744, %v1736
    %v2457 = vpack.c.b16 %v1753, %v1745
    %v2458 = vpack.c.b16 %v1754, %v1746
    %v2459 = vpack.c.b16 %v1755, %v1747
    %v2460 = vpack.c.b16 %v1756, %v1748
    %v2461 = vpack.c.b16 %v1757, %v1749
    %v2462 = vpack.c.b16 %v1758, %v1750
    %v2463 = vpack.c.b16 %v1759, %v1751
    %v2464 = vpack.c.b16 %v1760, %v1752
    %v2465 = vpack.c.b16 %v1769, %v1761
    %v2466 = vpack.c.b16 %v1770, %v1762
    %v2467 = vpack.c.b16 %v1771, %v1763
    %v2468 = vpack.c.b16 %v1772, %v1764
    %v2469 = vpack.c.b16 %v1773, %v1765
    %v2470 = vpack.c.b16 %v1774, %v1766
    %v2471 = vpack.c.b16 %v1775, %v1767
    %v2472 = vpack.c.b16 %v1776, %v1768
    %v2473 = vpack.c.b16 %v1785, %v1777
    %v2474 = vpack.c.b16 %v1786, %v1778
    %v2475 = vpack.c.b16 %v1787, %v1779
    %v2476 = vpack.c.b16 %v1788, %v1780
    %v2477 = vpack.c.b16 %v1789, %v1781
    %v2478 = vpack.c.b16 %v1790, %v1782
    %v2479 = vpack.c.b16 %v1791, %v1783
    %v2480 = vpack.c.b16 %v1792, %v1784
    %v2481 = vpack.c.b16 %v1801, %v1793
    %v2482 = vpack.c.b16 %v1802, %v1794
    %v2483 = vpack.c.b16 %v1803, %v1795
    %v2484 = vpack.c.b16 %v1804, %v1796
    %v2485 = vpack.c.b16 %v1805, %v1797
    %v2486 = vpack.c.b16 %v1806, %v1798
    %v2487 = vpack.c.b16 %v1807, %v1799
    %v2488 = vpack.c.b16 %v1808, %v1800
    %v2489 = vpack.c.b16 %v1817, %v1809
    %v2490 = vpack.c.b16 %v1818, %v1810
    %v2491 = vpack.c.b16 %v1819, %v1811
    %v2492 = vpack.c.b16 %v1820, %v1812
    %v2493 = vpack.c.b16 %v1821, %v1813
    %v2494 = vpack.c.b16 %v1822, %v1814
    %v2495 = vpack.c.b16 %v1823, %v1815
    %v2496 = vpack.c.b16 %v1824, %v1816
    %v2497 = vpack.c.b16 %v1833, %v1825
    %v2498 = vpack.c.b16 %v1834, %v1826
    %v2499 = vpack.c.b16 %v1835, %v1827
    %v2500 = vpack.c.b16 %v1836, %v1828
    %v2501 = vpack.c.b16 %v1837, %v1829
    %v2502 = vpack.c.b16 %v1838, %v1830
    %v2503 = vpack.c.b16 %v1839, %v1831
    %v2504 = vpack.c.b16 %v1840, %v1832
    %v2505 = vpack.c.b16 %v1849, %v1841
    %v2506 = vpack.c.b16 %v1850, %v1842
    %v2507 = vpack.c.b16 %v1851, %v1843
    %v2508 = vpack.c.b16 %v1852, %v1844
    %v2509 = vpack.c.b16 %v1853, %v1845
    %v2510 = vpack.c.b16 %v1854, %v1846
    %v2511 = vpack.c.b16 %v1855, %v1847
    %v2512 = vpack.c.b16 %v1856, %v1848
    %v2513 = vpack.c.b16 %v1865, %v1857
    %v2514 = vpack.c.b16 %v1866, %v1858
    %v2515 = vpack.c.b16 %v1867, %v1859
    %v2516 = vpack.c.b16 %v1868, %v1860
    %v2517 = vpack.c.b16 %v1869, %v1861
    %v2518 = vpack.c.b16 %v1870, %v1862
    %v2519 = vpack.c.b16 %v1871, %v1863
    %v2520 = vpack.c.b16 %v1872, %v1864
    %v2521 = vpack.c.b16 %v1881, %v1873
    %v2522 = vpack.c.b16 %v1882, %v1874
    %v2523 = vpack.c.b16 %v1883, %v1875
    %v2524 = vpack.c.b16 %v1884, %v1876
    %v2525 = vpack.c.b16 %v1885, %v1877
    %v2526 = vpack.c.b16 %v1886, %v1878
    %v2527 = vpack.c.b16 %v1887, %v1879
    %v2528 = vpack.c.b16 %v1888, %v1880
    %v2529 = vpack.c.b16 %v1897, %v1889
    %v2530 = vpack.c.b16 %v1898, %v1890
    %v2531 = vpack.c.b16 %v1899, %v1891
    %v2532 = vpack.c.b16 %v1900, %v1892
    %v2533 = vpack.c.b16 %v1901, %v1893
    %v2534 = vpack.c.b16 %v1902, %v1894
    %v2535 = vpack.c.b16 %v1903, %v1895
    %v2536 = vpack.c.b16 %v1904, %v1896
    %v2537 = vpack.c.b16 %v1913, %v1905
    %v2538 = vpack.c.b16 %v1914, %v1906
    %v2539 = vpack.c.b16 %v1915, %v1907
    %v2540 = vpack.c.b16 %v1916, %v1908
    %v2541 = vpack.c.b16 %v1917, %v1909
    %v2542 = vpack.c.b16 %v1918, %v1910
    %v2543 = vpack.c.b16 %v1919, %v1911
    %v2544 = vpack.c.b16 %v1920, %v1912
    %v2545 = vpack.c.b16 %v1929, %v1921
    %v2546 = vpack.c.b16 %v1930, %v1922
    %v2547 = vpack.c.b16 %v1931, %v1923
    %v2548 = vpack.c.b16 %v1932, %v1924
    %v2549 = vpack.c.b16 %v1933, %v1925
    %v2550 = vpack.c.b16 %v1934, %v1926
    %v2551 = vpack.c.b16 %v1935, %v1927
    %v2552 = vpack.c.b16 %v1936, %v1928
    %v2553 = vpack.c.b16 %v1945, %v1937
    %v2554 = vpack.c.b16 %v1946, %v1938
    %v2555 = vpack.c.b16 %v1947, %v1939
    %v2556 = vpack.c.b16 %v1948, %v1940
    %v2557 = vpack.c.b16 %v1949, %v1941
    %v2558 = vpack.c.b16 %v1950, %v1942
    %v2559 = vpack.c.b16 %v1951, %v1943
    %v2560 = vpack.c.b16 %v1952, %v1944
    %v2561 = vpack.c.b16 %v1961, %v1953
    %v2562 = vpack.c.b16 %v1962, %v1954
    %v2563 = vpack.c.b16 %v1963, %v1955
    %v2564 = vpack.c.b16 %v1964, %v1956
    %v2565 = vpack.c.b16 %v1965, %v1957
    %v2566 = vpack.c.b16 %v1966, %v1958
    %v2567 = vpack.c.b16 %v1967, %v1959
    %v2568 = vpack.c.b16 %v1968, %v1960
    %v2569 = vpack.c.b16 %v1977, %v1969
    %v2570 = vpack.c.b16 %v1978, %v1970
    %v2571 = vpack.c.b16 %v1979, %v1971
    %v2572 = vpack.c.b16 %v1980, %v1972
    %v2573 = vpack.c.b16 %v1981, %v1973
    %v2574 = vpack.c.b16 %v1982, %v1974
    %v2575 = vpack.c.b16 %v1983, %v1975
    %v2576 = vpack.c.b16 %v1984, %v1976
    %v2577 = vpack.c.b16 %v1993, %v1985
    %v2578 = vpack.c.b16 %v1994, %v1986
    %v2579 = vpack.c.b16 %v1995, %v1987
    %v2580 = vpack.c.b16 %v1996, %v1988
    %v2581 = vpack.c.b16 %v1997, %v1989
    %v2582 = vpack.c.b16 %v1998, %v1990
    %v2583 = vpack.c.b16 %v1999, %v1991
    %v2584 = vpack.c.b16 %v2000, %v1992
    %v2585 = vpack.c.b16 %v2009, %v2001
    %v2586 = vpack.c.b16 %v2010, %v2002
    %v2587 = vpack.c.b16 %v2011, %v2003
    %v2588 = vpack.c.b16 %v2012, %v2004
    %v2589 = vpack.c.b16 %v2013, %v2005
    %v2590 = vpack.c.b16 %v2014, %v2006
    %v2591 = vpack.c.b16 %v2015, %v2007
    %v2592 = vpack.c.b16 %v2016, %v2008
    %v2593 = vpack.c.b16 %v2025, %v2017
    %v2594 = vpack.c.b16 %v2026, %v2018
    %v2595 = vpack.c.b16 %v2027, %v2019
    %v2596 = vpack.c.b16 %v2028, %v2020
    %v2597 = vpack.c.b16 %v2029, %v2021
    %v2598 = vpack.c.b16 %v2030, %v2022
    %v2599 = vpack.c.b16 %v2031, %v2023
    %v2600 = vpack.c.b16 %v2032, %v2024
    %v2601 = vpack.c.b16 %v2041, %v2033
    %v2602 = vpack.c.b16 %v2042, %v2034
    %v2603 = vpack.c.b16 %v2043, %v2035
    %v2604 = vpack.c.b16 %v2044, %v2036
    %v2605 = vpack.c.b16 %v2045, %v2037
    %v2606 = vpack.c.b16 %v2046, %v2038
    %v2607 = vpack.c.b16 %v2047, %v2039
    %v2608 = vpack.c.b16 %v2048, %v2040
    %v2609 = vpack.c.b16 %v2057, %v2049
    %v2610 = vpack.c.b16 %v2058, %v2050
    %v2611 = vpack.c.b16 %v2059, %v2051
    %v2612 = vpack.c.b16 %v2060, %v2052
    %v2613 = vpack.c.b16 %v2061, %v2053
    %v2614 = vpack.c.b16 %v2062, %v2054
    %v2615 = vpack.c.b16 %v2063, %v2055
    %v2616 = vpack.c.b16 %v2064, %v2056
    %v2617 = vpack.c.b16 %v2073, %v2065
    %v2618 = vpack.c.b16 %v2074, %v2066
    %v2619 = vpack.c.b16 %v2075, %v2067
    %v2620 = vpack.c.b16 %v2076, %v2068
    %v2621 = vpack.c.b16 %v2077, %v2069
    %v2622 = vpack.c.b16 %v2078, %v2070
    %v2623 = vpack.c.b16 %v2079, %v2071
    %v2624 = vpack.c.b16 %v2080, %v2072
    %v2625 = vpack.c.b16 %v2089, %v2081
    %v2626 = vpack.c.b16 %v2090, %v2082
    %v2627 = vpack.c.b16 %v2091, %v2083
    %v2628 = vpack.c.b16 %v2092, %v2084
    %v2629 = vpack.c.b16 %v2093, %v2085
    %v2630 = vpack.c.b16 %v2094, %v2086
    %v2631 = vpack.c.b16 %v2095, %v2087
    %v2632 = vpack.c.b16 %v2096, %v2088
    %v2633 = vpack.c.b16 %v2105, %v2097
    %v2634 = vpack.c.b16 %v2106, %v2098
    %v2635 = vpack.c.b16 %v2107, %v2099
    %v2636 = vpack.c.b16 %v2108, %v2100
    %v2637 = vpack.c.b16 %v2109, %v2101
    %v2638 = vpack.c.b16 %v2110, %v2102
    %v2639 = vpack.c.b16 %v2111, %v2103
    %v2640 = vpack.c.b16 %v2112, %v2104
    %v2641 = vpack.c.b16 %v2121, %v2113
    %v2642 = vpack.c.b16 %v2122, %v2114
    %v2643 = vpack.c.b16 %v2123, %v2115
    %v2644 = vpack.c.b16 %v2124, %v2116
    %v2645 = vpack.c.b16 %v2125, %v2117
    %v2646 = vpack.c.b16 %v2126, %v2118
    %v2647 = vpack.c.b16 %v2127, %v2119
    %v2648 = vpack.c.b16 %v2128, %v2120
    %v2649 = vpack.c.b16 %v2137, %v2129
    %v2650 = vpack.c.b16 %v2138, %v2130
    %v2651 = vpack.c.b16 %v2139, %v2131
    %v2652 = vpack.c.b16 %v2140, %v2132
    %v2653 = vpack.c.b16 %v2141, %v2133
    %v2654 = vpack.c.b16 %v2142, %v2134
    %v2655 = vpack.c.b16 %v2143, %v2135
    %v2656 = vpack.c.b16 %v2144, %v2136
    %3169 = vmatprep.subr.bf16.mxu0 %v2202
    %3170 = vmatpush1.bf16.msra.mxu0 %v2201
    %3171 = vmatprep.subr.bf16.mxu0 %v2194
    %3172 = vmatpush1.bf16.msra.mxu0 %v2193
    %3173 = vmatprep.subr.bf16.mxu0 %v2186
    %3174 = vmatpush1.bf16.msra.mxu0 %v2185
    %3175 = vmatprep.subr.bf16.mxu0 %v2178
    %3176 = vmatpush1.bf16.msra.mxu0 %v2177
    %3177 = vmatprep.subr.bf16.mxu0 %v2170
    %3178 = vmatpush1.bf16.msra.mxu0 %v2169
    %3179 = vmatprep.subr.bf16.mxu0 %v2162
    %3180 = vmatpush1.bf16.msra.mxu0 %v2161
    %3181 = vmatprep.subr.bf16.mxu0 %v2154
    %3182 = vmatpush1.bf16.msra.mxu0 %v2153
    %3183 = vmatprep.subr.bf16.mxu0 %v2146
    %3184 = vmatpush1.bf16.msra.mxu0 %v2145
    %3185 = vmatprep.subr.bf16.mxu0 %v2266
    %3186 = vmatpush2.bf16.msra.mxu0 %v2265
    %3187 = vmatprep.subr.bf16.mxu0 %v2258
    %3188 = vmatpush2.bf16.msra.mxu0 %v2257
    %3189 = vmatprep.subr.bf16.mxu0 %v2250
    %3190 = vmatpush2.bf16.msra.mxu0 %v2249
    %3191 = vmatprep.subr.bf16.mxu0 %v2242
    %3192 = vmatpush2.bf16.msra.mxu0 %v2241
    %3193 = vmatprep.subr.bf16.mxu0 %v2234
    %3194 = vmatpush2.bf16.msra.mxu0 %v2233
    %3195 = vmatprep.subr.bf16.mxu0 %v2226
    %3196 = vmatpush2.bf16.msra.mxu0 %v2225
    %3197 = vmatprep.subr.bf16.mxu0 %v2218
    %3198 = vmatpush2.bf16.msra.mxu0 %v2217
    %3199 = vmatprep.subr.bf16.mxu0 %v2210
    %3200 = vmatpush2.bf16.msra.mxu0 %v2209
    %3201 = vmatprep.mubr.bf16.mxu0 %v90
    %3202 = vmatmul.mubr.bf16.gmra.mxu0 %v89
    %v3203 = vpop.f32.mrf.mxu0
    %v3204 = vadd.f32 0.0, %v3203
    %v3205 = vpop.f32.mrf.mxu0
    %v3206 = vadd.f32 0.0, %v3205
    %v3207 = vpop.f32.mrf.mxu0
    %v3208 = vadd.f32 0.0, %v3207
    %v3209 = vpop.f32.mrf.mxu0
    %v3210 = vadd.f32 0.0, %v3209
    %3211 = vdwg.mxu0
    %3212 = vmatprep.subr.bf16.mxu0 %v2330
    %3213 = vmatpush1.bf16.msra.mxu0 %v2329
    %3214 = vmatprep.subr.bf16.mxu0 %v2322
    %3215 = vmatpush1.bf16.msra.mxu0 %v2321
    %3216 = vmatprep.subr.bf16.mxu0 %v2314
    %3217 = vmatpush1.bf16.msra.mxu0 %v2313
    %3218 = vmatprep.subr.bf16.mxu0 %v2306
    %3219 = vmatpush1.bf16.msra.mxu0 %v2305
    %3220 = vmatprep.subr.bf16.mxu0 %v2298
    %3221 = vmatpush1.bf16.msra.mxu0 %v2297
    %3222 = vmatprep.subr.bf16.mxu0 %v2290
    %3223 = vmatpush1.bf16.msra.mxu0 %v2289
    %3224 = vmatprep.subr.bf16.mxu0 %v2282
    %3225 = vmatpush1.bf16.msra.mxu0 %v2281
    %3226 = vmatprep.subr.bf16.mxu0 %v2274
    %3227 = vmatpush1.bf16.msra.mxu0 %v2273
    %3228 = vmatprep.subr.bf16.mxu0 %v2394
    %3229 = vmatpush2.bf16.msra.mxu0 %v2393
    %3230 = vmatprep.subr.bf16.mxu0 %v2386
    %3231 = vmatpush2.bf16.msra.mxu0 %v2385
    %3232 = vmatprep.subr.bf16.mxu0 %v2378
    %3233 = vmatpush2.bf16.msra.mxu0 %v2377
    %3234 = vmatprep.subr.bf16.mxu0 %v2370
    %3235 = vmatpush2.bf16.msra.mxu0 %v2369
    %3236 = vmatprep.subr.bf16.mxu0 %v2362
    %3237 = vmatpush2.bf16.msra.mxu0 %v2361
    %3238 = vmatprep.subr.bf16.mxu0 %v2354
    %3239 = vmatpush2.bf16.msra.mxu0 %v2353
    %3240 = vmatprep.subr.bf16.mxu0 %v2346
    %3241 = vmatpush2.bf16.msra.mxu0 %v2345
    %3242 = vmatprep.subr.bf16.mxu0 %v2338
    %3243 = vmatpush2.bf16.msra.mxu0 %v2337
    %3244 = vmatprep.mubr.bf16.mxu0 %v92
    %3245 = vmatmul.mubr.bf16.gmra.mxu0 %v91
    %v3246 = vpop.f32.mrf.mxu0
    %v3247 = vadd.f32 %v3204, %v3246
    %v3248 = vpop.f32.mrf.mxu0
    %v3249 = vadd.f32 %v3206, %v3248
    %v3250 = vpop.f32.mrf.mxu0
    %v3251 = vadd.f32 %v3208, %v3250
    %v3252 = vpop.f32.mrf.mxu0
    %v3253 = vadd.f32 %v3210, %v3252
    %3254 = vdwg.mxu0
    %3255 = vmatprep.subr.bf16.mxu0 %v2458
    %3256 = vmatpush1.bf16.msra.mxu0 %v2457
    %3257 = vmatprep.subr.bf16.mxu0 %v2450
    %3258 = vmatpush1.bf16.msra.mxu0 %v2449
    %3259 = vmatprep.subr.bf16.mxu0 %v2442
    %3260 = vmatpush1.bf16.msra.mxu0 %v2441
    %3261 = vmatprep.subr.bf16.mxu0 %v2434
    %3262 = vmatpush1.bf16.msra.mxu0 %v2433
    %3263 = vmatprep.subr.bf16.mxu0 %v2426
    %3264 = vmatpush1.bf16.msra.mxu0 %v2425
    %3265 = vmatprep.subr.bf16.mxu0 %v2418
    %3266 = vmatpush1.bf16.msra.mxu0 %v2417
    %3267 = vmatprep.subr.bf16.mxu0 %v2410
    %3268 = vmatpush1.bf16.msra.mxu0 %v2409
    %3269 = vmatprep.subr.bf16.mxu0 %v2402
    %3270 = vmatpush1.bf16.msra.mxu0 %v2401
    %3271 = vmatprep.subr.bf16.mxu0 %v2522
    %3272 = vmatpush2.bf16.msra.mxu0 %v2521
    %3273 = vmatprep.subr.bf16.mxu0 %v2514
    %3274 = vmatpush2.bf16.msra.mxu0 %v2513
    %3275 = vmatprep.subr.bf16.mxu0 %v2506
    %3276 = vmatpush2.bf16.msra.mxu0 %v2505
    %3277 = vmatprep.subr.bf16.mxu0 %v2498
    %3278 = vmatpush2.bf16.msra.mxu0 %v2497
    %3279 = vmatprep.subr.bf16.mxu0 %v2490
    %3280 = vmatpush2.bf16.msra.mxu0 %v2489
    %3281 = vmatprep.subr.bf16.mxu0 %v2482
    %3282 = vmatpush2.bf16.msra.mxu0 %v2481
    %3283 = vmatprep.subr.bf16.mxu0 %v2474
    %3284 = vmatpush2.bf16.msra.mxu0 %v2473
    %3285 = vmatprep.subr.bf16.mxu0 %v2466
    %3286 = vmatpush2.bf16.msra.mxu0 %v2465
    %3287 = vmatprep.mubr.bf16.mxu0 %v94
    %3288 = vmatmul.mubr.bf16.gmra.mxu0 %v93
    %v3289 = vpop.f32.mrf.mxu0
    %v3290 = vadd.f32 %v3247, %v3289
    %v3291 = vpop.f32.mrf.mxu0
    %v3292 = vadd.f32 %v3249, %v3291
    %v3293 = vpop.f32.mrf.mxu0
    %v3294 = vadd.f32 %v3251, %v3293
    %v3295 = vpop.f32.mrf.mxu0
    %v3296 = vadd.f32 %v3253, %v3295
    %3297 = vdwg.mxu0
    %3298 = vmatprep.subr.bf16.mxu0 %v2586
    %3299 = vmatpush1.bf16.msra.mxu0 %v2585
    %3300 = vmatprep.subr.bf16.mxu0 %v2578
    %3301 = vmatpush1.bf16.msra.mxu0 %v2577
    %3302 = vmatprep.subr.bf16.mxu0 %v2570
    %3303 = vmatpush1.bf16.msra.mxu0 %v2569
    %3304 = vmatprep.subr.bf16.mxu0 %v2562
    %3305 = vmatpush1.bf16.msra.mxu0 %v2561
    %3306 = vmatprep.subr.bf16.mxu0 %v2554
    %3307 = vmatpush1.bf16.msra.mxu0 %v2553
    %3308 = vmatprep.subr.bf16.mxu0 %v2546
    %3309 = vmatpush1.bf16.msra.mxu0 %v2545
    %3310 = vmatprep.subr.bf16.mxu0 %v2538
    %3311 = vmatpush1.bf16.msra.mxu0 %v2537
    %3312 = vmatprep.subr.bf16.mxu0 %v2530
    %3313 = vmatpush1.bf16.msra.mxu0 %v2529
    %3314 = vmatprep.subr.bf16.mxu0 %v2650
    %3315 = vmatpush2.bf16.msra.mxu0 %v2649
    %3316 = vmatprep.subr.bf16.mxu0 %v2642
    %3317 = vmatpush2.bf16.msra.mxu0 %v2641
    %3318 = vmatprep.subr.bf16.mxu0 %v2634
    %3319 = vmatpush2.bf16.msra.mxu0 %v2633
    %3320 = vmatprep.subr.bf16.mxu0 %v2626
    %3321 = vmatpush2.bf16.msra.mxu0 %v2625
    %3322 = vmatprep.subr.bf16.mxu0 %v2618
    %3323 = vmatpush2.bf16.msra.mxu0 %v2617
    %3324 = vmatprep.subr.bf16.mxu0 %v2610
    %3325 = vmatpush2.bf16.msra.mxu0 %v2609
    %3326 = vmatprep.subr.bf16.mxu0 %v2602
    %3327 = vmatpush2.bf16.msra.mxu0 %v2601
    %3328 = vmatprep.subr.bf16.mxu0 %v2594
    %3329 = vmatpush2.bf16.msra.mxu0 %v2593
    %3330 = vmatprep.mubr.bf16.mxu0 %v96
    %3331 = vmatmul.mubr.bf16.gmra.mxu0 %v95
    %v3332 = vpop.f32.mrf.mxu0
    %v3333 = vadd.f32 %v3290, %v3332
    %v3334 = vpop.f32.mrf.mxu0
    %v3335 = vadd.f32 %v3292, %v3334
    %v3336 = vpop.f32.mrf.mxu0
    %v3337 = vadd.f32 %v3294, %v3336
    %v3338 = vpop.f32.mrf.mxu0
    %v3339 = vadd.f32 %v3296, %v3338
    %3340 = vdwg.mxu0
    %3341 = vmatprep.subr.bf16.mxu0 %v2204
    %3342 = vmatpush1.bf16.msra.mxu0 %v2203
    %3343 = vmatprep.subr.bf16.mxu0 %v2196
    %3344 = vmatpush1.bf16.msra.mxu0 %v2195
    %3345 = vmatprep.subr.bf16.mxu0 %v2188
    %3346 = vmatpush1.bf16.msra.mxu0 %v2187
    %3347 = vmatprep.subr.bf16.mxu0 %v2180
    %3348 = vmatpush1.bf16.msra.mxu0 %v2179
    %3349 = vmatprep.subr.bf16.mxu0 %v2172
    %3350 = vmatpush1.bf16.msra.mxu0 %v2171
    %3351 = vmatprep.subr.bf16.mxu0 %v2164
    %3352 = vmatpush1.bf16.msra.mxu0 %v2163
    %3353 = vmatprep.subr.bf16.mxu0 %v2156
    %3354 = vmatpush1.bf16.msra.mxu0 %v2155
    %3355 = vmatprep.subr.bf16.mxu0 %v2148
    %3356 = vmatpush1.bf16.msra.mxu0 %v2147
    %3357 = vmatprep.subr.bf16.mxu0 %v2268
    %3358 = vmatpush2.bf16.msra.mxu0 %v2267
    %3359 = vmatprep.subr.bf16.mxu0 %v2260
    %3360 = vmatpush2.bf16.msra.mxu0 %v2259
    %3361 = vmatprep.subr.bf16.mxu0 %v2252
    %3362 = vmatpush2.bf16.msra.mxu0 %v2251
    %3363 = vmatprep.subr.bf16.mxu0 %v2244
    %3364 = vmatpush2.bf16.msra.mxu0 %v2243
    %3365 = vmatprep.subr.bf16.mxu0 %v2236
    %3366 = vmatpush2.bf16.msra.mxu0 %v2235
    %3367 = vmatprep.subr.bf16.mxu0 %v2228
    %3368 = vmatpush2.bf16.msra.mxu0 %v2227
    %3369 = vmatprep.subr.bf16.mxu0 %v2220
    %3370 = vmatpush2.bf16.msra.mxu0 %v2219
    %3371 = vmatprep.subr.bf16.mxu0 %v2212
    %3372 = vmatpush2.bf16.msra.mxu0 %v2211
    %3373 = vmatprep.mubr.bf16.mxu0 %v90
    %3374 = vmatmul.mubr.bf16.gmra.mxu0 %v89
    %v3375 = vpop.f32.mrf.mxu0
    %v3376 = vadd.f32 0.0, %v3375
    %v3377 = vpop.f32.mrf.mxu0
    %v3378 = vadd.f32 0.0, %v3377
    %v3379 = vpop.f32.mrf.mxu0
    %v3380 = vadd.f32 0.0, %v3379
    %v3381 = vpop.f32.mrf.mxu0
    %v3382 = vadd.f32 0.0, %v3381
    %3383 = vdwg.mxu0
    %3384 = vmatprep.subr.bf16.mxu0 %v2332
    %3385 = vmatpush1.bf16.msra.mxu0 %v2331
    %3386 = vmatprep.subr.bf16.mxu0 %v2324
    %3387 = vmatpush1.bf16.msra.mxu0 %v2323
    %3388 = vmatprep.subr.bf16.mxu0 %v2316
    %3389 = vmatpush1.bf16.msra.mxu0 %v2315
    %3390 = vmatprep.subr.bf16.mxu0 %v2308
    %3391 = vmatpush1.bf16.msra.mxu0 %v2307
    %3392 = vmatprep.subr.bf16.mxu0 %v2300
    %3393 = vmatpush1.bf16.msra.mxu0 %v2299
    %3394 = vmatprep.subr.bf16.mxu0 %v2292
    %3395 = vmatpush1.bf16.msra.mxu0 %v2291
    %3396 = vmatprep.subr.bf16.mxu0 %v2284
    %3397 = vmatpush1.bf16.msra.mxu0 %v2283
    %3398 = vmatprep.subr.bf16.mxu0 %v2276
    %3399 = vmatpush1.bf16.msra.mxu0 %v2275
    %3400 = vmatprep.subr.bf16.mxu0 %v2396
    %3401 = vmatpush2.bf16.msra.mxu0 %v2395
    %3402 = vmatprep.subr.bf16.mxu0 %v2388
    %3403 = vmatpush2.bf16.msra.mxu0 %v2387
    %3404 = vmatprep.subr.bf16.mxu0 %v2380
    %3405 = vmatpush2.bf16.msra.mxu0 %v2379
    %3406 = vmatprep.subr.bf16.mxu0 %v2372
    %3407 = vmatpush2.bf16.msra.mxu0 %v2371
    %3408 = vmatprep.subr.bf16.mxu0 %v2364
    %3409 = vmatpush2.bf16.msra.mxu0 %v2363
    %3410 = vmatprep.subr.bf16.mxu0 %v2356
    %3411 = vmatpush2.bf16.msra.mxu0 %v2355
    %3412 = vmatprep.subr.bf16.mxu0 %v2348
    %3413 = vmatpush2.bf16.msra.mxu0 %v2347
    %3414 = vmatprep.subr.bf16.mxu0 %v2340
    %3415 = vmatpush2.bf16.msra.mxu0 %v2339
    %3416 = vmatprep.mubr.bf16.mxu0 %v92
    %3417 = vmatmul.mubr.bf16.gmra.mxu0 %v91
    %v3418 = vpop.f32.mrf.mxu0
    %v3419 = vadd.f32 %v3376, %v3418
    %v3420 = vpop.f32.mrf.mxu0
    %v3421 = vadd.f32 %v3378, %v3420
    %v3422 = vpop.f32.mrf.mxu0
    %v3423 = vadd.f32 %v3380, %v3422
    %v3424 = vpop.f32.mrf.mxu0
    %v3425 = vadd.f32 %v3382, %v3424
    %3426 = vdwg.mxu0
    %3427 = vmatprep.subr.bf16.mxu0 %v2460
    %3428 = vmatpush1.bf16.msra.mxu0 %v2459
    %3429 = vmatprep.subr.bf16.mxu0 %v2452
    %3430 = vmatpush1.bf16.msra.mxu0 %v2451
    %3431 = vmatprep.subr.bf16.mxu0 %v2444
    %3432 = vmatpush1.bf16.msra.mxu0 %v2443
    %3433 = vmatprep.subr.bf16.mxu0 %v2436
    %3434 = vmatpush1.bf16.msra.mxu0 %v2435
    %3435 = vmatprep.subr.bf16.mxu0 %v2428
    %3436 = vmatpush1.bf16.msra.mxu0 %v2427
    %3437 = vmatprep.subr.bf16.mxu0 %v2420
    %3438 = vmatpush1.bf16.msra.mxu0 %v2419
    %3439 = vmatprep.subr.bf16.mxu0 %v2412
    %3440 = vmatpush1.bf16.msra.mxu0 %v2411
    %3441 = vmatprep.subr.bf16.mxu0 %v2404
    %3442 = vmatpush1.bf16.msra.mxu0 %v2403
    %3443 = vmatprep.subr.bf16.mxu0 %v2524
    %3444 = vmatpush2.bf16.msra.mxu0 %v2523
    %3445 = vmatprep.subr.bf16.mxu0 %v2516
    %3446 = vmatpush2.bf16.msra.mxu0 %v2515
    %3447 = vmatprep.subr.bf16.mxu0 %v2508
    %3448 = vmatpush2.bf16.msra.mxu0 %v2507
    %3449 = vmatprep.subr.bf16.mxu0 %v2500
    %3450 = vmatpush2.bf16.msra.mxu0 %v2499
    %3451 = vmatprep.subr.bf16.mxu0 %v2492
    %3452 = vmatpush2.bf16.msra.mxu0 %v2491
    %3453 = vmatprep.subr.bf16.mxu0 %v2484
    %3454 = vmatpush2.bf16.msra.mxu0 %v2483
    %3455 = vmatprep.subr.bf16.mxu0 %v2476
    %3456 = vmatpush2.bf16.msra.mxu0 %v2475
    %3457 = vmatprep.subr.bf16.mxu0 %v2468
    %3458 = vmatpush2.bf16.msra.mxu0 %v2467
    %3459 = vmatprep.mubr.bf16.mxu0 %v94
    %3460 = vmatmul.mubr.bf16.gmra.mxu0 %v93
    %v3461 = vpop.f32.mrf.mxu0
    %v3462 = vadd.f32 %v3419, %v3461
    %v3463 = vpop.f32.mrf.mxu0
    %v3464 = vadd.f32 %v3421, %v3463
    %v3465 = vpop.f32.mrf.mxu0
    %v3466 = vadd.f32 %v3423, %v3465
    %v3467 = vpop.f32.mrf.mxu0
    %v3468 = vadd.f32 %v3425, %v3467
    %3469 = vdwg.mxu0
    %3470 = vmatprep.subr.bf16.mxu0 %v2588
    %3471 = vmatpush1.bf16.msra.mxu0 %v2587
    %3472 = vmatprep.subr.bf16.mxu0 %v2580
    %3473 = vmatpush1.bf16.msra.mxu0 %v2579
    %3474 = vmatprep.subr.bf16.mxu0 %v2572
    %3475 = vmatpush1.bf16.msra.mxu0 %v2571
    %3476 = vmatprep.subr.bf16.mxu0 %v2564
    %3477 = vmatpush1.bf16.msra.mxu0 %v2563
    %3478 = vmatprep.subr.bf16.mxu0 %v2556
    %3479 = vmatpush1.bf16.msra.mxu0 %v2555
    %3480 = vmatprep.subr.bf16.mxu0 %v2548
    %3481 = vmatpush1.bf16.msra.mxu0 %v2547
    %3482 = vmatprep.subr.bf16.mxu0 %v2540
    %3483 = vmatpush1.bf16.msra.mxu0 %v2539
    %3484 = vmatprep.subr.bf16.mxu0 %v2532
    %3485 = vmatpush1.bf16.msra.mxu0 %v2531
    %3486 = vmatprep.subr.bf16.mxu0 %v2652
    %3487 = vmatpush2.bf16.msra.mxu0 %v2651
    %3488 = vmatprep.subr.bf16.mxu0 %v2644
    %3489 = vmatpush2.bf16.msra.mxu0 %v2643
    %3490 = vmatprep.subr.bf16.mxu0 %v2636
    %3491 = vmatpush2.bf16.msra.mxu0 %v2635
    %3492 = vmatprep.subr.bf16.mxu0 %v2628
    %3493 = vmatpush2.bf16.msra.mxu0 %v2627
    %3494 = vmatprep.subr.bf16.mxu0 %v2620
    %3495 = vmatpush2.bf16.msra.mxu0 %v2619
    %3496 = vmatprep.subr.bf16.mxu0 %v2612
    %3497 = vmatpush2.bf16.msra.mxu0 %v2611
    %3498 = vmatprep.subr.bf16.mxu0 %v2604
    %3499 = vmatpush2.bf16.msra.mxu0 %v2603
    %3500 = vmatprep.subr.bf16.mxu0 %v2596
    %3501 = vmatpush2.bf16.msra.mxu0 %v2595
    %3502 = vmatprep.mubr.bf16.mxu0 %v96
    %3503 = vmatmul.mubr.bf16.gmra.mxu0 %v95
    %v3504 = vpop.f32.mrf.mxu0
    %v3505 = vadd.f32 %v3462, %v3504
    %v3506 = vpop.f32.mrf.mxu0
    %v3507 = vadd.f32 %v3464, %v3506
    %v3508 = vpop.f32.mrf.mxu0
    %v3509 = vadd.f32 %v3466, %v3508
    %v3510 = vpop.f32.mrf.mxu0
    %v3511 = vadd.f32 %v3468, %v3510
    %3512 = vdwg.mxu0
    %3513 = vmatprep.subr.bf16.mxu0 %v2206
    %3514 = vmatpush1.bf16.msra.mxu0 %v2205
    %3515 = vmatprep.subr.bf16.mxu0 %v2198
    %3516 = vmatpush1.bf16.msra.mxu0 %v2197
    %3517 = vmatprep.subr.bf16.mxu0 %v2190
    %3518 = vmatpush1.bf16.msra.mxu0 %v2189
    %3519 = vmatprep.subr.bf16.mxu0 %v2182
    %3520 = vmatpush1.bf16.msra.mxu0 %v2181
    %3521 = vmatprep.subr.bf16.mxu0 %v2174
    %3522 = vmatpush1.bf16.msra.mxu0 %v2173
    %3523 = vmatprep.subr.bf16.mxu0 %v2166
    %3524 = vmatpush1.bf16.msra.mxu0 %v2165
    %3525 = vmatprep.subr.bf16.mxu0 %v2158
    %3526 = vmatpush1.bf16.msra.mxu0 %v2157
    %3527 = vmatprep.subr.bf16.mxu0 %v2150
    %3528 = vmatpush1.bf16.msra.mxu0 %v2149
    %3529 = vmatprep.subr.bf16.mxu0 %v2270
    %3530 = vmatpush2.bf16.msra.mxu0 %v2269
    %3531 = vmatprep.subr.bf16.mxu0 %v2262
    %3532 = vmatpush2.bf16.msra.mxu0 %v2261
    %3533 = vmatprep.subr.bf16.mxu0 %v2254
    %3534 = vmatpush2.bf16.msra.mxu0 %v2253
    %3535 = vmatprep.subr.bf16.mxu0 %v2246
    %3536 = vmatpush2.bf16.msra.mxu0 %v2245
    %3537 = vmatprep.subr.bf16.mxu0 %v2238
    %3538 = vmatpush2.bf16.msra.mxu0 %v2237
    %3539 = vmatprep.subr.bf16.mxu0 %v2230
    %3540 = vmatpush2.bf16.msra.mxu0 %v2229
    %3541 = vmatprep.subr.bf16.mxu0 %v2222
    %3542 = vmatpush2.bf16.msra.mxu0 %v2221
    %3543 = vmatprep.subr.bf16.mxu0 %v2214
    %3544 = vmatpush2.bf16.msra.mxu0 %v2213
    %3545 = vmatprep.mubr.bf16.mxu0 %v90
    %3546 = vmatmul.mubr.bf16.gmra.mxu0 %v89
    %v3547 = vpop.f32.mrf.mxu0
    %v3548 = vadd.f32 0.0, %v3547
    %v3549 = vpop.f32.mrf.mxu0
    %v3550 = vadd.f32 0.0, %v3549
    %v3551 = vpop.f32.mrf.mxu0
    %v3552 = vadd.f32 0.0, %v3551
    %v3553 = vpop.f32.mrf.mxu0
    %v3554 = vadd.f32 0.0, %v3553
    %3555 = vdwg.mxu0
    %3556 = vmatprep.subr.bf16.mxu0 %v2334
    %3557 = vmatpush1.bf16.msra.mxu0 %v2333
    %3558 = vmatprep.subr.bf16.mxu0 %v2326
    %3559 = vmatpush1.bf16.msra.mxu0 %v2325
    %3560 = vmatprep.subr.bf16.mxu0 %v2318
    %3561 = vmatpush1.bf16.msra.mxu0 %v2317
    %3562 = vmatprep.subr.bf16.mxu0 %v2310
    %3563 = vmatpush1.bf16.msra.mxu0 %v2309
    %3564 = vmatprep.subr.bf16.mxu0 %v2302
    %3565 = vmatpush1.bf16.msra.mxu0 %v2301
    %3566 = vmatprep.subr.bf16.mxu0 %v2294
    %3567 = vmatpush1.bf16.msra.mxu0 %v2293
    %3568 = vmatprep.subr.bf16.mxu0 %v2286
    %3569 = vmatpush1.bf16.msra.mxu0 %v2285
    %3570 = vmatprep.subr.bf16.mxu0 %v2278
    %3571 = vmatpush1.bf16.msra.mxu0 %v2277
    %3572 = vmatprep.subr.bf16.mxu0 %v2398
    %3573 = vmatpush2.bf16.msra.mxu0 %v2397
    %3574 = vmatprep.subr.bf16.mxu0 %v2390
    %3575 = vmatpush2.bf16.msra.mxu0 %v2389
    %3576 = vmatprep.subr.bf16.mxu0 %v2382
    %3577 = vmatpush2.bf16.msra.mxu0 %v2381
    %3578 = vmatprep.subr.bf16.mxu0 %v2374
    %3579 = vmatpush2.bf16.msra.mxu0 %v2373
    %3580 = vmatprep.subr.bf16.mxu0 %v2366
    %3581 = vmatpush2.bf16.msra.mxu0 %v2365
    %3582 = vmatprep.subr.bf16.mxu0 %v2358
    %3583 = vmatpush2.bf16.msra.mxu0 %v2357
    %3584 = vmatprep.subr.bf16.mxu0 %v2350
    %3585 = vmatpush2.bf16.msra.mxu0 %v2349
    %3586 = vmatprep.subr.bf16.mxu0 %v2342
    %3587 = vmatpush2.bf16.msra.mxu0 %v2341
    %3588 = vmatprep.mubr.bf16.mxu0 %v92
    %3589 = vmatmul.mubr.bf16.gmra.mxu0 %v91
    %v3590 = vpop.f32.mrf.mxu0
    %v3591 = vadd.f32 %v3548, %v3590
    %v3592 = vpop.f32.mrf.mxu0
    %v3593 = vadd.f32 %v3550, %v3592
    %v3594 = vpop.f32.mrf.mxu0
    %v3595 = vadd.f32 %v3552, %v3594
    %v3596 = vpop.f32.mrf.mxu0
    %v3597 = vadd.f32 %v3554, %v3596
    %3598 = vdwg.mxu0
    %3599 = vmatprep.subr.bf16.mxu0 %v2462
    %3600 = vmatpush1.bf16.msra.mxu0 %v2461
    %3601 = vmatprep.subr.bf16.mxu0 %v2454
    %3602 = vmatpush1.bf16.msra.mxu0 %v2453
    %3603 = vmatprep.subr.bf16.mxu0 %v2446
    %3604 = vmatpush1.bf16.msra.mxu0 %v2445
    %3605 = vmatprep.subr.bf16.mxu0 %v2438
    %3606 = vmatpush1.bf16.msra.mxu0 %v2437
    %3607 = vmatprep.subr.bf16.mxu0 %v2430
    %3608 = vmatpush1.bf16.msra.mxu0 %v2429
    %3609 = vmatprep.subr.bf16.mxu0 %v2422
    %3610 = vmatpush1.bf16.msra.mxu0 %v2421
    %3611 = vmatprep.subr.bf16.mxu0 %v2414
    %3612 = vmatpush1.bf16.msra.mxu0 %v2413
    %3613 = vmatprep.subr.bf16.mxu0 %v2406
    %3614 = vmatpush1.bf16.msra.mxu0 %v2405
    %3615 = vmatprep.subr.bf16.mxu0 %v2526
    %3616 = vmatpush2.bf16.msra.mxu0 %v2525
    %3617 = vmatprep.subr.bf16.mxu0 %v2518
    %3618 = vmatpush2.bf16.msra.mxu0 %v2517
    %3619 = vmatprep.subr.bf16.mxu0 %v2510
    %3620 = vmatpush2.bf16.msra.mxu0 %v2509
    %3621 = vmatprep.subr.bf16.mxu0 %v2502
    %3622 = vmatpush2.bf16.msra.mxu0 %v2501
    %3623 = vmatprep.subr.bf16.mxu0 %v2494
    %3624 = vmatpush2.bf16.msra.mxu0 %v2493
    %3625 = vmatprep.subr.bf16.mxu0 %v2486
    %3626 = vmatpush2.bf16.msra.mxu0 %v2485
    %3627 = vmatprep.subr.bf16.mxu0 %v2478
    %3628 = vmatpush2.bf16.msra.mxu0 %v2477
    %3629 = vmatprep.subr.bf16.mxu0 %v2470
    %3630 = vmatpush2.bf16.msra.mxu0 %v2469
    %3631 = vmatprep.mubr.bf16.mxu0 %v94
    %3632 = vmatmul.mubr.bf16.gmra.mxu0 %v93
    %v3633 = vpop.f32.mrf.mxu0
    %v3634 = vadd.f32 %v3591, %v3633
    %v3635 = vpop.f32.mrf.mxu0
    %v3636 = vadd.f32 %v3593, %v3635
    %v3637 = vpop.f32.mrf.mxu0
    %v3638 = vadd.f32 %v3595, %v3637
    %v3639 = vpop.f32.mrf.mxu0
    %v3640 = vadd.f32 %v3597, %v3639
    %3641 = vdwg.mxu0
    %3642 = vmatprep.subr.bf16.mxu0 %v2590
    %3643 = vmatpush1.bf16.msra.mxu0 %v2589
    %3644 = vmatprep.subr.bf16.mxu0 %v2582
    %3645 = vmatpush1.bf16.msra.mxu0 %v2581
    %3646 = vmatprep.subr.bf16.mxu0 %v2574
    %3647 = vmatpush1.bf16.msra.mxu0 %v2573
    %3648 = vmatprep.subr.bf16.mxu0 %v2566
    %3649 = vmatpush1.bf16.msra.mxu0 %v2565
    %3650 = vmatprep.subr.bf16.mxu0 %v2558
    %3651 = vmatpush1.bf16.msra.mxu0 %v2557
    %3652 = vmatprep.subr.bf16.mxu0 %v2550
    %3653 = vmatpush1.bf16.msra.mxu0 %v2549
    %3654 = vmatprep.subr.bf16.mxu0 %v2542
    %3655 = vmatpush1.bf16.msra.mxu0 %v2541
    %3656 = vmatprep.subr.bf16.mxu0 %v2534
    %3657 = vmatpush1.bf16.msra.mxu0 %v2533
    %3658 = vmatprep.subr.bf16.mxu0 %v2654
    %3659 = vmatpush2.bf16.msra.mxu0 %v2653
    %3660 = vmatprep.subr.bf16.mxu0 %v2646
    %3661 = vmatpush2.bf16.msra.mxu0 %v2645
    %3662 = vmatprep.subr.bf16.mxu0 %v2638
    %3663 = vmatpush2.bf16.msra.mxu0 %v2637
    %3664 = vmatprep.subr.bf16.mxu0 %v2630
    %3665 = vmatpush2.bf16.msra.mxu0 %v2629
    %3666 = vmatprep.subr.bf16.mxu0 %v2622
    %3667 = vmatpush2.bf16.msra.mxu0 %v2621
    %3668 = vmatprep.subr.bf16.mxu0 %v2614
    %3669 = vmatpush2.bf16.msra.mxu0 %v2613
    %3670 = vmatprep.subr.bf16.mxu0 %v2606
    %3671 = vmatpush2.bf16.msra.mxu0 %v2605
    %3672 = vmatprep.subr.bf16.mxu0 %v2598
    %3673 = vmatpush2.bf16.msra.mxu0 %v2597
    %3674 = vmatprep.mubr.bf16.mxu0 %v96
    %3675 = vmatmul.mubr.bf16.gmra.mxu0 %v95
    %v3676 = vpop.f32.mrf.mxu0
    %v3677 = vadd.f32 %v3634, %v3676
    %v3678 = vpop.f32.mrf.mxu0
    %v3679 = vadd.f32 %v3636, %v3678
    %v3680 = vpop.f32.mrf.mxu0
    %v3681 = vadd.f32 %v3638, %v3680
    %v3682 = vpop.f32.mrf.mxu0
    %v3683 = vadd.f32 %v3640, %v3682
    %3684 = vdwg.mxu0
    %3685 = vmatprep.subr.bf16.mxu0 %v2208
    %3686 = vmatpush1.bf16.msra.mxu0 %v2207
    %3687 = vmatprep.subr.bf16.mxu0 %v2200
    %3688 = vmatpush1.bf16.msra.mxu0 %v2199
    %3689 = vmatprep.subr.bf16.mxu0 %v2192
    %3690 = vmatpush1.bf16.msra.mxu0 %v2191
    %3691 = vmatprep.subr.bf16.mxu0 %v2184
    %3692 = vmatpush1.bf16.msra.mxu0 %v2183
    %3693 = vmatprep.subr.bf16.mxu0 %v2176
    %3694 = vmatpush1.bf16.msra.mxu0 %v2175
    %3695 = vmatprep.subr.bf16.mxu0 %v2168
    %3696 = vmatpush1.bf16.msra.mxu0 %v2167
    %3697 = vmatprep.subr.bf16.mxu0 %v2160
    %3698 = vmatpush1.bf16.msra.mxu0 %v2159
    %3699 = vmatprep.subr.bf16.mxu0 %v2152
    %3700 = vmatpush1.bf16.msra.mxu0 %v2151
    %3701 = vmatprep.subr.bf16.mxu0 %v2272
    %3702 = vmatpush2.bf16.msra.mxu0 %v2271
    %3703 = vmatprep.subr.bf16.mxu0 %v2264
    %3704 = vmatpush2.bf16.msra.mxu0 %v2263
    %3705 = vmatprep.subr.bf16.mxu0 %v2256
    %3706 = vmatpush2.bf16.msra.mxu0 %v2255
    %3707 = vmatprep.subr.bf16.mxu0 %v2248
    %3708 = vmatpush2.bf16.msra.mxu0 %v2247
    %3709 = vmatprep.subr.bf16.mxu0 %v2240
    %3710 = vmatpush2.bf16.msra.mxu0 %v2239
    %3711 = vmatprep.subr.bf16.mxu0 %v2232
    %3712 = vmatpush2.bf16.msra.mxu0 %v2231
    %3713 = vmatprep.subr.bf16.mxu0 %v2224
    %3714 = vmatpush2.bf16.msra.mxu0 %v2223
    %3715 = vmatprep.subr.bf16.mxu0 %v2216
    %3716 = vmatpush2.bf16.msra.mxu0 %v2215
    %3717 = vmatprep.mubr.bf16.mxu0 %v90
    %3718 = vmatmul.mubr.bf16.gmra.mxu0 %v89
    %v3719 = vpop.f32.mrf.mxu0
    %v3720 = vadd.f32 0.0, %v3719
    %v3721 = vpop.f32.mrf.mxu0
    %v3722 = vadd.f32 0.0, %v3721
    %v3723 = vpop.f32.mrf.mxu0
    %v3724 = vadd.f32 0.0, %v3723
    %v3725 = vpop.f32.mrf.mxu0
    %v3726 = vadd.f32 0.0, %v3725
    %3727 = vdwg.mxu0
    %3728 = vmatprep.subr.bf16.mxu0 %v2336
    %3729 = vmatpush1.bf16.msra.mxu0 %v2335
    %3730 = vmatprep.subr.bf16.mxu0 %v2328
    %3731 = vmatpush1.bf16.msra.mxu0 %v2327
    %3732 = vmatprep.subr.bf16.mxu0 %v2320
    %3733 = vmatpush1.bf16.msra.mxu0 %v2319
    %3734 = vmatprep.subr.bf16.mxu0 %v2312
    %3735 = vmatpush1.bf16.msra.mxu0 %v2311
    %3736 = vmatprep.subr.bf16.mxu0 %v2304
    %3737 = vmatpush1.bf16.msra.mxu0 %v2303
    %3738 = vmatprep.subr.bf16.mxu0 %v2296
    %3739 = vmatpush1.bf16.msra.mxu0 %v2295
    %3740 = vmatprep.subr.bf16.mxu0 %v2288
    %3741 = vmatpush1.bf16.msra.mxu0 %v2287
    %3742 = vmatprep.subr.bf16.mxu0 %v2280
    %3743 = vmatpush1.bf16.msra.mxu0 %v2279
    %3744 = vmatprep.subr.bf16.mxu0 %v2400
    %3745 = vmatpush2.bf16.msra.mxu0 %v2399
    %3746 = vmatprep.subr.bf16.mxu0 %v2392
    %3747 = vmatpush2.bf16.msra.mxu0 %v2391
    %3748 = vmatprep.subr.bf16.mxu0 %v2384
    %3749 = vmatpush2.bf16.msra.mxu0 %v2383
    %3750 = vmatprep.subr.bf16.mxu0 %v2376
    %3751 = vmatpush2.bf16.msra.mxu0 %v2375
    %3752 = vmatprep.subr.bf16.mxu0 %v2368
    %3753 = vmatpush2.bf16.msra.mxu0 %v2367
    %3754 = vmatprep.subr.bf16.mxu0 %v2360
    %3755 = vmatpush2.bf16.msra.mxu0 %v2359
    %3756 = vmatprep.subr.bf16.mxu0 %v2352
    %3757 = vmatpush2.bf16.msra.mxu0 %v2351
    %3758 = vmatprep.subr.bf16.mxu0 %v2344
    %3759 = vmatpush2.bf16.msra.mxu0 %v2343
    %3760 = vmatprep.mubr.bf16.mxu0 %v92
    %3761 = vmatmul.mubr.bf16.gmra.mxu0 %v91
    %v3762 = vpop.f32.mrf.mxu0
    %v3763 = vadd.f32 %v3720, %v3762
    %v3764 = vpop.f32.mrf.mxu0
    %v3765 = vadd.f32 %v3722, %v3764
    %v3766 = vpop.f32.mrf.mxu0
    %v3767 = vadd.f32 %v3724, %v3766
    %v3768 = vpop.f32.mrf.mxu0
    %v3769 = vadd.f32 %v3726, %v3768
    %3770 = vdwg.mxu0
    %3771 = vmatprep.subr.bf16.mxu0 %v2464
    %3772 = vmatpush1.bf16.msra.mxu0 %v2463
    %3773 = vmatprep.subr.bf16.mxu0 %v2456
    %3774 = vmatpush1.bf16.msra.mxu0 %v2455
    %3775 = vmatprep.subr.bf16.mxu0 %v2448
    %3776 = vmatpush1.bf16.msra.mxu0 %v2447
    %3777 = vmatprep.subr.bf16.mxu0 %v2440
    %3778 = vmatpush1.bf16.msra.mxu0 %v2439
    %3779 = vmatprep.subr.bf16.mxu0 %v2432
    %3780 = vmatpush1.bf16.msra.mxu0 %v2431
    %3781 = vmatprep.subr.bf16.mxu0 %v2424
    %3782 = vmatpush1.bf16.msra.mxu0 %v2423
    %3783 = vmatprep.subr.bf16.mxu0 %v2416
    %3784 = vmatpush1.bf16.msra.mxu0 %v2415
    %3785 = vmatprep.subr.bf16.mxu0 %v2408
    %3786 = vmatpush1.bf16.msra.mxu0 %v2407
    %3787 = vmatprep.subr.bf16.mxu0 %v2528
    %3788 = vmatpush2.bf16.msra.mxu0 %v2527
    %3789 = vmatprep.subr.bf16.mxu0 %v2520
    %3790 = vmatpush2.bf16.msra.mxu0 %v2519
    %3791 = vmatprep.subr.bf16.mxu0 %v2512
    %3792 = vmatpush2.bf16.msra.mxu0 %v2511
    %3793 = vmatprep.subr.bf16.mxu0 %v2504
    %3794 = vmatpush2.bf16.msra.mxu0 %v2503
    %3795 = vmatprep.subr.bf16.mxu0 %v2496
    %3796 = vmatpush2.bf16.msra.mxu0 %v2495
    %3797 = vmatprep.subr.bf16.mxu0 %v2488
    %3798 = vmatpush2.bf16.msra.mxu0 %v2487
    %3799 = vmatprep.subr.bf16.mxu0 %v2480
    %3800 = vmatpush2.bf16.msra.mxu0 %v2479
    %3801 = vmatprep.subr.bf16.mxu0 %v2472
    %3802 = vmatpush2.bf16.msra.mxu0 %v2471
    %3803 = vmatprep.mubr.bf16.mxu0 %v94
    %3804 = vmatmul.mubr.bf16.gmra.mxu0 %v93
    %v3805 = vpop.f32.mrf.mxu0
    %v3806 = vadd.f32 %v3763, %v3805
    %v3807 = vpop.f32.mrf.mxu0
    %v3808 = vadd.f32 %v3765, %v3807
    %v3809 = vpop.f32.mrf.mxu0
    %v3810 = vadd.f32 %v3767, %v3809
    %v3811 = vpop.f32.mrf.mxu0
    %v3812 = vadd.f32 %v3769, %v3811
    %3813 = vdwg.mxu0
    %3814 = vmatprep.subr.bf16.mxu0 %v2592
    %3815 = vmatpush1.bf16.msra.mxu0 %v2591
    %3816 = vmatprep.subr.bf16.mxu0 %v2584
    %3817 = vmatpush1.bf16.msra.mxu0 %v2583
    %3818 = vmatprep.subr.bf16.mxu0 %v2576
    %3819 = vmatpush1.bf16.msra.mxu0 %v2575
    %3820 = vmatprep.subr.bf16.mxu0 %v2568
    %3821 = vmatpush1.bf16.msra.mxu0 %v2567
    %3822 = vmatprep.subr.bf16.mxu0 %v2560
    %3823 = vmatpush1.bf16.msra.mxu0 %v2559
    %3824 = vmatprep.subr.bf16.mxu0 %v2552
    %3825 = vmatpush1.bf16.msra.mxu0 %v2551
    %3826 = vmatprep.subr.bf16.mxu0 %v2544
    %3827 = vmatpush1.bf16.msra.mxu0 %v2543
    %3828 = vmatprep.subr.bf16.mxu0 %v2536
    %3829 = vmatpush1.bf16.msra.mxu0 %v2535
    %3830 = vmatprep.subr.bf16.mxu0 %v2656
    %3831 = vmatpush2.bf16.msra.mxu0 %v2655
    %3832 = vmatprep.subr.bf16.mxu0 %v2648
    %3833 = vmatpush2.bf16.msra.mxu0 %v2647
    %3834 = vmatprep.subr.bf16.mxu0 %v2640
    %3835 = vmatpush2.bf16.msra.mxu0 %v2639
    %3836 = vmatprep.subr.bf16.mxu0 %v2632
    %3837 = vmatpush2.bf16.msra.mxu0 %v2631
    %3838 = vmatprep.subr.bf16.mxu0 %v2624
    %3839 = vmatpush2.bf16.msra.mxu0 %v2623
    %3840 = vmatprep.subr.bf16.mxu0 %v2616
    %3841 = vmatpush2.bf16.msra.mxu0 %v2615
    %3842 = vmatprep.subr.bf16.mxu0 %v2608
    %3843 = vmatpush2.bf16.msra.mxu0 %v2607
    %3844 = vmatprep.subr.bf16.mxu0 %v2600
    %3845 = vmatpush2.bf16.msra.mxu0 %v2599
    %3846 = vmatprep.mubr.bf16.mxu0 %v96
    %3847 = vmatmul.mubr.bf16.gmra.mxu0 %v95
    %v3848 = vpop.f32.mrf.mxu0
    %v3849 = vadd.f32 %v3806, %v3848
    %v3850 = vpop.f32.mrf.mxu0
    %v3851 = vadd.f32 %v3808, %v3850
    %v3852 = vpop.f32.mrf.mxu0
    %v3853 = vadd.f32 %v3810, %v3852
    %v3854 = vpop.f32.mrf.mxu0
    %v3855 = vadd.f32 %v3812, %v3854
    %3856 = vdwg.mxu0
    %v3857 = vpack.c.bf16 %v3337, %v3333
    %v3858 = vpack.c.bf16 %v3339, %v3335
    %v3859 = vpack.c.bf16 %v3509, %v3505
    %v3860 = vpack.c.bf16 %v3511, %v3507
    %v3861 = vpack.c.bf16 %v3681, %v3677
    %v3862 = vpack.c.bf16 %v3683, %v3679
    %v3863 = vpack.c.bf16 %v3853, %v3849
    %v3864 = vpack.c.bf16 %v3855, %v3851
    %v3865 = vld [vmem:[#allocation7] sm:$0xff]
    %v3866 = vld [vmem:[#allocation7 + $0x8] sm:$0xff]
    %v3867 = vld [vmem:[#allocation7 + $0x10] sm:$0xff]
    %v3868 = vld [vmem:[#allocation7 + $0x18] sm:$0xff]
    %v3869 = vld [vmem:[#allocation7 + $0x20] sm:$0xff]
    %v3870 = vld [vmem:[#allocation7 + $0x28] sm:$0xff]
    %v3871 = vld [vmem:[#allocation7 + $0x30] sm:$0xff]
    %v3872 = vld [vmem:[#allocation7 + $0x38] sm:$0xff]
    %v3873 = vld [vmem:[#allocation7 + $0x40] sm:$0xff]
    %v3874 = vld [vmem:[#allocation7 + $0x48] sm:$0xff]
    %v3875 = vld [vmem:[#allocation7 + $0x50] sm:$0xff]
    %v3876 = vld [vmem:[#allocation7 + $0x58] sm:$0xff]
    %v3877 = vld [vmem:[#allocation7 + $0x60] sm:$0xff]
    %v3878 = vld [vmem:[#allocation7 + $0x68] sm:$0xff]
    %v3879 = vld [vmem:[#allocation7 + $0x70] sm:$0xff]
    %v3880 = vld [vmem:[#allocation7 + $0x78] sm:$0xff]
    %v3881 = vld [vmem:[#allocation7 + $0x80] sm:$0xff]
    %v3882 = vld [vmem:[#allocation7 + $0x88] sm:$0xff]
    %v3883 = vld [vmem:[#allocation7 + $0x90] sm:$0xff]
    %v3884 = vld [vmem:[#allocation7 + $0x98] sm:$0xff]
    %v3885 = vld [vmem:[#allocation7 + $0xa0] sm:$0xff]
    %v3886 = vld [vmem:[#allocation7 + $0xa8] sm:$0xff]
    %v3887 = vld [vmem:[#allocation7 + $0xb0] sm:$0xff]
    %v3888 = vld [vmem:[#allocation7 + $0xb8] sm:$0xff]
    %v3889 = vld [vmem:[#allocation7 + $0xc0] sm:$0xff]
    %v3890 = vld [vmem:[#allocation7 + $0xc8] sm:$0xff]
    %v3891 = vld [vmem:[#allocation7 + $0xd0] sm:$0xff]
    %v3892 = vld [vmem:[#allocation7 + $0xd8] sm:$0xff]
    %v3893 = vld [vmem:[#allocation7 + $0xe0] sm:$0xff]
    %v3894 = vld [vmem:[#allocation7 + $0xe8] sm:$0xff]
    %v3895 = vld [vmem:[#allocation7 + $0xf0] sm:$0xff]
    %v3896 = vld [vmem:[#allocation7 + $0xf8] sm:$0xff]
    %v3897 = vld [vmem:[#allocation7 + $0x100] sm:$0xff]
    %v3898 = vld [vmem:[#allocation7 + $0x108] sm:$0xff]
    %v3899 = vld [vmem:[#allocation7 + $0x110] sm:$0xff]
    %v3900 = vld [vmem:[#allocation7 + $0x118] sm:$0xff]
    %v3901 = vld [vmem:[#allocation7 + $0x120] sm:$0xff]
    %v3902 = vld [vmem:[#allocation7 + $0x128] sm:$0xff]
    %v3903 = vld [vmem:[#allocation7 + $0x130] sm:$0xff]
    %v3904 = vld [vmem:[#allocation7 + $0x138] sm:$0xff]
    %v3905 = vld [vmem:[#allocation7 + $0x140] sm:$0xff]
    %v3906 = vld [vmem:[#allocation7 + $0x148] sm:$0xff]
    %v3907 = vld [vmem:[#allocation7 + $0x150] sm:$0xff]
    %v3908 = vld [vmem:[#allocation7 + $0x158] sm:$0xff]
    %v3909 = vld [vmem:[#allocation7 + $0x160] sm:$0xff]
    %v3910 = vld [vmem:[#allocation7 + $0x168] sm:$0xff]
    %v3911 = vld [vmem:[#allocation7 + $0x170] sm:$0xff]
    %v3912 = vld [vmem:[#allocation7 + $0x178] sm:$0xff]
    %v3913 = vld [vmem:[#allocation7 + $0x180] sm:$0xff]
    %v3914 = vld [vmem:[#allocation7 + $0x188] sm:$0xff]
    %v3915 = vld [vmem:[#allocation7 + $0x190] sm:$0xff]
    %v3916 = vld [vmem:[#allocation7 + $0x198] sm:$0xff]
    %v3917 = vld [vmem:[#allocation7 + $0x1a0] sm:$0xff]
    %v3918 = vld [vmem:[#allocation7 + $0x1a8] sm:$0xff]
    %v3919 = vld [vmem:[#allocation7 + $0x1b0] sm:$0xff]
    %v3920 = vld [vmem:[#allocation7 + $0x1b8] sm:$0xff]
    %v3921 = vld [vmem:[#allocation7 + $0x1c0] sm:$0xff]
    %v3922 = vld [vmem:[#allocation7 + $0x1c8] sm:$0xff]
    %v3923 = vld [vmem:[#allocation7 + $0x1d0] sm:$0xff]
    %v3924 = vld [vmem:[#allocation7 + $0x1d8] sm:$0xff]
    %v3925 = vld [vmem:[#allocation7 + $0x1e0] sm:$0xff]
    %v3926 = vld [vmem:[#allocation7 + $0x1e8] sm:$0xff]
    %v3927 = vld [vmem:[#allocation7 + $0x1f0] sm:$0xff]
    %v3928 = vld [vmem:[#allocation7 + $0x1f8] sm:$0xff]
    %v3929 = vld [vmem:[#allocation7 + $0x200] sm:$0xff]
    %v3930 = vld [vmem:[#allocation7 + $0x208] sm:$0xff]
    %v3931 = vld [vmem:[#allocation7 + $0x210] sm:$0xff]
    %v3932 = vld [vmem:[#allocation7 + $0x218] sm:$0xff]
    %v3933 = vld [vmem:[#allocation7 + $0x220] sm:$0xff]
    %v3934 = vld [vmem:[#allocation7 + $0x228] sm:$0xff]
    %v3935 = vld [vmem:[#allocation7 + $0x230] sm:$0xff]
    %v3936 = vld [vmem:[#allocation7 + $0x238] sm:$0xff]
    %v3937 = vld [vmem:[#allocation7 + $0x240] sm:$0xff]
    %v3938 = vld [vmem:[#allocation7 + $0x248] sm:$0xff]
    %v3939 = vld [vmem:[#allocation7 + $0x250] sm:$0xff]
    %v3940 = vld [vmem:[#allocation7 + $0x258] sm:$0xff]
    %v3941 = vld [vmem:[#allocation7 + $0x260] sm:$0xff]
    %v3942 = vld [vmem:[#allocation7 + $0x268] sm:$0xff]
    %v3943 = vld [vmem:[#allocation7 + $0x270] sm:$0xff]
    %v3944 = vld [vmem:[#allocation7 + $0x278] sm:$0xff]
    %v3945 = vld [vmem:[#allocation7 + $0x280] sm:$0xff]
    %v3946 = vld [vmem:[#allocation7 + $0x288] sm:$0xff]
    %v3947 = vld [vmem:[#allocation7 + $0x290] sm:$0xff]
    %v3948 = vld [vmem:[#allocation7 + $0x298] sm:$0xff]
    %v3949 = vld [vmem:[#allocation7 + $0x2a0] sm:$0xff]
    %v3950 = vld [vmem:[#allocation7 + $0x2a8] sm:$0xff]
    %v3951 = vld [vmem:[#allocation7 + $0x2b0] sm:$0xff]
    %v3952 = vld [vmem:[#allocation7 + $0x2b8] sm:$0xff]
    %v3953 = vld [vmem:[#allocation7 + $0x2c0] sm:$0xff]
    %v3954 = vld [vmem:[#allocation7 + $0x2c8] sm:$0xff]
    %v3955 = vld [vmem:[#allocation7 + $0x2d0] sm:$0xff]
    %v3956 = vld [vmem:[#allocation7 + $0x2d8] sm:$0xff]
    %v3957 = vld [vmem:[#allocation7 + $0x2e0] sm:$0xff]
    %v3958 = vld [vmem:[#allocation7 + $0x2e8] sm:$0xff]
    %v3959 = vld [vmem:[#allocation7 + $0x2f0] sm:$0xff]
    %v3960 = vld [vmem:[#allocation7 + $0x2f8] sm:$0xff]
    %v3961 = vld [vmem:[#allocation7 + $0x300] sm:$0xff]
    %v3962 = vld [vmem:[#allocation7 + $0x308] sm:$0xff]
    %v3963 = vld [vmem:[#allocation7 + $0x310] sm:$0xff]
    %v3964 = vld [vmem:[#allocation7 + $0x318] sm:$0xff]
    %v3965 = vld [vmem:[#allocation7 + $0x320] sm:$0xff]
    %v3966 = vld [vmem:[#allocation7 + $0x328] sm:$0xff]
    %v3967 = vld [vmem:[#allocation7 + $0x330] sm:$0xff]
    %v3968 = vld [vmem:[#allocation7 + $0x338] sm:$0xff]
    %v3969 = vld [vmem:[#allocation7 + $0x340] sm:$0xff]
    %v3970 = vld [vmem:[#allocation7 + $0x348] sm:$0xff]
    %v3971 = vld [vmem:[#allocation7 + $0x350] sm:$0xff]
    %v3972 = vld [vmem:[#allocation7 + $0x358] sm:$0xff]
    %v3973 = vld [vmem:[#allocation7 + $0x360] sm:$0xff]
    %v3974 = vld [vmem:[#allocation7 + $0x368] sm:$0xff]
    %v3975 = vld [vmem:[#allocation7 + $0x370] sm:$0xff]
    %v3976 = vld [vmem:[#allocation7 + $0x378] sm:$0xff]
    %v3977 = vld [vmem:[#allocation7 + $0x380] sm:$0xff]
    %v3978 = vld [vmem:[#allocation7 + $0x388] sm:$0xff]
    %v3979 = vld [vmem:[#allocation7 + $0x390] sm:$0xff]
    %v3980 = vld [vmem:[#allocation7 + $0x398] sm:$0xff]
    %v3981 = vld [vmem:[#allocation7 + $0x3a0] sm:$0xff]
    %v3982 = vld [vmem:[#allocation7 + $0x3a8] sm:$0xff]
    %v3983 = vld [vmem:[#allocation7 + $0x3b0] sm:$0xff]
    %v3984 = vld [vmem:[#allocation7 + $0x3b8] sm:$0xff]
    %v3985 = vld [vmem:[#allocation7 + $0x3c0] sm:$0xff]
    %v3986 = vld [vmem:[#allocation7 + $0x3c8] sm:$0xff]
    %v3987 = vld [vmem:[#allocation7 + $0x3d0] sm:$0xff]
    %v3988 = vld [vmem:[#allocation7 + $0x3d8] sm:$0xff]
    %v3989 = vld [vmem:[#allocation7 + $0x3e0] sm:$0xff]
    %v3990 = vld [vmem:[#allocation7 + $0x3e8] sm:$0xff]
    %v3991 = vld [vmem:[#allocation7 + $0x3f0] sm:$0xff]
    %v3992 = vld [vmem:[#allocation7 + $0x3f8] sm:$0xff]
    %v3993 = vld [vmem:[#allocation7 + $0x400] sm:$0xff]
    %v3994 = vld [vmem:[#allocation7 + $0x408] sm:$0xff]
    %v3995 = vld [vmem:[#allocation7 + $0x410] sm:$0xff]
    %v3996 = vld [vmem:[#allocation7 + $0x418] sm:$0xff]
    %v3997 = vld [vmem:[#allocation7 + $0x420] sm:$0xff]
    %v3998 = vld [vmem:[#allocation7 + $0x428] sm:$0xff]
    %v3999 = vld [vmem:[#allocation7 + $0x430] sm:$0xff]
    %v4000 = vld [vmem:[#allocation7 + $0x438] sm:$0xff]
    %v4001 = vld [vmem:[#allocation7 + $0x440] sm:$0xff]
    %v4002 = vld [vmem:[#allocation7 + $0x448] sm:$0xff]
    %v4003 = vld [vmem:[#allocation7 + $0x450] sm:$0xff]
    %v4004 = vld [vmem:[#allocation7 + $0x458] sm:$0xff]
    %v4005 = vld [vmem:[#allocation7 + $0x460] sm:$0xff]
    %v4006 = vld [vmem:[#allocation7 + $0x468] sm:$0xff]
    %v4007 = vld [vmem:[#allocation7 + $0x470] sm:$0xff]
    %v4008 = vld [vmem:[#allocation7 + $0x478] sm:$0xff]
    %v4009 = vld [vmem:[#allocation7 + $0x480] sm:$0xff]
    %v4010 = vld [vmem:[#allocation7 + $0x488] sm:$0xff]
    %v4011 = vld [vmem:[#allocation7 + $0x490] sm:$0xff]
    %v4012 = vld [vmem:[#allocation7 + $0x498] sm:$0xff]
    %v4013 = vld [vmem:[#allocation7 + $0x4a0] sm:$0xff]
    %v4014 = vld [vmem:[#allocation7 + $0x4a8] sm:$0xff]
    %v4015 = vld [vmem:[#allocation7 + $0x4b0] sm:$0xff]
    %v4016 = vld [vmem:[#allocation7 + $0x4b8] sm:$0xff]
    %v4017 = vld [vmem:[#allocation7 + $0x4c0] sm:$0xff]
    %v4018 = vld [vmem:[#allocation7 + $0x4c8] sm:$0xff]
    %v4019 = vld [vmem:[#allocation7 + $0x4d0] sm:$0xff]
    %v4020 = vld [vmem:[#allocation7 + $0x4d8] sm:$0xff]
    %v4021 = vld [vmem:[#allocation7 + $0x4e0] sm:$0xff]
    %v4022 = vld [vmem:[#allocation7 + $0x4e8] sm:$0xff]
    %v4023 = vld [vmem:[#allocation7 + $0x4f0] sm:$0xff]
    %v4024 = vld [vmem:[#allocation7 + $0x4f8] sm:$0xff]
    %v4025 = vld [vmem:[#allocation7 + $0x500] sm:$0xff]
    %v4026 = vld [vmem:[#allocation7 + $0x508] sm:$0xff]
    %v4027 = vld [vmem:[#allocation7 + $0x510] sm:$0xff]
    %v4028 = vld [vmem:[#allocation7 + $0x518] sm:$0xff]
    %v4029 = vld [vmem:[#allocation7 + $0x520] sm:$0xff]
    %v4030 = vld [vmem:[#allocation7 + $0x528] sm:$0xff]
    %v4031 = vld [vmem:[#allocation7 + $0x530] sm:$0xff]
    %v4032 = vld [vmem:[#allocation7 + $0x538] sm:$0xff]
    %v4033 = vld [vmem:[#allocation7 + $0x540] sm:$0xff]
    %v4034 = vld [vmem:[#allocation7 + $0x548] sm:$0xff]
    %v4035 = vld [vmem:[#allocation7 + $0x550] sm:$0xff]
    %v4036 = vld [vmem:[#allocation7 + $0x558] sm:$0xff]
    %v4037 = vld [vmem:[#allocation7 + $0x560] sm:$0xff]
    %v4038 = vld [vmem:[#allocation7 + $0x568] sm:$0xff]
    %v4039 = vld [vmem:[#allocation7 + $0x570] sm:$0xff]
    %v4040 = vld [vmem:[#allocation7 + $0x578] sm:$0xff]
    %v4041 = vld [vmem:[#allocation7 + $0x580] sm:$0xff]
    %v4042 = vld [vmem:[#allocation7 + $0x588] sm:$0xff]
    %v4043 = vld [vmem:[#allocation7 + $0x590] sm:$0xff]
    %v4044 = vld [vmem:[#allocation7 + $0x598] sm:$0xff]
    %v4045 = vld [vmem:[#allocation7 + $0x5a0] sm:$0xff]
    %v4046 = vld [vmem:[#allocation7 + $0x5a8] sm:$0xff]
    %v4047 = vld [vmem:[#allocation7 + $0x5b0] sm:$0xff]
    %v4048 = vld [vmem:[#allocation7 + $0x5b8] sm:$0xff]
    %v4049 = vld [vmem:[#allocation7 + $0x5c0] sm:$0xff]
    %v4050 = vld [vmem:[#allocation7 + $0x5c8] sm:$0xff]
    %v4051 = vld [vmem:[#allocation7 + $0x5d0] sm:$0xff]
    %v4052 = vld [vmem:[#allocation7 + $0x5d8] sm:$0xff]
    %v4053 = vld [vmem:[#allocation7 + $0x5e0] sm:$0xff]
    %v4054 = vld [vmem:[#allocation7 + $0x5e8] sm:$0xff]
    %v4055 = vld [vmem:[#allocation7 + $0x5f0] sm:$0xff]
    %v4056 = vld [vmem:[#allocation7 + $0x5f8] sm:$0xff]
    %v4057 = vld [vmem:[#allocation7 + $0x600] sm:$0xff]
    %v4058 = vld [vmem:[#allocation7 + $0x608] sm:$0xff]
    %v4059 = vld [vmem:[#allocation7 + $0x610] sm:$0xff]
    %v4060 = vld [vmem:[#allocation7 + $0x618] sm:$0xff]
    %v4061 = vld [vmem:[#allocation7 + $0x620] sm:$0xff]
    %v4062 = vld [vmem:[#allocation7 + $0x628] sm:$0xff]
    %v4063 = vld [vmem:[#allocation7 + $0x630] sm:$0xff]
    %v4064 = vld [vmem:[#allocation7 + $0x638] sm:$0xff]
    %v4065 = vld [vmem:[#allocation7 + $0x640] sm:$0xff]
    %v4066 = vld [vmem:[#allocation7 + $0x648] sm:$0xff]
    %v4067 = vld [vmem:[#allocation7 + $0x650] sm:$0xff]
    %v4068 = vld [vmem:[#allocation7 + $0x658] sm:$0xff]
    %v4069 = vld [vmem:[#allocation7 + $0x660] sm:$0xff]
    %v4070 = vld [vmem:[#allocation7 + $0x668] sm:$0xff]
    %v4071 = vld [vmem:[#allocation7 + $0x670] sm:$0xff]
    %v4072 = vld [vmem:[#allocation7 + $0x678] sm:$0xff]
    %v4073 = vld [vmem:[#allocation7 + $0x680] sm:$0xff]
    %v4074 = vld [vmem:[#allocation7 + $0x688] sm:$0xff]
    %v4075 = vld [vmem:[#allocation7 + $0x690] sm:$0xff]
    %v4076 = vld [vmem:[#allocation7 + $0x698] sm:$0xff]
    %v4077 = vld [vmem:[#allocation7 + $0x6a0] sm:$0xff]
    %v4078 = vld [vmem:[#allocation7 + $0x6a8] sm:$0xff]
    %v4079 = vld [vmem:[#allocation7 + $0x6b0] sm:$0xff]
    %v4080 = vld [vmem:[#allocation7 + $0x6b8] sm:$0xff]
    %v4081 = vld [vmem:[#allocation7 + $0x6c0] sm:$0xff]
    %v4082 = vld [vmem:[#allocation7 + $0x6c8] sm:$0xff]
    %v4083 = vld [vmem:[#allocation7 + $0x6d0] sm:$0xff]
    %v4084 = vld [vmem:[#allocation7 + $0x6d8] sm:$0xff]
    %v4085 = vld [vmem:[#allocation7 + $0x6e0] sm:$0xff]
    %v4086 = vld [vmem:[#allocation7 + $0x6e8] sm:$0xff]
    %v4087 = vld [vmem:[#allocation7 + $0x6f0] sm:$0xff]
    %v4088 = vld [vmem:[#allocation7 + $0x6f8] sm:$0xff]
    %v4089 = vld [vmem:[#allocation7 + $0x700] sm:$0xff]
    %v4090 = vld [vmem:[#allocation7 + $0x708] sm:$0xff]
    %v4091 = vld [vmem:[#allocation7 + $0x710] sm:$0xff]
    %v4092 = vld [vmem:[#allocation7 + $0x718] sm:$0xff]
    %v4093 = vld [vmem:[#allocation7 + $0x720] sm:$0xff]
    %v4094 = vld [vmem:[#allocation7 + $0x728] sm:$0xff]
    %v4095 = vld [vmem:[#allocation7 + $0x730] sm:$0xff]
    %v4096 = vld [vmem:[#allocation7 + $0x738] sm:$0xff]
    %v4097 = vld [vmem:[#allocation7 + $0x740] sm:$0xff]
    %v4098 = vld [vmem:[#allocation7 + $0x748] sm:$0xff]
    %v4099 = vld [vmem:[#allocation7 + $0x750] sm:$0xff]
    %v4100 = vld [vmem:[#allocation7 + $0x758] sm:$0xff]
    %v4101 = vld [vmem:[#allocation7 + $0x760] sm:$0xff]
    %v4102 = vld [vmem:[#allocation7 + $0x768] sm:$0xff]
    %v4103 = vld [vmem:[#allocation7 + $0x770] sm:$0xff]
    %v4104 = vld [vmem:[#allocation7 + $0x778] sm:$0xff]
    %v4105 = vld [vmem:[#allocation7 + $0x780] sm:$0xff]
    %v4106 = vld [vmem:[#allocation7 + $0x788] sm:$0xff]
    %v4107 = vld [vmem:[#allocation7 + $0x790] sm:$0xff]
    %v4108 = vld [vmem:[#allocation7 + $0x798] sm:$0xff]
    %v4109 = vld [vmem:[#allocation7 + $0x7a0] sm:$0xff]
    %v4110 = vld [vmem:[#allocation7 + $0x7a8] sm:$0xff]
    %v4111 = vld [vmem:[#allocation7 + $0x7b0] sm:$0xff]
    %v4112 = vld [vmem:[#allocation7 + $0x7b8] sm:$0xff]
    %v4113 = vld [vmem:[#allocation7 + $0x7c0] sm:$0xff]
    %v4114 = vld [vmem:[#allocation7 + $0x7c8] sm:$0xff]
    %v4115 = vld [vmem:[#allocation7 + $0x7d0] sm:$0xff]
    %v4116 = vld [vmem:[#allocation7 + $0x7d8] sm:$0xff]
    %v4117 = vld [vmem:[#allocation7 + $0x7e0] sm:$0xff]
    %v4118 = vld [vmem:[#allocation7 + $0x7e8] sm:$0xff]
    %v4119 = vld [vmem:[#allocation7 + $0x7f0] sm:$0xff]
    %v4120 = vld [vmem:[#allocation7 + $0x7f8] sm:$0xff]
    %v4121 = vld [vmem:[#allocation8] sm:$0xff]
    %v4122 = vld [vmem:[#allocation8 + $0x8] sm:$0xff]
    %v4123 = vld [vmem:[#allocation8 + $0x10] sm:$0xff]
    %v4124 = vld [vmem:[#allocation8 + $0x18] sm:$0xff]
    %v4125 = vld [vmem:[#allocation8 + $0x20] sm:$0xff]
    %v4126 = vld [vmem:[#allocation8 + $0x28] sm:$0xff]
    %v4127 = vld [vmem:[#allocation8 + $0x30] sm:$0xff]
    %v4128 = vld [vmem:[#allocation8 + $0x38] sm:$0xff]
    %v4385 = vunpack.c.l.b16 %v3865
    %v4386 = vunpack.c.h.b16 %v3865
    %v4387 = vunpack.c.l.b16 %v3866
    %v4388 = vunpack.c.h.b16 %v3866
    %v4389 = vunpack.c.l.b16 %v3867
    %v4390 = vunpack.c.h.b16 %v3867
    %v4391 = vunpack.c.l.b16 %v3868
    %v4392 = vunpack.c.h.b16 %v3868
    %v4393 = vunpack.c.l.b16 %v3869
    %v4394 = vunpack.c.h.b16 %v3869
    %v4395 = vunpack.c.l.b16 %v3870
    %v4396 = vunpack.c.h.b16 %v3870
    %v4397 = vunpack.c.l.b16 %v3871
    %v4398 = vunpack.c.h.b16 %v3871
    %v4399 = vunpack.c.l.b16 %v3872
    %v4400 = vunpack.c.h.b16 %v3872
    %v4401 = vunpack.c.l.b16 %v3873
    %v4402 = vunpack.c.h.b16 %v3873
    %v4403 = vunpack.c.l.b16 %v3874
    %v4404 = vunpack.c.h.b16 %v3874
    %v4405 = vunpack.c.l.b16 %v3875
    %v4406 = vunpack.c.h.b16 %v3875
    %v4407 = vunpack.c.l.b16 %v3876
    %v4408 = vunpack.c.h.b16 %v3876
    %v4409 = vunpack.c.l.b16 %v3877
    %v4410 = vunpack.c.h.b16 %v3877
    %v4411 = vunpack.c.l.b16 %v3878
    %v4412 = vunpack.c.h.b16 %v3878
    %v4413 = vunpack.c.l.b16 %v3879
    %v4414 = vunpack.c.h.b16 %v3879
    %v4415 = vunpack.c.l.b16 %v3880
    %v4416 = vunpack.c.h.b16 %v3880
    %v4417 = vunpack.c.l.b16 %v3881
    %v4418 = vunpack.c.h.b16 %v3881
    %v4419 = vunpack.c.l.b16 %v3882
    %v4420 = vunpack.c.h.b16 %v3882
    %v4421 = vunpack.c.l.b16 %v3883
    %v4422 = vunpack.c.h.b16 %v3883
    %v4423 = vunpack.c.l.b16 %v3884
    %v4424 = vunpack.c.h.b16 %v3884
    %v4425 = vunpack.c.l.b16 %v3885
    %v4426 = vunpack.c.h.b16 %v3885
    %v4427 = vunpack.c.l.b16 %v3886
    %v4428 = vunpack.c.h.b16 %v3886
    %v4429 = vunpack.c.l.b16 %v3887
    %v4430 = vunpack.c.h.b16 %v3887
    %v4431 = vunpack.c.l.b16 %v3888
    %v4432 = vunpack.c.h.b16 %v3888
    %v4433 = vunpack.c.l.b16 %v3889
    %v4434 = vunpack.c.h.b16 %v3889
    %v4435 = vunpack.c.l.b16 %v3890
    %v4436 = vunpack.c.h.b16 %v3890
    %v4437 = vunpack.c.l.b16 %v3891
    %v4438 = vunpack.c.h.b16 %v3891
    %v4439 = vunpack.c.l.b16 %v3892
    %v4440 = vunpack.c.h.b16 %v3892
    %v4441 = vunpack.c.l.b16 %v3893
    %v4442 = vunpack.c.h.b16 %v3893
    %v4443 = vunpack.c.l.b16 %v3894
    %v4444 = vunpack.c.h.b16 %v3894
    %v4445 = vunpack.c.l.b16 %v3895
    %v4446 = vunpack.c.h.b16 %v3895
    %v4447 = vunpack.c.l.b16 %v3896
    %v4448 = vunpack.c.h.b16 %v3896
    %v4449 = vunpack.c.l.b16 %v3897
    %v4450 = vunpack.c.h.b16 %v3897
    %v4451 = vunpack.c.l.b16 %v3898
    %v4452 = vunpack.c.h.b16 %v3898
    %v4453 = vunpack.c.l.b16 %v3899
    %v4454 = vunpack.c.h.b16 %v3899
    %v4455 = vunpack.c.l.b16 %v3900
    %v4456 = vunpack.c.h.b16 %v3900
    %v4457 = vunpack.c.l.b16 %v3901
    %v4458 = vunpack.c.h.b16 %v3901
    %v4459 = vunpack.c.l.b16 %v3902
    %v4460 = vunpack.c.h.b16 %v3902
    %v4461 = vunpack.c.l.b16 %v3903
    %v4462 = vunpack.c.h.b16 %v3903
    %v4463 = vunpack.c.l.b16 %v3904
    %v4464 = vunpack.c.h.b16 %v3904
    %v4465 = vunpack.c.l.b16 %v3905
    %v4466 = vunpack.c.h.b16 %v3905
    %v4467 = vunpack.c.l.b16 %v3906
    %v4468 = vunpack.c.h.b16 %v3906
    %v4469 = vunpack.c.l.b16 %v3907
    %v4470 = vunpack.c.h.b16 %v3907
    %v4471 = vunpack.c.l.b16 %v3908
    %v4472 = vunpack.c.h.b16 %v3908
    %v4473 = vunpack.c.l.b16 %v3909
    %v4474 = vunpack.c.h.b16 %v3909
    %v4475 = vunpack.c.l.b16 %v3910
    %v4476 = vunpack.c.h.b16 %v3910
    %v4477 = vunpack.c.l.b16 %v3911
    %v4478 = vunpack.c.h.b16 %v3911
    %v4479 = vunpack.c.l.b16 %v3912
    %v4480 = vunpack.c.h.b16 %v3912
    %v4481 = vunpack.c.l.b16 %v3913
    %v4482 = vunpack.c.h.b16 %v3913
    %v4483 = vunpack.c.l.b16 %v3914
    %v4484 = vunpack.c.h.b16 %v3914
    %v4485 = vunpack.c.l.b16 %v3915
    %v4486 = vunpack.c.h.b16 %v3915
    %v4487 = vunpack.c.l.b16 %v3916
    %v4488 = vunpack.c.h.b16 %v3916
    %v4489 = vunpack.c.l.b16 %v3917
    %v4490 = vunpack.c.h.b16 %v3917
    %v4491 = vunpack.c.l.b16 %v3918
    %v4492 = vunpack.c.h.b16 %v3918
    %v4493 = vunpack.c.l.b16 %v3919
    %v4494 = vunpack.c.h.b16 %v3919
    %v4495 = vunpack.c.l.b16 %v3920
    %v4496 = vunpack.c.h.b16 %v3920
    %v4497 = vunpack.c.l.b16 %v3921
    %v4498 = vunpack.c.h.b16 %v3921
    %v4499 = vunpack.c.l.b16 %v3922
    %v4500 = vunpack.c.h.b16 %v3922
    %v4501 = vunpack.c.l.b16 %v3923
    %v4502 = vunpack.c.h.b16 %v3923
    %v4503 = vunpack.c.l.b16 %v3924
    %v4504 = vunpack.c.h.b16 %v3924
    %v4505 = vunpack.c.l.b16 %v3925
    %v4506 = vunpack.c.h.b16 %v3925
    %v4507 = vunpack.c.l.b16 %v3926
    %v4508 = vunpack.c.h.b16 %v3926
    %v4509 = vunpack.c.l.b16 %v3927
    %v4510 = vunpack.c.h.b16 %v3927
    %v4511 = vunpack.c.l.b16 %v3928
    %v4512 = vunpack.c.h.b16 %v3928
    %v4513 = vunpack.c.l.b16 %v3929
    %v4514 = vunpack.c.h.b16 %v3929
    %v4515 = vunpack.c.l.b16 %v3930
    %v4516 = vunpack.c.h.b16 %v3930
    %v4517 = vunpack.c.l.b16 %v3931
    %v4518 = vunpack.c.h.b16 %v3931
    %v4519 = vunpack.c.l.b16 %v3932
    %v4520 = vunpack.c.h.b16 %v3932
    %v4521 = vunpack.c.l.b16 %v3933
    %v4522 = vunpack.c.h.b16 %v3933
    %v4523 = vunpack.c.l.b16 %v3934
    %v4524 = vunpack.c.h.b16 %v3934
    %v4525 = vunpack.c.l.b16 %v3935
    %v4526 = vunpack.c.h.b16 %v3935
    %v4527 = vunpack.c.l.b16 %v3936
    %v4528 = vunpack.c.h.b16 %v3936
    %v4529 = vunpack.c.l.b16 %v3937
    %v4530 = vunpack.c.h.b16 %v3937
    %v4531 = vunpack.c.l.b16 %v3938
    %v4532 = vunpack.c.h.b16 %v3938
    %v4533 = vunpack.c.l.b16 %v3939
    %v4534 = vunpack.c.h.b16 %v3939
    %v4535 = vunpack.c.l.b16 %v3940
    %v4536 = vunpack.c.h.b16 %v3940
    %v4537 = vunpack.c.l.b16 %v3941
    %v4538 = vunpack.c.h.b16 %v3941
    %v4539 = vunpack.c.l.b16 %v3942
    %v4540 = vunpack.c.h.b16 %v3942
    %v4541 = vunpack.c.l.b16 %v3943
    %v4542 = vunpack.c.h.b16 %v3943
    %v4543 = vunpack.c.l.b16 %v3944
    %v4544 = vunpack.c.h.b16 %v3944
    %v4545 = vunpack.c.l.b16 %v3945
    %v4546 = vunpack.c.h.b16 %v3945
    %v4547 = vunpack.c.l.b16 %v3946
    %v4548 = vunpack.c.h.b16 %v3946
    %v4549 = vunpack.c.l.b16 %v3947
    %v4550 = vunpack.c.h.b16 %v3947
    %v4551 = vunpack.c.l.b16 %v3948
    %v4552 = vunpack.c.h.b16 %v3948
    %v4553 = vunpack.c.l.b16 %v3949
    %v4554 = vunpack.c.h.b16 %v3949
    %v4555 = vunpack.c.l.b16 %v3950
    %v4556 = vunpack.c.h.b16 %v3950
    %v4557 = vunpack.c.l.b16 %v3951
    %v4558 = vunpack.c.h.b16 %v3951
    %v4559 = vunpack.c.l.b16 %v3952
    %v4560 = vunpack.c.h.b16 %v3952
    %v4561 = vunpack.c.l.b16 %v3953
    %v4562 = vunpack.c.h.b16 %v3953
    %v4563 = vunpack.c.l.b16 %v3954
    %v4564 = vunpack.c.h.b16 %v3954
    %v4565 = vunpack.c.l.b16 %v3955
    %v4566 = vunpack.c.h.b16 %v3955
    %v4567 = vunpack.c.l.b16 %v3956
    %v4568 = vunpack.c.h.b16 %v3956
    %v4569 = vunpack.c.l.b16 %v3957
    %v4570 = vunpack.c.h.b16 %v3957
    %v4571 = vunpack.c.l.b16 %v3958
    %v4572 = vunpack.c.h.b16 %v3958
    %v4573 = vunpack.c.l.b16 %v3959
    %v4574 = vunpack.c.h.b16 %v3959
    %v4575 = vunpack.c.l.b16 %v3960
    %v4576 = vunpack.c.h.b16 %v3960
    %v4577 = vunpack.c.l.b16 %v3961
    %v4578 = vunpack.c.h.b16 %v3961
    %v4579 = vunpack.c.l.b16 %v3962
    %v4580 = vunpack.c.h.b16 %v3962
    %v4581 = vunpack.c.l.b16 %v3963
    %v4582 = vunpack.c.h.b16 %v3963
    %v4583 = vunpack.c.l.b16 %v3964
    %v4584 = vunpack.c.h.b16 %v3964
    %v4585 = vunpack.c.l.b16 %v3965
    %v4586 = vunpack.c.h.b16 %v3965
    %v4587 = vunpack.c.l.b16 %v3966
    %v4588 = vunpack.c.h.b16 %v3966
    %v4589 = vunpack.c.l.b16 %v3967
    %v4590 = vunpack.c.h.b16 %v3967
    %v4591 = vunpack.c.l.b16 %v3968
    %v4592 = vunpack.c.h.b16 %v3968
    %v4593 = vunpack.c.l.b16 %v3969
    %v4594 = vunpack.c.h.b16 %v3969
    %v4595 = vunpack.c.l.b16 %v3970
    %v4596 = vunpack.c.h.b16 %v3970
    %v4597 = vunpack.c.l.b16 %v3971
    %v4598 = vunpack.c.h.b16 %v3971
    %v4599 = vunpack.c.l.b16 %v3972
    %v4600 = vunpack.c.h.b16 %v3972
    %v4601 = vunpack.c.l.b16 %v3973
    %v4602 = vunpack.c.h.b16 %v3973
    %v4603 = vunpack.c.l.b16 %v3974
    %v4604 = vunpack.c.h.b16 %v3974
    %v4605 = vunpack.c.l.b16 %v3975
    %v4606 = vunpack.c.h.b16 %v3975
    %v4607 = vunpack.c.l.b16 %v3976
    %v4608 = vunpack.c.h.b16 %v3976
    %v4609 = vunpack.c.l.b16 %v3977
    %v4610 = vunpack.c.h.b16 %v3977
    %v4611 = vunpack.c.l.b16 %v3978
    %v4612 = vunpack.c.h.b16 %v3978
    %v4613 = vunpack.c.l.b16 %v3979
    %v4614 = vunpack.c.h.b16 %v3979
    %v4615 = vunpack.c.l.b16 %v3980
    %v4616 = vunpack.c.h.b16 %v3980
    %v4617 = vunpack.c.l.b16 %v3981
    %v4618 = vunpack.c.h.b16 %v3981
    %v4619 = vunpack.c.l.b16 %v3982
    %v4620 = vunpack.c.h.b16 %v3982
    %v4621 = vunpack.c.l.b16 %v3983
    %v4622 = vunpack.c.h.b16 %v3983
    %v4623 = vunpack.c.l.b16 %v3984
    %v4624 = vunpack.c.h.b16 %v3984
    %v4625 = vunpack.c.l.b16 %v3985
    %v4626 = vunpack.c.h.b16 %v3985
    %v4627 = vunpack.c.l.b16 %v3986
    %v4628 = vunpack.c.h.b16 %v3986
    %v4629 = vunpack.c.l.b16 %v3987
    %v4630 = vunpack.c.h.b16 %v3987
    %v4631 = vunpack.c.l.b16 %v3988
    %v4632 = vunpack.c.h.b16 %v3988
    %v4633 = vunpack.c.l.b16 %v3989
    %v4634 = vunpack.c.h.b16 %v3989
    %v4635 = vunpack.c.l.b16 %v3990
    %v4636 = vunpack.c.h.b16 %v3990
    %v4637 = vunpack.c.l.b16 %v3991
    %v4638 = vunpack.c.h.b16 %v3991
    %v4639 = vunpack.c.l.b16 %v3992
    %v4640 = vunpack.c.h.b16 %v3992
    %v4641 = vunpack.c.l.b16 %v3993
    %v4642 = vunpack.c.h.b16 %v3993
    %v4643 = vunpack.c.l.b16 %v3994
    %v4644 = vunpack.c.h.b16 %v3994
    %v4645 = vunpack.c.l.b16 %v3995
    %v4646 = vunpack.c.h.b16 %v3995
    %v4647 = vunpack.c.l.b16 %v3996
    %v4648 = vunpack.c.h.b16 %v3996
    %v4649 = vunpack.c.l.b16 %v3997
    %v4650 = vunpack.c.h.b16 %v3997
    %v4651 = vunpack.c.l.b16 %v3998
    %v4652 = vunpack.c.h.b16 %v3998
    %v4653 = vunpack.c.l.b16 %v3999
    %v4654 = vunpack.c.h.b16 %v3999
    %v4655 = vunpack.c.l.b16 %v4000
    %v4656 = vunpack.c.h.b16 %v4000
    %v4657 = vunpack.c.l.b16 %v4001
    %v4658 = vunpack.c.h.b16 %v4001
    %v4659 = vunpack.c.l.b16 %v4002
    %v4660 = vunpack.c.h.b16 %v4002
    %v4661 = vunpack.c.l.b16 %v4003
    %v4662 = vunpack.c.h.b16 %v4003
    %v4663 = vunpack.c.l.b16 %v4004
    %v4664 = vunpack.c.h.b16 %v4004
    %v4665 = vunpack.c.l.b16 %v4005
    %v4666 = vunpack.c.h.b16 %v4005
    %v4667 = vunpack.c.l.b16 %v4006
    %v4668 = vunpack.c.h.b16 %v4006
    %v4669 = vunpack.c.l.b16 %v4007
    %v4670 = vunpack.c.h.b16 %v4007
    %v4671 = vunpack.c.l.b16 %v4008
    %v4672 = vunpack.c.h.b16 %v4008
    %v4673 = vunpack.c.l.b16 %v4009
    %v4674 = vunpack.c.h.b16 %v4009
    %v4675 = vunpack.c.l.b16 %v4010
    %v4676 = vunpack.c.h.b16 %v4010
    %v4677 = vunpack.c.l.b16 %v4011
    %v4678 = vunpack.c.h.b16 %v4011
    %v4679 = vunpack.c.l.b16 %v4012
    %v4680 = vunpack.c.h.b16 %v4012
    %v4681 = vunpack.c.l.b16 %v4013
    %v4682 = vunpack.c.h.b16 %v4013
    %v4683 = vunpack.c.l.b16 %v4014
    %v4684 = vunpack.c.h.b16 %v4014
    %v4685 = vunpack.c.l.b16 %v4015
    %v4686 = vunpack.c.h.b16 %v4015
    %v4687 = vunpack.c.l.b16 %v4016
    %v4688 = vunpack.c.h.b16 %v4016
    %v4689 = vunpack.c.l.b16 %v4017
    %v4690 = vunpack.c.h.b16 %v4017
    %v4691 = vunpack.c.l.b16 %v4018
    %v4692 = vunpack.c.h.b16 %v4018
    %v4693 = vunpack.c.l.b16 %v4019
    %v4694 = vunpack.c.h.b16 %v4019
    %v4695 = vunpack.c.l.b16 %v4020
    %v4696 = vunpack.c.h.b16 %v4020
    %v4697 = vunpack.c.l.b16 %v4021
    %v4698 = vunpack.c.h.b16 %v4021
    %v4699 = vunpack.c.l.b16 %v4022
    %v4700 = vunpack.c.h.b16 %v4022
    %v4701 = vunpack.c.l.b16 %v4023
    %v4702 = vunpack.c.h.b16 %v4023
    %v4703 = vunpack.c.l.b16 %v4024
    %v4704 = vunpack.c.h.b16 %v4024
    %v4705 = vunpack.c.l.b16 %v4025
    %v4706 = vunpack.c.h.b16 %v4025
    %v4707 = vunpack.c.l.b16 %v4026
    %v4708 = vunpack.c.h.b16 %v4026
    %v4709 = vunpack.c.l.b16 %v4027
    %v4710 = vunpack.c.h.b16 %v4027
    %v4711 = vunpack.c.l.b16 %v4028
    %v4712 = vunpack.c.h.b16 %v4028
    %v4713 = vunpack.c.l.b16 %v4029
    %v4714 = vunpack.c.h.b16 %v4029
    %v4715 = vunpack.c.l.b16 %v4030
    %v4716 = vunpack.c.h.b16 %v4030
    %v4717 = vunpack.c.l.b16 %v4031
    %v4718 = vunpack.c.h.b16 %v4031
    %v4719 = vunpack.c.l.b16 %v4032
    %v4720 = vunpack.c.h.b16 %v4032
    %v4721 = vunpack.c.l.b16 %v4033
    %v4722 = vunpack.c.h.b16 %v4033
    %v4723 = vunpack.c.l.b16 %v4034
    %v4724 = vunpack.c.h.b16 %v4034
    %v4725 = vunpack.c.l.b16 %v4035
    %v4726 = vunpack.c.h.b16 %v4035
    %v4727 = vunpack.c.l.b16 %v4036
    %v4728 = vunpack.c.h.b16 %v4036
    %v4729 = vunpack.c.l.b16 %v4037
    %v4730 = vunpack.c.h.b16 %v4037
    %v4731 = vunpack.c.l.b16 %v4038
    %v4732 = vunpack.c.h.b16 %v4038
    %v4733 = vunpack.c.l.b16 %v4039
    %v4734 = vunpack.c.h.b16 %v4039
    %v4735 = vunpack.c.l.b16 %v4040
    %v4736 = vunpack.c.h.b16 %v4040
    %v4737 = vunpack.c.l.b16 %v4041
    %v4738 = vunpack.c.h.b16 %v4041
    %v4739 = vunpack.c.l.b16 %v4042
    %v4740 = vunpack.c.h.b16 %v4042
    %v4741 = vunpack.c.l.b16 %v4043
    %v4742 = vunpack.c.h.b16 %v4043
    %v4743 = vunpack.c.l.b16 %v4044
    %v4744 = vunpack.c.h.b16 %v4044
    %v4745 = vunpack.c.l.b16 %v4045
    %v4746 = vunpack.c.h.b16 %v4045
    %v4747 = vunpack.c.l.b16 %v4046
    %v4748 = vunpack.c.h.b16 %v4046
    %v4749 = vunpack.c.l.b16 %v4047
    %v4750 = vunpack.c.h.b16 %v4047
    %v4751 = vunpack.c.l.b16 %v4048
    %v4752 = vunpack.c.h.b16 %v4048
    %v4753 = vunpack.c.l.b16 %v4049
    %v4754 = vunpack.c.h.b16 %v4049
    %v4755 = vunpack.c.l.b16 %v4050
    %v4756 = vunpack.c.h.b16 %v4050
    %v4757 = vunpack.c.l.b16 %v4051
    %v4758 = vunpack.c.h.b16 %v4051
    %v4759 = vunpack.c.l.b16 %v4052
    %v4760 = vunpack.c.h.b16 %v4052
    %v4761 = vunpack.c.l.b16 %v4053
    %v4762 = vunpack.c.h.b16 %v4053
    %v4763 = vunpack.c.l.b16 %v4054
    %v4764 = vunpack.c.h.b16 %v4054
    %v4765 = vunpack.c.l.b16 %v4055
    %v4766 = vunpack.c.h.b16 %v4055
    %v4767 = vunpack.c.l.b16 %v4056
    %v4768 = vunpack.c.h.b16 %v4056
    %v4769 = vunpack.c.l.b16 %v4057
    %v4770 = vunpack.c.h.b16 %v4057
    %v4771 = vunpack.c.l.b16 %v4058
    %v4772 = vunpack.c.h.b16 %v4058
    %v4773 = vunpack.c.l.b16 %v4059
    %v4774 = vunpack.c.h.b16 %v4059
    %v4775 = vunpack.c.l.b16 %v4060
    %v4776 = vunpack.c.h.b16 %v4060
    %v4777 = vunpack.c.l.b16 %v4061
    %v4778 = vunpack.c.h.b16 %v4061
    %v4779 = vunpack.c.l.b16 %v4062
    %v4780 = vunpack.c.h.b16 %v4062
    %v4781 = vunpack.c.l.b16 %v4063
    %v4782 = vunpack.c.h.b16 %v4063
    %v4783 = vunpack.c.l.b16 %v4064
    %v4784 = vunpack.c.h.b16 %v4064
    %v4785 = vunpack.c.l.b16 %v4065
    %v4786 = vunpack.c.h.b16 %v4065
    %v4787 = vunpack.c.l.b16 %v4066
    %v4788 = vunpack.c.h.b16 %v4066
    %v4789 = vunpack.c.l.b16 %v4067
    %v4790 = vunpack.c.h.b16 %v4067
    %v4791 = vunpack.c.l.b16 %v4068
    %v4792 = vunpack.c.h.b16 %v4068
    %v4793 = vunpack.c.l.b16 %v4069
    %v4794 = vunpack.c.h.b16 %v4069
    %v4795 = vunpack.c.l.b16 %v4070
    %v4796 = vunpack.c.h.b16 %v4070
    %v4797 = vunpack.c.l.b16 %v4071
    %v4798 = vunpack.c.h.b16 %v4071
    %v4799 = vunpack.c.l.b16 %v4072
    %v4800 = vunpack.c.h.b16 %v4072
    %v4801 = vunpack.c.l.b16 %v4073
    %v4802 = vunpack.c.h.b16 %v4073
    %v4803 = vunpack.c.l.b16 %v4074
    %v4804 = vunpack.c.h.b16 %v4074
    %v4805 = vunpack.c.l.b16 %v4075
    %v4806 = vunpack.c.h.b16 %v4075
    %v4807 = vunpack.c.l.b16 %v4076
    %v4808 = vunpack.c.h.b16 %v4076
    %v4809 = vunpack.c.l.b16 %v4077
    %v4810 = vunpack.c.h.b16 %v4077
    %v4811 = vunpack.c.l.b16 %v4078
    %v4812 = vunpack.c.h.b16 %v4078
    %v4813 = vunpack.c.l.b16 %v4079
    %v4814 = vunpack.c.h.b16 %v4079
    %v4815 = vunpack.c.l.b16 %v4080
    %v4816 = vunpack.c.h.b16 %v4080
    %v4817 = vunpack.c.l.b16 %v4081
    %v4818 = vunpack.c.h.b16 %v4081
    %v4819 = vunpack.c.l.b16 %v4082
    %v4820 = vunpack.c.h.b16 %v4082
    %v4821 = vunpack.c.l.b16 %v4083
    %v4822 = vunpack.c.h.b16 %v4083
    %v4823 = vunpack.c.l.b16 %v4084
    %v4824 = vunpack.c.h.b16 %v4084
    %v4825 = vunpack.c.l.b16 %v4085
    %v4826 = vunpack.c.h.b16 %v4085
    %v4827 = vunpack.c.l.b16 %v4086
    %v4828 = vunpack.c.h.b16 %v4086
    %v4829 = vunpack.c.l.b16 %v4087
    %v4830 = vunpack.c.h.b16 %v4087
    %v4831 = vunpack.c.l.b16 %v4088
    %v4832 = vunpack.c.h.b16 %v4088
    %v4833 = vunpack.c.l.b16 %v4089
    %v4834 = vunpack.c.h.b16 %v4089
    %v4835 = vunpack.c.l.b16 %v4090
    %v4836 = vunpack.c.h.b16 %v4090
    %v4837 = vunpack.c.l.b16 %v4091
    %v4838 = vunpack.c.h.b16 %v4091
    %v4839 = vunpack.c.l.b16 %v4092
    %v4840 = vunpack.c.h.b16 %v4092
    %v4841 = vunpack.c.l.b16 %v4093
    %v4842 = vunpack.c.h.b16 %v4093
    %v4843 = vunpack.c.l.b16 %v4094
    %v4844 = vunpack.c.h.b16 %v4094
    %v4845 = vunpack.c.l.b16 %v4095
    %v4846 = vunpack.c.h.b16 %v4095
    %v4847 = vunpack.c.l.b16 %v4096
    %v4848 = vunpack.c.h.b16 %v4096
    %v4849 = vunpack.c.l.b16 %v4097
    %v4850 = vunpack.c.h.b16 %v4097
    %v4851 = vunpack.c.l.b16 %v4098
    %v4852 = vunpack.c.h.b16 %v4098
    %v4853 = vunpack.c.l.b16 %v4099
    %v4854 = vunpack.c.h.b16 %v4099
    %v4855 = vunpack.c.l.b16 %v4100
    %v4856 = vunpack.c.h.b16 %v4100
    %v4857 = vunpack.c.l.b16 %v4101
    %v4858 = vunpack.c.h.b16 %v4101
    %v4859 = vunpack.c.l.b16 %v4102
    %v4860 = vunpack.c.h.b16 %v4102
    %v4861 = vunpack.c.l.b16 %v4103
    %v4862 = vunpack.c.h.b16 %v4103
    %v4863 = vunpack.c.l.b16 %v4104
    %v4864 = vunpack.c.h.b16 %v4104
    %v4865 = vunpack.c.l.b16 %v4105
    %v4866 = vunpack.c.h.b16 %v4105
    %v4867 = vunpack.c.l.b16 %v4106
    %v4868 = vunpack.c.h.b16 %v4106
    %v4869 = vunpack.c.l.b16 %v4107
    %v4870 = vunpack.c.h.b16 %v4107
    %v4871 = vunpack.c.l.b16 %v4108
    %v4872 = vunpack.c.h.b16 %v4108
    %v4873 = vunpack.c.l.b16 %v4109
    %v4874 = vunpack.c.h.b16 %v4109
    %v4875 = vunpack.c.l.b16 %v4110
    %v4876 = vunpack.c.h.b16 %v4110
    %v4877 = vunpack.c.l.b16 %v4111
    %v4878 = vunpack.c.h.b16 %v4111
    %v4879 = vunpack.c.l.b16 %v4112
    %v4880 = vunpack.c.h.b16 %v4112
    %v4881 = vunpack.c.l.b16 %v4113
    %v4882 = vunpack.c.h.b16 %v4113
    %v4883 = vunpack.c.l.b16 %v4114
    %v4884 = vunpack.c.h.b16 %v4114
    %v4885 = vunpack.c.l.b16 %v4115
    %v4886 = vunpack.c.h.b16 %v4115
    %v4887 = vunpack.c.l.b16 %v4116
    %v4888 = vunpack.c.h.b16 %v4116
    %v4889 = vunpack.c.l.b16 %v4117
    %v4890 = vunpack.c.h.b16 %v4117
    %v4891 = vunpack.c.l.b16 %v4118
    %v4892 = vunpack.c.h.b16 %v4118
    %v4893 = vunpack.c.l.b16 %v4119
    %v4894 = vunpack.c.h.b16 %v4119
    %v4895 = vunpack.c.l.b16 %v4120
    %v4896 = vunpack.c.h.b16 %v4120
    %v4897 = vpack.c.b16 %v4389, %v4385
    %v4898 = vpack.c.b16 %v4390, %v4386
    %v4899 = vpack.c.b16 %v4391, %v4387
    %v4900 = vpack.c.b16 %v4392, %v4388
    %v4901 = vpack.c.b16 %v4397, %v4393
    %v4902 = vpack.c.b16 %v4398, %v4394
    %v4903 = vpack.c.b16 %v4399, %v4395
    %v4904 = vpack.c.b16 %v4400, %v4396
    %v4905 = vpack.c.b16 %v4405, %v4401
    %v4906 = vpack.c.b16 %v4406, %v4402
    %v4907 = vpack.c.b16 %v4407, %v4403
    %v4908 = vpack.c.b16 %v4408, %v4404
    %v4909 = vpack.c.b16 %v4413, %v4409
    %v4910 = vpack.c.b16 %v4414, %v4410
    %v4911 = vpack.c.b16 %v4415, %v4411
    %v4912 = vpack.c.b16 %v4416, %v4412
    %v4913 = vpack.c.b16 %v4421, %v4417
    %v4914 = vpack.c.b16 %v4422, %v4418
    %v4915 = vpack.c.b16 %v4423, %v4419
    %v4916 = vpack.c.b16 %v4424, %v4420
    %v4917 = vpack.c.b16 %v4429, %v4425
    %v4918 = vpack.c.b16 %v4430, %v4426
    %v4919 = vpack.c.b16 %v4431, %v4427
    %v4920 = vpack.c.b16 %v4432, %v4428
    %v4921 = vpack.c.b16 %v4437, %v4433
    %v4922 = vpack.c.b16 %v4438, %v4434
    %v4923 = vpack.c.b16 %v4439, %v4435
    %v4924 = vpack.c.b16 %v4440, %v4436
    %v4925 = vpack.c.b16 %v4445, %v4441
    %v4926 = vpack.c.b16 %v4446, %v4442
    %v4927 = vpack.c.b16 %v4447, %v4443
    %v4928 = vpack.c.b16 %v4448, %v4444
    %v4929 = vpack.c.b16 %v4453, %v4449
    %v4930 = vpack.c.b16 %v4454, %v4450
    %v4931 = vpack.c.b16 %v4455, %v4451
    %v4932 = vpack.c.b16 %v4456, %v4452
    %v4933 = vpack.c.b16 %v4461, %v4457
    %v4934 = vpack.c.b16 %v4462, %v4458
    %v4935 = vpack.c.b16 %v4463, %v4459
    %v4936 = vpack.c.b16 %v4464, %v4460
    %v4937 = vpack.c.b16 %v4469, %v4465
    %v4938 = vpack.c.b16 %v4470, %v4466
    %v4939 = vpack.c.b16 %v4471, %v4467
    %v4940 = vpack.c.b16 %v4472, %v4468
    %v4941 = vpack.c.b16 %v4477, %v4473
    %v4942 = vpack.c.b16 %v4478, %v4474
    %v4943 = vpack.c.b16 %v4479, %v4475
    %v4944 = vpack.c.b16 %v4480, %v4476
    %v4945 = vpack.c.b16 %v4485, %v4481
    %v4946 = vpack.c.b16 %v4486, %v4482
    %v4947 = vpack.c.b16 %v4487, %v4483
    %v4948 = vpack.c.b16 %v4488, %v4484
    %v4949 = vpack.c.b16 %v4493, %v4489
    %v4950 = vpack.c.b16 %v4494, %v4490
    %v4951 = vpack.c.b16 %v4495, %v4491
    %v4952 = vpack.c.b16 %v4496, %v4492
    %v4953 = vpack.c.b16 %v4501, %v4497
    %v4954 = vpack.c.b16 %v4502, %v4498
    %v4955 = vpack.c.b16 %v4503, %v4499
    %v4956 = vpack.c.b16 %v4504, %v4500
    %v4957 = vpack.c.b16 %v4509, %v4505
    %v4958 = vpack.c.b16 %v4510, %v4506
    %v4959 = vpack.c.b16 %v4511, %v4507
    %v4960 = vpack.c.b16 %v4512, %v4508
    %v4961 = vpack.c.b16 %v4517, %v4513
    %v4962 = vpack.c.b16 %v4518, %v4514
    %v4963 = vpack.c.b16 %v4519, %v4515
    %v4964 = vpack.c.b16 %v4520, %v4516
    %v4965 = vpack.c.b16 %v4525, %v4521
    %v4966 = vpack.c.b16 %v4526, %v4522
    %v4967 = vpack.c.b16 %v4527, %v4523
    %v4968 = vpack.c.b16 %v4528, %v4524
    %v4969 = vpack.c.b16 %v4533, %v4529
    %v4970 = vpack.c.b16 %v4534, %v4530
    %v4971 = vpack.c.b16 %v4535, %v4531
    %v4972 = vpack.c.b16 %v4536, %v4532
    %v4973 = vpack.c.b16 %v4541, %v4537
    %v4974 = vpack.c.b16 %v4542, %v4538
    %v4975 = vpack.c.b16 %v4543, %v4539
    %v4976 = vpack.c.b16 %v4544, %v4540
    %v4977 = vpack.c.b16 %v4549, %v4545
    %v4978 = vpack.c.b16 %v4550, %v4546
    %v4979 = vpack.c.b16 %v4551, %v4547
    %v4980 = vpack.c.b16 %v4552, %v4548
    %v4981 = vpack.c.b16 %v4557, %v4553
    %v4982 = vpack.c.b16 %v4558, %v4554
    %v4983 = vpack.c.b16 %v4559, %v4555
    %v4984 = vpack.c.b16 %v4560, %v4556
    %v4985 = vpack.c.b16 %v4565, %v4561
    %v4986 = vpack.c.b16 %v4566, %v4562
    %v4987 = vpack.c.b16 %v4567, %v4563
    %v4988 = vpack.c.b16 %v4568, %v4564
    %v4989 = vpack.c.b16 %v4573, %v4569
    %v4990 = vpack.c.b16 %v4574, %v4570
    %v4991 = vpack.c.b16 %v4575, %v4571
    %v4992 = vpack.c.b16 %v4576, %v4572
    %v4993 = vpack.c.b16 %v4581, %v4577
    %v4994 = vpack.c.b16 %v4582, %v4578
    %v4995 = vpack.c.b16 %v4583, %v4579
    %v4996 = vpack.c.b16 %v4584, %v4580
    %v4997 = vpack.c.b16 %v4589, %v4585
    %v4998 = vpack.c.b16 %v4590, %v4586
    %v4999 = vpack.c.b16 %v4591, %v4587
    %v5000 = vpack.c.b16 %v4592, %v4588
    %v5001 = vpack.c.b16 %v4597, %v4593
    %v5002 = vpack.c.b16 %v4598, %v4594
    %v5003 = vpack.c.b16 %v4599, %v4595
    %v5004 = vpack.c.b16 %v4600, %v4596
    %v5005 = vpack.c.b16 %v4605, %v4601
    %v5006 = vpack.c.b16 %v4606, %v4602
    %v5007 = vpack.c.b16 %v4607, %v4603
    %v5008 = vpack.c.b16 %v4608, %v4604
    %v5009 = vpack.c.b16 %v4613, %v4609
    %v5010 = vpack.c.b16 %v4614, %v4610
    %v5011 = vpack.c.b16 %v4615, %v4611
    %v5012 = vpack.c.b16 %v4616, %v4612
    %v5013 = vpack.c.b16 %v4621, %v4617
    %v5014 = vpack.c.b16 %v4622, %v4618
    %v5015 = vpack.c.b16 %v4623, %v4619
    %v5016 = vpack.c.b16 %v4624, %v4620
    %v5017 = vpack.c.b16 %v4629, %v4625
    %v5018 = vpack.c.b16 %v4630, %v4626
    %v5019 = vpack.c.b16 %v4631, %v4627
    %v5020 = vpack.c.b16 %v4632, %v4628
    %v5021 = vpack.c.b16 %v4637, %v4633
    %v5022 = vpack.c.b16 %v4638, %v4634
    %v5023 = vpack.c.b16 %v4639, %v4635
    %v5024 = vpack.c.b16 %v4640, %v4636
    %v5025 = vpack.c.b16 %v4645, %v4641
    %v5026 = vpack.c.b16 %v4646, %v4642
    %v5027 = vpack.c.b16 %v4647, %v4643
    %v5028 = vpack.c.b16 %v4648, %v4644
    %v5029 = vpack.c.b16 %v4653, %v4649
    %v5030 = vpack.c.b16 %v4654, %v4650
    %v5031 = vpack.c.b16 %v4655, %v4651
    %v5032 = vpack.c.b16 %v4656, %v4652
    %v5033 = vpack.c.b16 %v4661, %v4657
    %v5034 = vpack.c.b16 %v4662, %v4658
    %v5035 = vpack.c.b16 %v4663, %v4659
    %v5036 = vpack.c.b16 %v4664, %v4660
    %v5037 = vpack.c.b16 %v4669, %v4665
    %v5038 = vpack.c.b16 %v4670, %v4666
    %v5039 = vpack.c.b16 %v4671, %v4667
    %v5040 = vpack.c.b16 %v4672, %v4668
    %v5041 = vpack.c.b16 %v4677, %v4673
    %v5042 = vpack.c.b16 %v4678, %v4674
    %v5043 = vpack.c.b16 %v4679, %v4675
    %v5044 = vpack.c.b16 %v4680, %v4676
    %v5045 = vpack.c.b16 %v4685, %v4681
    %v5046 = vpack.c.b16 %v4686, %v4682
    %v5047 = vpack.c.b16 %v4687, %v4683
    %v5048 = vpack.c.b16 %v4688, %v4684
    %v5049 = vpack.c.b16 %v4693, %v4689
    %v5050 = vpack.c.b16 %v4694, %v4690
    %v5051 = vpack.c.b16 %v4695, %v4691
    %v5052 = vpack.c.b16 %v4696, %v4692
    %v5053 = vpack.c.b16 %v4701, %v4697
    %v5054 = vpack.c.b16 %v4702, %v4698
    %v5055 = vpack.c.b16 %v4703, %v4699
    %v5056 = vpack.c.b16 %v4704, %v4700
    %v5057 = vpack.c.b16 %v4709, %v4705
    %v5058 = vpack.c.b16 %v4710, %v4706
    %v5059 = vpack.c.b16 %v4711, %v4707
    %v5060 = vpack.c.b16 %v4712, %v4708
    %v5061 = vpack.c.b16 %v4717, %v4713
    %v5062 = vpack.c.b16 %v4718, %v4714
    %v5063 = vpack.c.b16 %v4719, %v4715
    %v5064 = vpack.c.b16 %v4720, %v4716
    %v5065 = vpack.c.b16 %v4725, %v4721
    %v5066 = vpack.c.b16 %v4726, %v4722
    %v5067 = vpack.c.b16 %v4727, %v4723
    %v5068 = vpack.c.b16 %v4728, %v4724
    %v5069 = vpack.c.b16 %v4733, %v4729
    %v5070 = vpack.c.b16 %v4734, %v4730
    %v5071 = vpack.c.b16 %v4735, %v4731
    %v5072 = vpack.c.b16 %v4736, %v4732
    %v5073 = vpack.c.b16 %v4741, %v4737
    %v5074 = vpack.c.b16 %v4742, %v4738
    %v5075 = vpack.c.b16 %v4743, %v4739
    %v5076 = vpack.c.b16 %v4744, %v4740
    %v5077 = vpack.c.b16 %v4749, %v4745
    %v5078 = vpack.c.b16 %v4750, %v4746
    %v5079 = vpack.c.b16 %v4751, %v4747
    %v5080 = vpack.c.b16 %v4752, %v4748
    %v5081 = vpack.c.b16 %v4757, %v4753
    %v5082 = vpack.c.b16 %v4758, %v4754
    %v5083 = vpack.c.b16 %v4759, %v4755
    %v5084 = vpack.c.b16 %v4760, %v4756
    %v5085 = vpack.c.b16 %v4765, %v4761
    %v5086 = vpack.c.b16 %v4766, %v4762
    %v5087 = vpack.c.b16 %v4767, %v4763
    %v5088 = vpack.c.b16 %v4768, %v4764
    %v5089 = vpack.c.b16 %v4773, %v4769
    %v5090 = vpack.c.b16 %v4774, %v4770
    %v5091 = vpack.c.b16 %v4775, %v4771
    %v5092 = vpack.c.b16 %v4776, %v4772
    %v5093 = vpack.c.b16 %v4781, %v4777
    %v5094 = vpack.c.b16 %v4782, %v4778
    %v5095 = vpack.c.b16 %v4783, %v4779
    %v5096 = vpack.c.b16 %v4784, %v4780
    %v5097 = vpack.c.b16 %v4789, %v4785
    %v5098 = vpack.c.b16 %v4790, %v4786
    %v5099 = vpack.c.b16 %v4791, %v4787
    %v5100 = vpack.c.b16 %v4792, %v4788
    %v5101 = vpack.c.b16 %v4797, %v4793
    %v5102 = vpack.c.b16 %v4798, %v4794
    %v5103 = vpack.c.b16 %v4799, %v4795
    %v5104 = vpack.c.b16 %v4800, %v4796
    %v5105 = vpack.c.b16 %v4805, %v4801
    %v5106 = vpack.c.b16 %v4806, %v4802
    %v5107 = vpack.c.b16 %v4807, %v4803
    %v5108 = vpack.c.b16 %v4808, %v4804
    %v5109 = vpack.c.b16 %v4813, %v4809
    %v5110 = vpack.c.b16 %v4814, %v4810
    %v5111 = vpack.c.b16 %v4815, %v4811
    %v5112 = vpack.c.b16 %v4816, %v4812
    %v5113 = vpack.c.b16 %v4821, %v4817
    %v5114 = vpack.c.b16 %v4822, %v4818
    %v5115 = vpack.c.b16 %v4823, %v4819
    %v5116 = vpack.c.b16 %v4824, %v4820
    %v5117 = vpack.c.b16 %v4829, %v4825
    %v5118 = vpack.c.b16 %v4830, %v4826
    %v5119 = vpack.c.b16 %v4831, %v4827
    %v5120 = vpack.c.b16 %v4832, %v4828
    %v5121 = vpack.c.b16 %v4837, %v4833
    %v5122 = vpack.c.b16 %v4838, %v4834
    %v5123 = vpack.c.b16 %v4839, %v4835
    %v5124 = vpack.c.b16 %v4840, %v4836
    %v5125 = vpack.c.b16 %v4845, %v4841
    %v5126 = vpack.c.b16 %v4846, %v4842
    %v5127 = vpack.c.b16 %v4847, %v4843
    %v5128 = vpack.c.b16 %v4848, %v4844
    %v5129 = vpack.c.b16 %v4853, %v4849
    %v5130 = vpack.c.b16 %v4854, %v4850
    %v5131 = vpack.c.b16 %v4855, %v4851
    %v5132 = vpack.c.b16 %v4856, %v4852
    %v5133 = vpack.c.b16 %v4861, %v4857
    %v5134 = vpack.c.b16 %v4862, %v4858
    %v5135 = vpack.c.b16 %v4863, %v4859
    %v5136 = vpack.c.b16 %v4864, %v4860
    %v5137 = vpack.c.b16 %v4869, %v4865
    %v5138 = vpack.c.b16 %v4870, %v4866
    %v5139 = vpack.c.b16 %v4871, %v4867
    %v5140 = vpack.c.b16 %v4872, %v4868
    %v5141 = vpack.c.b16 %v4877, %v4873
    %v5142 = vpack.c.b16 %v4878, %v4874
    %v5143 = vpack.c.b16 %v4879, %v4875
    %v5144 = vpack.c.b16 %v4880, %v4876
    %v5145 = vpack.c.b16 %v4885, %v4881
    %v5146 = vpack.c.b16 %v4886, %v4882
    %v5147 = vpack.c.b16 %v4887, %v4883
    %v5148 = vpack.c.b16 %v4888, %v4884
    %v5149 = vpack.c.b16 %v4893, %v4889
    %v5150 = vpack.c.b16 %v4894, %v4890
    %v5151 = vpack.c.b16 %v4895, %v4891
    %v5152 = vpack.c.b16 %v4896, %v4892
    %5409 = vmatprep.subr.bf16.mxu0 %v4926
    %5410 = vmatpush1.bf16.msra.mxu0 %v4925
    %5411 = vmatprep.subr.bf16.mxu0 %v4922
    %5412 = vmatpush1.bf16.msra.mxu0 %v4921
    %5413 = vmatprep.subr.bf16.mxu0 %v4918
    %5414 = vmatpush1.bf16.msra.mxu0 %v4917
    %5415 = vmatprep.subr.bf16.mxu0 %v4914
    %5416 = vmatpush1.bf16.msra.mxu0 %v4913
    %5417 = vmatprep.subr.bf16.mxu0 %v4910
    %5418 = vmatpush1.bf16.msra.mxu0 %v4909
    %5419 = vmatprep.subr.bf16.mxu0 %v4906
    %5420 = vmatpush1.bf16.msra.mxu0 %v4905
    %5421 = vmatprep.subr.bf16.mxu0 %v4902
    %5422 = vmatpush1.bf16.msra.mxu0 %v4901
    %5423 = vmatprep.subr.bf16.mxu0 %v4898
    %5424 = vmatpush1.bf16.msra.mxu0 %v4897
    %5425 = vmatprep.subr.bf16.mxu0 %v4958
    %5426 = vmatpush2.bf16.msra.mxu0 %v4957
    %5427 = vmatprep.subr.bf16.mxu0 %v4954
    %5428 = vmatpush2.bf16.msra.mxu0 %v4953
    %5429 = vmatprep.subr.bf16.mxu0 %v4950
    %5430 = vmatpush2.bf16.msra.mxu0 %v4949
    %5431 = vmatprep.subr.bf16.mxu0 %v4946
    %5432 = vmatpush2.bf16.msra.mxu0 %v4945
    %5433 = vmatprep.subr.bf16.mxu0 %v4942
    %5434 = vmatpush2.bf16.msra.mxu0 %v4941
    %5435 = vmatprep.subr.bf16.mxu0 %v4938
    %5436 = vmatpush2.bf16.msra.mxu0 %v4937
    %5437 = vmatprep.subr.bf16.mxu0 %v4934
    %5438 = vmatpush2.bf16.msra.mxu0 %v4933
    %5439 = vmatprep.subr.bf16.mxu0 %v4930
    %5440 = vmatpush2.bf16.msra.mxu0 %v4929
    %5441 = vmatprep.mubr.bf16.mxu0 %v3858
    %5442 = vmatmul.mubr.bf16.gmra.mxu0 %v3857
    %v5443 = vpop.f32.mrf.mxu0
    %v5444 = vadd.f32 %v4121, %v5443
    %v5445 = vpop.f32.mrf.mxu0
    %v5446 = vadd.f32 %v4122, %v5445
    %v5447 = vpop.f32.mrf.mxu0
    %v5448 = vadd.f32 %v4125, %v5447
    %v5449 = vpop.f32.mrf.mxu0
    %v5450 = vadd.f32 %v4126, %v5449
    %5451 = vdwg.mxu0
    %5452 = vmatprep.subr.bf16.mxu0 %v4990
    %5453 = vmatpush1.bf16.msra.mxu0 %v4989
    %5454 = vmatprep.subr.bf16.mxu0 %v4986
    %5455 = vmatpush1.bf16.msra.mxu0 %v4985
    %5456 = vmatprep.subr.bf16.mxu0 %v4982
    %5457 = vmatpush1.bf16.msra.mxu0 %v4981
    %5458 = vmatprep.subr.bf16.mxu0 %v4978
    %5459 = vmatpush1.bf16.msra.mxu0 %v4977
    %5460 = vmatprep.subr.bf16.mxu0 %v4974
    %5461 = vmatpush1.bf16.msra.mxu0 %v4973
    %5462 = vmatprep.subr.bf16.mxu0 %v4970
    %5463 = vmatpush1.bf16.msra.mxu0 %v4969
    %5464 = vmatprep.subr.bf16.mxu0 %v4966
    %5465 = vmatpush1.bf16.msra.mxu0 %v4965
    %5466 = vmatprep.subr.bf16.mxu0 %v4962
    %5467 = vmatpush1.bf16.msra.mxu0 %v4961
    %5468 = vmatprep.subr.bf16.mxu0 %v5022
    %5469 = vmatpush2.bf16.msra.mxu0 %v5021
    %5470 = vmatprep.subr.bf16.mxu0 %v5018
    %5471 = vmatpush2.bf16.msra.mxu0 %v5017
    %5472 = vmatprep.subr.bf16.mxu0 %v5014
    %5473 = vmatpush2.bf16.msra.mxu0 %v5013
    %5474 = vmatprep.subr.bf16.mxu0 %v5010
    %5475 = vmatpush2.bf16.msra.mxu0 %v5009
    %5476 = vmatprep.subr.bf16.mxu0 %v5006
    %5477 = vmatpush2.bf16.msra.mxu0 %v5005
    %5478 = vmatprep.subr.bf16.mxu0 %v5002
    %5479 = vmatpush2.bf16.msra.mxu0 %v5001
    %5480 = vmatprep.subr.bf16.mxu0 %v4998
    %5481 = vmatpush2.bf16.msra.mxu0 %v4997
    %5482 = vmatprep.subr.bf16.mxu0 %v4994
    %5483 = vmatpush2.bf16.msra.mxu0 %v4993
    %5484 = vmatprep.mubr.bf16.mxu0 %v3860
    %5485 = vmatmul.mubr.bf16.gmra.mxu0 %v3859
    %v5486 = vpop.f32.mrf.mxu0
    %v5487 = vadd.f32 %v5444, %v5486
    %v5488 = vpop.f32.mrf.mxu0
    %v5489 = vadd.f32 %v5446, %v5488
    %v5490 = vpop.f32.mrf.mxu0
    %v5491 = vadd.f32 %v5448, %v5490
    %v5492 = vpop.f32.mrf.mxu0
    %v5493 = vadd.f32 %v5450, %v5492
    %5494 = vdwg.mxu0
    %5495 = vmatprep.subr.bf16.mxu0 %v5054
    %5496 = vmatpush1.bf16.msra.mxu0 %v5053
    %5497 = vmatprep.subr.bf16.mxu0 %v5050
    %5498 = vmatpush1.bf16.msra.mxu0 %v5049
    %5499 = vmatprep.subr.bf16.mxu0 %v5046
    %5500 = vmatpush1.bf16.msra.mxu0 %v5045
    %5501 = vmatprep.subr.bf16.mxu0 %v5042
    %5502 = vmatpush1.bf16.msra.mxu0 %v5041
    %5503 = vmatprep.subr.bf16.mxu0 %v5038
    %5504 = vmatpush1.bf16.msra.mxu0 %v5037
    %5505 = vmatprep.subr.bf16.mxu0 %v5034
    %5506 = vmatpush1.bf16.msra.mxu0 %v5033
    %5507 = vmatprep.subr.bf16.mxu0 %v5030
    %5508 = vmatpush1.bf16.msra.mxu0 %v5029
    %5509 = vmatprep.subr.bf16.mxu0 %v5026
    %5510 = vmatpush1.bf16.msra.mxu0 %v5025
    %5511 = vmatprep.subr.bf16.mxu0 %v5086
    %5512 = vmatpush2.bf16.msra.mxu0 %v5085
    %5513 = vmatprep.subr.bf16.mxu0 %v5082
    %5514 = vmatpush2.bf16.msra.mxu0 %v5081
    %5515 = vmatprep.subr.bf16.mxu0 %v5078
    %5516 = vmatpush2.bf16.msra.mxu0 %v5077
    %5517 = vmatprep.subr.bf16.mxu0 %v5074
    %5518 = vmatpush2.bf16.msra.mxu0 %v5073
    %5519 = vmatprep.subr.bf16.mxu0 %v5070
    %5520 = vmatpush2.bf16.msra.mxu0 %v5069
    %5521 = vmatprep.subr.bf16.mxu0 %v5066
    %5522 = vmatpush2.bf16.msra.mxu0 %v5065
    %5523 = vmatprep.subr.bf16.mxu0 %v5062
    %5524 = vmatpush2.bf16.msra.mxu0 %v5061
    %5525 = vmatprep.subr.bf16.mxu0 %v5058
    %5526 = vmatpush2.bf16.msra.mxu0 %v5057
    %5527 = vmatprep.mubr.bf16.mxu0 %v3862
    %5528 = vmatmul.mubr.bf16.gmra.mxu0 %v3861
    %v5529 = vpop.f32.mrf.mxu0
    %v5530 = vadd.f32 %v5487, %v5529
    %v5531 = vpop.f32.mrf.mxu0
    %v5532 = vadd.f32 %v5489, %v5531
    %v5533 = vpop.f32.mrf.mxu0
    %v5534 = vadd.f32 %v5491, %v5533
    %v5535 = vpop.f32.mrf.mxu0
    %v5536 = vadd.f32 %v5493, %v5535
    %5537 = vdwg.mxu0
    %5538 = vmatprep.subr.bf16.mxu0 %v5118
    %5539 = vmatpush1.bf16.msra.mxu0 %v5117
    %5540 = vmatprep.subr.bf16.mxu0 %v5114
    %5541 = vmatpush1.bf16.msra.mxu0 %v5113
    %5542 = vmatprep.subr.bf16.mxu0 %v5110
    %5543 = vmatpush1.bf16.msra.mxu0 %v5109
    %5544 = vmatprep.subr.bf16.mxu0 %v5106
    %5545 = vmatpush1.bf16.msra.mxu0 %v5105
    %5546 = vmatprep.subr.bf16.mxu0 %v5102
    %5547 = vmatpush1.bf16.msra.mxu0 %v5101
    %5548 = vmatprep.subr.bf16.mxu0 %v5098
    %5549 = vmatpush1.bf16.msra.mxu0 %v5097
    %5550 = vmatprep.subr.bf16.mxu0 %v5094
    %5551 = vmatpush1.bf16.msra.mxu0 %v5093
    %5552 = vmatprep.subr.bf16.mxu0 %v5090
    %5553 = vmatpush1.bf16.msra.mxu0 %v5089
    %5554 = vmatprep.subr.bf16.mxu0 %v5150
    %5555 = vmatpush2.bf16.msra.mxu0 %v5149
    %5556 = vmatprep.subr.bf16.mxu0 %v5146
    %5557 = vmatpush2.bf16.msra.mxu0 %v5145
    %5558 = vmatprep.subr.bf16.mxu0 %v5142
    %5559 = vmatpush2.bf16.msra.mxu0 %v5141
    %5560 = vmatprep.subr.bf16.mxu0 %v5138
    %5561 = vmatpush2.bf16.msra.mxu0 %v5137
    %5562 = vmatprep.subr.bf16.mxu0 %v5134
    %5563 = vmatpush2.bf16.msra.mxu0 %v5133
    %5564 = vmatprep.subr.bf16.mxu0 %v5130
    %5565 = vmatpush2.bf16.msra.mxu0 %v5129
    %5566 = vmatprep.subr.bf16.mxu0 %v5126
    %5567 = vmatpush2.bf16.msra.mxu0 %v5125
    %5568 = vmatprep.subr.bf16.mxu0 %v5122
    %5569 = vmatpush2.bf16.msra.mxu0 %v5121
    %5570 = vmatprep.mubr.bf16.mxu0 %v3864
    %5571 = vmatmul.mubr.bf16.gmra.mxu0 %v3863
    %v5572 = vpop.f32.mrf.mxu0
    %v5573 = vadd.f32 %v5530, %v5572
    %v5574 = vpop.f32.mrf.mxu0
    %v5575 = vadd.f32 %v5532, %v5574
    %v5576 = vpop.f32.mrf.mxu0
    %v5577 = vadd.f32 %v5534, %v5576
    %v5578 = vpop.f32.mrf.mxu0
    %v5579 = vadd.f32 %v5536, %v5578
    %5580 = vdwg.mxu0
    %5581 = vmatprep.subr.bf16.mxu0 %v4928
    %5582 = vmatpush1.bf16.msra.mxu0 %v4927
    %5583 = vmatprep.subr.bf16.mxu0 %v4924
    %5584 = vmatpush1.bf16.msra.mxu0 %v4923
    %5585 = vmatprep.subr.bf16.mxu0 %v4920
    %5586 = vmatpush1.bf16.msra.mxu0 %v4919
    %5587 = vmatprep.subr.bf16.mxu0 %v4916
    %5588 = vmatpush1.bf16.msra.mxu0 %v4915
    %5589 = vmatprep.subr.bf16.mxu0 %v4912
    %5590 = vmatpush1.bf16.msra.mxu0 %v4911
    %5591 = vmatprep.subr.bf16.mxu0 %v4908
    %5592 = vmatpush1.bf16.msra.mxu0 %v4907
    %5593 = vmatprep.subr.bf16.mxu0 %v4904
    %5594 = vmatpush1.bf16.msra.mxu0 %v4903
    %5595 = vmatprep.subr.bf16.mxu0 %v4900
    %5596 = vmatpush1.bf16.msra.mxu0 %v4899
    %5597 = vmatprep.subr.bf16.mxu0 %v4960
    %5598 = vmatpush2.bf16.msra.mxu0 %v4959
    %5599 = vmatprep.subr.bf16.mxu0 %v4956
    %5600 = vmatpush2.bf16.msra.mxu0 %v4955
    %5601 = vmatprep.subr.bf16.mxu0 %v4952
    %5602 = vmatpush2.bf16.msra.mxu0 %v4951
    %5603 = vmatprep.subr.bf16.mxu0 %v4948
    %5604 = vmatpush2.bf16.msra.mxu0 %v4947
    %5605 = vmatprep.subr.bf16.mxu0 %v4944
    %5606 = vmatpush2.bf16.msra.mxu0 %v4943
    %5607 = vmatprep.subr.bf16.mxu0 %v4940
    %5608 = vmatpush2.bf16.msra.mxu0 %v4939
    %5609 = vmatprep.subr.bf16.mxu0 %v4936
    %5610 = vmatpush2.bf16.msra.mxu0 %v4935
    %5611 = vmatprep.subr.bf16.mxu0 %v4932
    %5612 = vmatpush2.bf16.msra.mxu0 %v4931
    %5613 = vmatprep.mubr.bf16.mxu0 %v3858
    %5614 = vmatmul.mubr.bf16.gmra.mxu0 %v3857
    %v5615 = vpop.f32.mrf.mxu0
    %v5616 = vadd.f32 %v4123, %v5615
    %v5617 = vpop.f32.mrf.mxu0
    %v5618 = vadd.f32 %v4124, %v5617
    %v5619 = vpop.f32.mrf.mxu0
    %v5620 = vadd.f32 %v4127, %v5619
    %v5621 = vpop.f32.mrf.mxu0
    %v5622 = vadd.f32 %v4128, %v5621
    %5623 = vdwg.mxu0
    %5624 = vmatprep.subr.bf16.mxu0 %v4992
    %5625 = vmatpush1.bf16.msra.mxu0 %v4991
    %5626 = vmatprep.subr.bf16.mxu0 %v4988
    %5627 = vmatpush1.bf16.msra.mxu0 %v4987
    %5628 = vmatprep.subr.bf16.mxu0 %v4984
    %5629 = vmatpush1.bf16.msra.mxu0 %v4983
    %5630 = vmatprep.subr.bf16.mxu0 %v4980
    %5631 = vmatpush1.bf16.msra.mxu0 %v4979
    %5632 = vmatprep.subr.bf16.mxu0 %v4976
    %5633 = vmatpush1.bf16.msra.mxu0 %v4975
    %5634 = vmatprep.subr.bf16.mxu0 %v4972
    %5635 = vmatpush1.bf16.msra.mxu0 %v4971
    %5636 = vmatprep.subr.bf16.mxu0 %v4968
    %5637 = vmatpush1.bf16.msra.mxu0 %v4967
    %5638 = vmatprep.subr.bf16.mxu0 %v4964
    %5639 = vmatpush1.bf16.msra.mxu0 %v4963
    %5640 = vmatprep.subr.bf16.mxu0 %v5024
    %5641 = vmatpush2.bf16.msra.mxu0 %v5023
    %5642 = vmatprep.subr.bf16.mxu0 %v5020
    %5643 = vmatpush2.bf16.msra.mxu0 %v5019
    %5644 = vmatprep.subr.bf16.mxu0 %v5016
    %5645 = vmatpush2.bf16.msra.mxu0 %v5015
    %5646 = vmatprep.subr.bf16.mxu0 %v5012
    %5647 = vmatpush2.bf16.msra.mxu0 %v5011
    %5648 = vmatprep.subr.bf16.mxu0 %v5008
    %5649 = vmatpush2.bf16.msra.mxu0 %v5007
    %5650 = vmatprep.subr.bf16.mxu0 %v5004
    %5651 = vmatpush2.bf16.msra.mxu0 %v5003
    %5652 = vmatprep.subr.bf16.mxu0 %v5000
    %5653 = vmatpush2.bf16.msra.mxu0 %v4999
    %5654 = vmatprep.subr.bf16.mxu0 %v4996
    %5655 = vmatpush2.bf16.msra.mxu0 %v4995
    %5656 = vmatprep.mubr.bf16.mxu0 %v3860
    %5657 = vmatmul.mubr.bf16.gmra.mxu0 %v3859
    %v5658 = vpop.f32.mrf.mxu0
    %v5659 = vadd.f32 %v5616, %v5658
    %v5660 = vpop.f32.mrf.mxu0
    %v5661 = vadd.f32 %v5618, %v5660
    %v5662 = vpop.f32.mrf.mxu0
    %v5663 = vadd.f32 %v5620, %v5662
    %v5664 = vpop.f32.mrf.mxu0
    %v5665 = vadd.f32 %v5622, %v5664
    %5666 = vdwg.mxu0
    %5667 = vmatprep.subr.bf16.mxu0 %v5056
    %5668 = vmatpush1.bf16.msra.mxu0 %v5055
    %5669 = vmatprep.subr.bf16.mxu0 %v5052
    %5670 = vmatpush1.bf16.msra.mxu0 %v5051
    %5671 = vmatprep.subr.bf16.mxu0 %v5048
    %5672 = vmatpush1.bf16.msra.mxu0 %v5047
    %5673 = vmatprep.subr.bf16.mxu0 %v5044
    %5674 = vmatpush1.bf16.msra.mxu0 %v5043
    %5675 = vmatprep.subr.bf16.mxu0 %v5040
    %5676 = vmatpush1.bf16.msra.mxu0 %v5039
    %5677 = vmatprep.subr.bf16.mxu0 %v5036
    %5678 = vmatpush1.bf16.msra.mxu0 %v5035
    %5679 = vmatprep.subr.bf16.mxu0 %v5032
    %5680 = vmatpush1.bf16.msra.mxu0 %v5031
    %5681 = vmatprep.subr.bf16.mxu0 %v5028
    %5682 = vmatpush1.bf16.msra.mxu0 %v5027
    %5683 = vmatprep.subr.bf16.mxu0 %v5088
    %5684 = vmatpush2.bf16.msra.mxu0 %v5087
    %5685 = vmatprep.subr.bf16.mxu0 %v5084
    %5686 = vmatpush2.bf16.msra.mxu0 %v5083
    %5687 = vmatprep.subr.bf16.mxu0 %v5080
    %5688 = vmatpush2.bf16.msra.mxu0 %v5079
    %5689 = vmatprep.subr.bf16.mxu0 %v5076
    %5690 = vmatpush2.bf16.msra.mxu0 %v5075
    %5691 = vmatprep.subr.bf16.mxu0 %v5072
    %5692 = vmatpush2.bf16.msra.mxu0 %v5071
    %5693 = vmatprep.subr.bf16.mxu0 %v5068
    %5694 = vmatpush2.bf16.msra.mxu0 %v5067
    %5695 = vmatprep.subr.bf16.mxu0 %v5064
    %5696 = vmatpush2.bf16.msra.mxu0 %v5063
    %5697 = vmatprep.subr.bf16.mxu0 %v5060
    %5698 = vmatpush2.bf16.msra.mxu0 %v5059
    %5699 = vmatprep.mubr.bf16.mxu0 %v3862
    %5700 = vmatmul.mubr.bf16.gmra.mxu0 %v3861
    %v5701 = vpop.f32.mrf.mxu0
    %v5702 = vadd.f32 %v5659, %v5701
    %v5703 = vpop.f32.mrf.mxu0
    %v5704 = vadd.f32 %v5661, %v5703
    %v5705 = vpop.f32.mrf.mxu0
    %v5706 = vadd.f32 %v5663, %v5705
    %v5707 = vpop.f32.mrf.mxu0
    %v5708 = vadd.f32 %v5665, %v5707
    %5709 = vdwg.mxu0
    %5710 = vmatprep.subr.bf16.mxu0 %v5120
    %5711 = vmatpush1.bf16.msra.mxu0 %v5119
    %5712 = vmatprep.subr.bf16.mxu0 %v5116
    %5713 = vmatpush1.bf16.msra.mxu0 %v5115
    %5714 = vmatprep.subr.bf16.mxu0 %v5112
    %5715 = vmatpush1.bf16.msra.mxu0 %v5111
    %5716 = vmatprep.subr.bf16.mxu0 %v5108
    %5717 = vmatpush1.bf16.msra.mxu0 %v5107
    %5718 = vmatprep.subr.bf16.mxu0 %v5104
    %5719 = vmatpush1.bf16.msra.mxu0 %v5103
    %5720 = vmatprep.subr.bf16.mxu0 %v5100
    %5721 = vmatpush1.bf16.msra.mxu0 %v5099
    %5722 = vmatprep.subr.bf16.mxu0 %v5096
    %5723 = vmatpush1.bf16.msra.mxu0 %v5095
    %5724 = vmatprep.subr.bf16.mxu0 %v5092
    %5725 = vmatpush1.bf16.msra.mxu0 %v5091
    %5726 = vmatprep.subr.bf16.mxu0 %v5152
    %5727 = vmatpush2.bf16.msra.mxu0 %v5151
    %5728 = vmatprep.subr.bf16.mxu0 %v5148
    %5729 = vmatpush2.bf16.msra.mxu0 %v5147
    %5730 = vmatprep.subr.bf16.mxu0 %v5144
    %5731 = vmatpush2.bf16.msra.mxu0 %v5143
    %5732 = vmatprep.subr.bf16.mxu0 %v5140
    %5733 = vmatpush2.bf16.msra.mxu0 %v5139
    %5734 = vmatprep.subr.bf16.mxu0 %v5136
    %5735 = vmatpush2.bf16.msra.mxu0 %v5135
    %5736 = vmatprep.subr.bf16.mxu0 %v5132
    %5737 = vmatpush2.bf16.msra.mxu0 %v5131
    %5738 = vmatprep.subr.bf16.mxu0 %v5128
    %5739 = vmatpush2.bf16.msra.mxu0 %v5127
    %5740 = vmatprep.subr.bf16.mxu0 %v5124
    %5741 = vmatpush2.bf16.msra.mxu0 %v5123
    %5742 = vmatprep.mubr.bf16.mxu0 %v3864
    %5743 = vmatmul.mubr.bf16.gmra.mxu0 %v3863
    %v5744 = vpop.f32.mrf.mxu0
    %v5745 = vadd.f32 %v5702, %v5744
    %v5746 = vpop.f32.mrf.mxu0
    %v5747 = vadd.f32 %v5704, %v5746
    %v5748 = vpop.f32.mrf.mxu0
    %v5749 = vadd.f32 %v5706, %v5748
    %v5750 = vpop.f32.mrf.mxu0
    %v5751 = vadd.f32 %v5708, %v5750
    %5752 = vdwg.mxu0
    %5753 = vst [vmem:[#allocation10] sm:$0xff] %v5573
    %5754 = vst [vmem:[#allocation10 + $0x8] sm:$0xff] %v5575
    %5755 = vst [vmem:[#allocation10 + $0x10] sm:$0xff] %v5745
    %5756 = vst [vmem:[#allocation10 + $0x18] sm:$0xff] %v5747
    %5757 = vst [vmem:[#allocation10 + $0x20] sm:$0xff] %v5577
    %5758 = vst [vmem:[#allocation10 + $0x28] sm:$0xff] %v5579
    %5759 = vst [vmem:[#allocation10 + $0x30] sm:$0xff] %v5749
    %5760 = vst [vmem:[#allocation10 + $0x38] sm:$0xff] %v5751
    // Predicated region
    $region34: #{tpu_custom_call.1} parent=1 // pred_check
      _
    $region35: #{tpu_custom_call.1} parent=1 // pred_check_branch
      %5762 = sbr.rel (0) target = $region37
    $region36: #{tpu_custom_call.1} parent=1 // pred_region
      %s5764 = ssub.s32 1024, 1024
      %5765 = vsyncadd [#allocation4], %s5764
      %s5766 = sshll.u32 [#allocation10], 4
      %s5767 = int_to_ptr.vmem [resolvable:$true] %s5766
      %5772 = dma.vmem_to_hbm [thread:$0]  %s5767, 1024, %s4, [#allocation4], 512, 512, 32
    $region37: #{tpu_custom_call.1} parent=1 // pred_fallthru
      _
    // Predicated region
    $region38: #{tpu_custom_call.1} parent=1 // pred_check
      _
    $region39: #{tpu_custom_call.1} parent=1 // pred_check_branch
      %5774 = sbr.rel (0) target = $region41
    $region40: #{tpu_custom_call.1} parent=1 // pred_region
      %5775 = dma.done [#allocation4], 1024
    $region41: #{tpu_custom_call.1} parent=1 // pred_fallthru
      _
    %5776 = vsyncpa [#allocation3], 1
    %5777 = vsyncpa [#allocation6], 1
    %5778 = vsyncpa [#allocation9], 1
    %5779 = vsyncpa [#allocation4], 1

</llo_original>
